<compile_context>
chip_gen: v6e
topology: v6e:2x2x1
jax: 0.10.0
libtpu: 0.0.40
codegen_flags: <defaults>
</compile_context>

<pallas_src>
import jax
import jax.numpy as jnp
import numpy as np
from jax.experimental import pallas as pl
from jax.experimental.pallas import tpu as pltpu

K_BRANCHES = 4
DILATIONS = (1, 2, 3, 4)   # k_sizes [3,5,7,9] with r_lim=9 -> dilation rates
PAD_DW = max(DILATIONS)    # halo needed by the dilated depthwise taps (4)
PAD_X = 1                  # halo carried by the phase-split input (avg-pool)


# --------------------------------------------------------------- kernel -----

def make_fused_kernel(Ho, Wo, Cin, n):
    """avgpool + proj_1x1 + 4 dilated dw convs + BR + per-group exp 1x1 + PReLU."""
    nout_new = K_BRANCHES * n

    def kernel(xs_ref, pw_ref, ps_ref, pb_ref, pa_ref, wdw_ref,
               brs_ref, brb_ref, bra_ref, wexp_ref, es_ref, eb_ref,
               aa_ref, ea_ref, oavg_ref, oeesp_ref, y_ref):
        # ---- branch A: 3x3 avg-pool, stride 2, pad 1 (count_include_pad) ----
        aacc = jnp.zeros((Ho, Wo, Cin), jnp.float32)
        for i in range(3):
            for j in range(3):
                aacc = aacc + xs_ref[i % 2, j % 2,
                                     i // 2:i // 2 + Ho,
                                     j // 2:j // 2 + Wo, :]
        avg = aacc * (1.0 / 9.0)
        oavg_ref[...] = jnp.where(avg >= 0.0, avg,
                                  aa_ref[...] * avg).astype(oavg_ref.dtype)

        # ---- proj_1x1 (grouped 1x1 conv as block-diag matmul) + BN + PReLU ----
        # Computed per parity phase of the ORIGINAL rows/cols, written into a
        # 4-padded phase-split VMEM scratch so every stride-2 dilated tap below
        # is a unit-stride static slice.  Halo region stays exactly zero.
        y_ref[...] = jnp.zeros_like(y_ref)
        pw = pw_ref[...]
        ps, pb, pa = ps_ref[...], pb_ref[...], pa_ref[...]
        for pr in range(2):                       # parity of the original row
            for pc in range(2):                   # parity of the original col
                # original row r = 2m+pr lives at pad-1 phase (1-pr), index m+pr
                xin = xs_ref[1 - pr, 1 - pc, pr:pr + Ho, pc:pc + Wo, :]
                t = jnp.dot(xin.reshape(Ho * Wo, Cin), pw,
                            preferred_element_type=jnp.float32)
                t = t * ps + pb
                t = jnp.where(t >= 0.0, t, pa * t)
                # same row r lives at pad-4 phase pr, index m+2
                y_ref[pr, pc, 2:Ho + 2, 2:Wo + 2, :] = t.reshape(Ho, Wo, n)

        # ---- EESP: dilated depthwise stride-2 convs + hierarchical add,
        #      br_after_cat BN+PReLU, per-group conv_1x1_exp + BN, final PReLU.
        wdw = wdw_ref[...]                         # (K, 9, n)
        wexp = wexp_ref[...]                       # (K, n, n)
        brs, brb, bra = brs_ref[...], brb_ref[...], bra_ref[...]
        es, eb, ea = es_ref[...], eb_ref[...], ea_ref[...]
        prev = None
        for g, d in enumerate(DILATIONS):
            acc = jnp.zeros((Ho, Wo, n), jnp.float32)
            for i in range(3):
                for j in range(3):
                    r0 = (i - 1) * d + PAD_DW      # offset in pad-4 coordinates
                    c0 = (j - 1) * d + PAD_DW
                    tap = y_ref[r0 % 2, c0 % 2,
                                r0 // 2:r0 // 2 + Ho,
                                c0 // 2:c0 // 2 + Wo, :]
                    acc = acc + tap * wdw[g, 3 * i + j][None, None, :]
            if prev is not None:
                acc = acc + prev                   # out_k = out_k + output[k-1]
            prev = acc
            sl = slice(g * n, (g + 1) * n)
            z = acc.reshape(Ho * Wo, n)
            z = z * brs[:, sl] + brb[:, sl]                       # BR: BN
            z = jnp.where(z >= 0.0, z, bra[:, sl] * z)            # BR: PReLU
            e = jnp.dot(z, wexp[g], preferred_element_type=jnp.float32)
            e = e * es[:, sl] + eb[:, sl]                         # exp BN
            e = jnp.where(e >= 0.0, e, ea[:, sl] * e)             # final PReLU
            oeesp_ref[:, :, sl] = e.reshape(Ho, Wo, n).astype(oeesp_ref.dtype)

    return kernel


# ------------------------------------------------------------------ glue ----

def _padded_block_bytes(shape, itemsize=4):
    """VMEM bytes of one f32 block, honoring (8,128) sublane/lane padding."""
    s = [int(d) for d in shape]
    if not s:
        return itemsize
    s[-1] = -(-s[-1] // 128) * 128
    if len(s) >= 2:
        s[-2] = -(-s[-2] // 8) * 8
    b = itemsize
    for d in s:
        b *= d
    return b


def _phase_split(x, pad):
    """Zero-pad spatially by `pad` and split even/odd (h, w) phases.

    (N,H,W,C) -> (N, 2, 2, (H+2p)//2, (W+2p)//2, C) with
    out[:, ph, pw, a, b] = x_padded[:, 2a+ph, 2b+pw].  Pure layout (one XLA
    pass); lets the kernel read every stride-2 tap as a unit-stride slice.
    """
    N, H, W, C = x.shape
    xp = jnp.pad(x, ((0, 0), (pad, pad), (pad, pad), (0, 0)))
    Hp, Wp = H + 2 * pad, W + 2 * pad
    assert Hp % 2 == 0 and Wp % 2 == 0
    return xp.reshape(N, Hp // 2, 2, Wp // 2, 2, C).transpose(0, 2, 4, 1, 3, 5)


def downsampler_forward(x_nchw, P):
    x = jnp.transpose(x_nchw, (0, 2, 3, 1)).astype(jnp.float32)   # -> NHWC
    N, H, W, Cin = x.shape
    # PyTorch AvgPool2d(3,2,1) / stride-2 convs give (H-1)//2+1; only even H,W here.
    assert H % 2 == 0 and W % 2 == 0, "even spatial dims required"
    Ho, Wo = H // 2, W // 2
    n = P['proj_w'].shape[0]
    nout_new = K_BRANCHES * n

    xs = _phase_split(x, PAD_X)              # (N, 2, 2, Ho+1, Wo+1, Cin)

    # honest, (8,128)-padded VMEM budget: double-buffered I/O blocks + scratch
    # + in-kernel temporaries, capped at 40 MiB (v7x-safe).
    io_blocks = [
        (2, 2, Ho + 1, Wo + 1, Cin),
        (Cin, n), (1, n), (1, n), (1, n),
        (K_BRANCHES, 9, n),
        (1, nout_new), (1, nout_new), (1, nout_new),
        (K_BRANCHES, n, n), (1, nout_new), (1, nout_new),
        (1, Cin), (1, nout_new),
        (Ho, Wo, Cin), (Ho, Wo, nout_new),
    ]
    need = 2 * sum(_padded_block_bytes(s) for s in io_blocks)
    need += _padded_block_bytes((2, 2, Ho + PAD_DW, Wo + PAD_DW, n))    # y scratch
    need += (2 * _padded_block_bytes((Ho, Wo, Cin))                     # avg temps
             + 6 * _padded_block_bytes((Ho, Wo, n))                     # dw temps
             + 4 * _padded_block_bytes((Ho * Wo, max(Cin, nout_new))))  # matmul temps
    vmem_limit = int(min(max(need + (8 << 20), 32 << 20), 40 << 20))

    kern = make_fused_kernel(Ho, Wo, Cin, n)
    avg_o, eesp_o = pl.pallas_call(
        kern,
        out_shape=(jax.ShapeDtypeStruct((N, Ho, Wo, Cin), jnp.float32),
                   jax.ShapeDtypeStruct((N, Ho, Wo, nout_new), jnp.float32)),
        grid=(N,),
        in_specs=[
            pl.BlockSpec((None, 2, 2, Ho + 1, Wo + 1, Cin),
                         lambda b: (b, 0, 0, 0, 0, 0)),
            pl.BlockSpec((Cin, n), lambda b: (0, 0)),
            pl.BlockSpec((1, n), lambda b: (0, 0)),
            pl.BlockSpec((1, n), lambda b: (0, 0)),
            pl.BlockSpec((1, n), lambda b: (0, 0)),
            pl.BlockSpec((K_BRANCHES, 9, n), lambda b: (0, 0, 0)),
            pl.BlockSpec((1, nout_new), lambda b: (0, 0)),
            pl.BlockSpec((1, nout_new), lambda b: (0, 0)),
            pl.BlockSpec((1, nout_new), lambda b: (0, 0)),
            pl.BlockSpec((K_BRANCHES, n, n), lambda b: (0, 0, 0)),
            pl.BlockSpec((1, nout_new), lambda b: (0, 0)),
            pl.BlockSpec((1, nout_new), lambda b: (0, 0)),
            pl.BlockSpec((1, Cin), lambda b: (0, 0)),
            pl.BlockSpec((1, nout_new), lambda b: (0, 0)),
        ],
        out_specs=[pl.BlockSpec((None, Ho, Wo, Cin), lambda b: (b, 0, 0, 0)),
                   pl.BlockSpec((None, Ho, Wo, nout_new), lambda b: (b, 0, 0, 0))],
        scratch_shapes=[pltpu.VMEM((2, 2, Ho + PAD_DW, Wo + PAD_DW, n),
                                   jnp.float32)],
        compiler_params=pltpu.CompilerParams(
            dimension_semantics=("parallel",),
            vmem_limit_bytes=vmem_limit),
    )(xs, P['proj_w_bd'], P['proj_scale'][None], P['proj_bias'][None],
      P['proj_alpha'][None], P['dw_w_kt'], P['br_scale'][None],
      P['br_bias'][None], P['br_alpha'][None], P['exp_w_g'],
      P['exp_scale'][None], P['exp_bias'][None],
      P['out_alpha'][None, :Cin], P['out_alpha'][None, Cin:])

    # lane-dense per-branch outputs; channel concat + NCHW transpose in XLA.
    return jnp.concatenate([jnp.transpose(avg_o, (0, 3, 1, 2)),
                            jnp.transpose(eesp_o, (0, 3, 1, 2))], axis=1)


# ------------------------------------------------------ deterministic init ----

def _block_diag_1x1(w_oihw, groups):
    """(Cout, Cin/g, 1, 1) grouped 1x1 conv weight -> dense (Cin, Cout) block-diag."""
    w = np.asarray(w_oihw)[:, :, 0, 0]              # (Cout, cig)
    Cout, cig = w.shape
    cog = Cout // groups
    Cin = cig * groups
    bd = np.zeros((Cin, Cout), np.float32)
    for g in range(groups):
        bd[g * cig:(g + 1) * cig, g * cog:(g + 1) * cog] = w[g * cog:(g + 1) * cog].T
    return jnp.asarray(bd)


def init_params(key, nin, nout, k=K_BRANCHES):
    nout_new = nout - nin
    n = nout_new // k
    assert nin % k == 0 and nout_new % k == 0 and n % k == 0
    keys = iter(jax.random.split(key, 24))

    def bn_fold(c):
        gamma = 1.0 + 0.1 * jax.random.normal(next(keys), (c,), jnp.float32)
        beta = 0.1 * jax.random.normal(next(keys), (c,), jnp.float32)
        mean = 0.1 * jax.random.normal(next(keys), (c,), jnp.float32)
        var = jax.random.uniform(next(keys), (c,), jnp.float32, 0.5, 1.5)
        scale = gamma / jnp.sqrt(var + 1e-5)
        return scale, beta - mean * scale

    P = {}
    # proj_1x1: Conv2d(nin, n, 1, groups=k) + BN(n) + PReLU(n)
    proj_w = 0.2 * jax.random.normal(next(keys), (n, nin // k, 1, 1), jnp.float32)
    P['proj_w'] = proj_w
    P['proj_w_bd'] = _block_diag_1x1(proj_w, k)
    P['proj_scale'], P['proj_bias'] = bn_fold(n)
    P['proj_alpha'] = 0.25 + 0.05 * jax.random.normal(next(keys), (n,), jnp.float32)

    # spp_dw: k depthwise dilated 3x3 convs, weights (n, 1, 3, 3) each
    dw = 0.2 * jax.random.normal(next(keys), (k, n, 1, 3, 3), jnp.float32)
    P['dw_w'] = dw
    P['dw_w_kt'] = dw[:, :, 0, :, :].reshape(k, n, 9).transpose(0, 2, 1)   # (k, 9, n)

    # br_after_cat: BN(nout_new) + PReLU(nout_new)
    P['br_scale'], P['br_bias'] = bn_fold(nout_new)
    P['br_alpha'] = 0.25 + 0.05 * jax.random.normal(next(keys), (nout_new,), jnp.float32)

    # conv_1x1_exp: Conv2d(nout_new, nout_new, 1, groups=k) + BN(nout_new)
    exp_w = 0.2 * jax.random.normal(next(keys), (nout_new, nout_new // k, 1, 1),
                                    jnp.float32)
    P['exp_w'] = exp_w
    # per-group (n_in, n_out) matrices for the in-kernel group matmuls
    P['exp_w_g'] = jnp.asarray(np.asarray(exp_w)[:, :, 0, 0]
                               .reshape(k, n, n).transpose(0, 2, 1))
    P['exp_scale'], P['exp_bias'] = bn_fold(nout_new)

    # final PReLU(nout)
    P['out_alpha'] = 0.25 + 0.05 * jax.random.normal(next(keys), (nout,), jnp.float32)
    return P


# ------------------------------------------------------ pure-JAX reference ----

def _conv_ref(x, w, stride=1, padding=0, dilation=1, groups=1):
    return jax.lax.conv_general_dilated(
        x, w, window_strides=(stride, stride),
        padding=[(padding, padding), (padding, padding)],
        rhs_dilation=(dilation, dilation),
        feature_group_count=groups,
        dimension_numbers=('NCHW', 'OIHW', 'NCHW'))


def _bn_ref(x, scale, bias):
    return x * scale[None, :, None, None] + bias[None, :, None, None]


def _prelu_ref(x, a):
    return jnp.where(x >= 0.0, x, a[None, :, None, None] * x)


def downsampler_ref(x, P, k=K_BRANCHES):
    avg = jax.lax.reduce_window(x, 0.0, jax.lax.add, (1, 1, 3, 3), (1, 1, 2, 2),
                                ((0, 0), (0, 0), (1, 1), (1, 1))) / 9.0
    y = _conv_ref(x, P['proj_w'], groups=k)
    y = _prelu_ref(_bn_ref(y, P['proj_scale'], P['proj_bias']), P['proj_alpha'])
    n = y.shape[1]
    prev, outs = None, []
    for b, d in enumerate(DILATIONS):
        o = _conv_ref(y, P['dw_w'][b], stride=2, padding=d, dilation=d, groups=n)
        if prev is not None:
            o = o + prev
        prev = o
        outs.append(o)
    cat = jnp.concatenate(outs, axis=1)
    cat = _prelu_ref(_bn_ref(cat, P['br_scale'], P['br_bias']), P['br_alpha'])
    exp = _bn_ref(_conv_ref(cat, P['exp_w'], groups=k), P['exp_scale'], P['exp_bias'])
    out = jnp.concatenate([avg, exp], axis=1)
    return _prelu_ref(out, P['out_alpha'])


# --------------------------------------------------------------------- main ----

if __name__ == "__main__":
    nin, nout, N, H, W = 16, 48, 2, 16, 16      # nout - nin divisible by k=4
    key = jax.random.PRNGKey(0)
    kx, kp = jax.random.split(key)
    x = jax.random.normal(kx, (N, nin, H, W), jnp.float32)
    P = init_params(kp, nin, nout)

    out = jax.jit(downsampler_forward)(x, P)
    out = jax.block_until_ready(out)
    assert out.shape == (N, nout, H // 2, W // 2), out.shape

    ref = downsampler_ref(x, P)
    np.testing.assert_allclose(np.asarray(out), np.asarray(ref), rtol=3e-4, atol=3e-4)
    print("KERNEL_OK")
</pallas_src>

<mosaic_0001>
module attributes {stable_mosaic.version = 11 : i64} {
  func.func @kernel(%arg0: i32, %arg1: memref<1x2x2x9x9x16xf32, #tpu.memory_space<vmem>>, %arg2: memref<16x8xf32, #tpu.memory_space<vmem>>, %arg3: memref<1x8xf32, #tpu.memory_space<vmem>>, %arg4: memref<1x8xf32, #tpu.memory_space<vmem>>, %arg5: memref<1x8xf32, #tpu.memory_space<vmem>>, %arg6: memref<4x9x8xf32, #tpu.memory_space<vmem>>, %arg7: memref<1x32xf32, #tpu.memory_space<vmem>>, %arg8: memref<1x32xf32, #tpu.memory_space<vmem>>, %arg9: memref<1x32xf32, #tpu.memory_space<vmem>>, %arg10: memref<4x8x8xf32, #tpu.memory_space<vmem>>, %arg11: memref<1x32xf32, #tpu.memory_space<vmem>>, %arg12: memref<1x32xf32, #tpu.memory_space<vmem>>, %arg13: memref<1x16xf32, #tpu.memory_space<vmem>>, %arg14: memref<1x32xf32, #tpu.memory_space<vmem>>, %arg15: memref<1x8x8x16xf32, #tpu.memory_space<vmem>>, %arg16: memref<1x8x8x32xf32, #tpu.memory_space<vmem>>, %arg17: memref<2x2x12x12x8xf32, #tpu.memory_space<vmem>>) attributes {dimension_semantics = [#tpu.dimension_semantics<parallel>], iteration_bounds = array<i64: 2>, scalar_prefetch = 0 : i64, scratch_operands = 1 : i64, tpu.core_type = #tpu.core_type<tc>, window_params = [{transform_indices = @transform_0, window_bounds = array<i64: 1, 2, 2, 9, 9, 16>}, {pipeline_mode = #tpu.pipeline_mode<synchronous>, transform_indices = @transform_1, window_bounds = array<i64: 16, 8>}, {pipeline_mode = #tpu.pipeline_mode<synchronous>, transform_indices = @transform_2, window_bounds = array<i64: 1, 8>}, {pipeline_mode = #tpu.pipeline_mode<synchronous>, transform_indices = @transform_3, window_bounds = array<i64: 1, 8>}, {pipeline_mode = #tpu.pipeline_mode<synchronous>, transform_indices = @transform_4, window_bounds = array<i64: 1, 8>}, {pipeline_mode = #tpu.pipeline_mode<synchronous>, transform_indices = @transform_5, window_bounds = array<i64: 4, 9, 8>}, {pipeline_mode = #tpu.pipeline_mode<synchronous>, transform_indices = @transform_6, window_bounds = array<i64: 1, 32>}, {pipeline_mode = #tpu.pipeline_mode<synchronous>, transform_indices = @transform_7, window_bounds = array<i64: 1, 32>}, {pipeline_mode = #tpu.pipeline_mode<synchronous>, transform_indices = @transform_8, window_bounds = array<i64: 1, 32>}, {pipeline_mode = #tpu.pipeline_mode<synchronous>, transform_indices = @transform_9, window_bounds = array<i64: 4, 8, 8>}, {pipeline_mode = #tpu.pipeline_mode<synchronous>, transform_indices = @transform_10, window_bounds = array<i64: 1, 32>}, {pipeline_mode = #tpu.pipeline_mode<synchronous>, transform_indices = @transform_11, window_bounds = array<i64: 1, 32>}, {pipeline_mode = #tpu.pipeline_mode<synchronous>, transform_indices = @transform_12, window_bounds = array<i64: 1, 16>}, {pipeline_mode = #tpu.pipeline_mode<synchronous>, transform_indices = @transform_13, window_bounds = array<i64: 1, 32>}, {transform_indices = @transform_14, window_bounds = array<i64: 1, 8, 8, 16>}, {transform_indices = @transform_15, window_bounds = array<i64: 1, 8, 8, 32>}]} {
    %cst = arith.constant 0.000000e+00 : f32
    %0 = vector.broadcast %cst : f32 to vector<8x8x16xf32>
    %c0 = arith.constant 0 : index
    %c0_0 = arith.constant 0 : index
    %c0_1 = arith.constant 0 : index
    %c0_2 = arith.constant 0 : index
    %c0_3 = arith.constant 0 : index
    %c0_4 = arith.constant 0 : index
    %1 = vector.load %arg1[%c0, %c0_0, %c0_1, %c0_2, %c0_3, %c0_4] : memref<1x2x2x9x9x16xf32, #tpu.memory_space<vmem>>, vector<1x1x1x8x8x16xf32>
    %2 = vector.shape_cast %1 : vector<1x1x1x8x8x16xf32> to vector<8x8x16xf32>
    %3 = arith.addf %0, %2 : vector<8x8x16xf32>
    %c0_5 = arith.constant 0 : index
    %c0_6 = arith.constant 0 : index
    %c1 = arith.constant 1 : index
    %c0_7 = arith.constant 0 : index
    %c0_8 = arith.constant 0 : index
    %c0_9 = arith.constant 0 : index
    %4 = vector.load %arg1[%c0_5, %c0_6, %c1, %c0_7, %c0_8, %c0_9] : memref<1x2x2x9x9x16xf32, #tpu.memory_space<vmem>>, vector<1x1x1x8x8x16xf32>
    %5 = vector.shape_cast %4 : vector<1x1x1x8x8x16xf32> to vector<8x8x16xf32>
    %6 = arith.addf %3, %5 : vector<8x8x16xf32>
    %c0_10 = arith.constant 0 : index
    %c0_11 = arith.constant 0 : index
    %c0_12 = arith.constant 0 : index
    %c0_13 = arith.constant 0 : index
    %c1_14 = arith.constant 1 : index
    %c0_15 = arith.constant 0 : index
    %7 = vector.load %arg1[%c0_10, %c0_11, %c0_12, %c0_13, %c1_14, %c0_15] : memref<1x2x2x9x9x16xf32, #tpu.memory_space<vmem>>, vector<1x1x1x8x8x16xf32>
    %8 = vector.shape_cast %7 : vector<1x1x1x8x8x16xf32> to vector<8x8x16xf32>
    %9 = arith.addf %6, %8 : vector<8x8x16xf32>
    %c0_16 = arith.constant 0 : index
    %c1_17 = arith.constant 1 : index
    %c0_18 = arith.constant 0 : index
    %c0_19 = arith.constant 0 : index
    %c0_20 = arith.constant 0 : index
    %c0_21 = arith.constant 0 : index
    %10 = vector.load %arg1[%c0_16, %c1_17, %c0_18, %c0_19, %c0_20, %c0_21] : memref<1x2x2x9x9x16xf32, #tpu.memory_space<vmem>>, vector<1x1x1x8x8x16xf32>
    %11 = vector.shape_cast %10 : vector<1x1x1x8x8x16xf32> to vector<8x8x16xf32>
    %12 = arith.addf %9, %11 : vector<8x8x16xf32>
    %c0_22 = arith.constant 0 : index
    %c1_23 = arith.constant 1 : index
    %c1_24 = arith.constant 1 : index
    %c0_25 = arith.constant 0 : index
    %c0_26 = arith.constant 0 : index
    %c0_27 = arith.constant 0 : index
    %13 = vector.load %arg1[%c0_22, %c1_23, %c1_24, %c0_25, %c0_26, %c0_27] : memref<1x2x2x9x9x16xf32, #tpu.memory_space<vmem>>, vector<1x1x1x8x8x16xf32>
    %14 = vector.shape_cast %13 : vector<1x1x1x8x8x16xf32> to vector<8x8x16xf32>
    %15 = arith.addf %12, %14 : vector<8x8x16xf32>
    %c0_28 = arith.constant 0 : index
    %c1_29 = arith.constant 1 : index
    %c0_30 = arith.constant 0 : index
    %c0_31 = arith.constant 0 : index
    %c1_32 = arith.constant 1 : index
    %c0_33 = arith.constant 0 : index
    %16 = vector.load %arg1[%c0_28, %c1_29, %c0_30, %c0_31, %c1_32, %c0_33] : memref<1x2x2x9x9x16xf32, #tpu.memory_space<vmem>>, vector<1x1x1x8x8x16xf32>
    %17 = vector.shape_cast %16 : vector<1x1x1x8x8x16xf32> to vector<8x8x16xf32>
    %18 = arith.addf %15, %17 : vector<8x8x16xf32>
    %c0_34 = arith.constant 0 : index
    %c0_35 = arith.constant 0 : index
    %c0_36 = arith.constant 0 : index
    %c1_37 = arith.constant 1 : index
    %c0_38 = arith.constant 0 : index
    %c0_39 = arith.constant 0 : index
    %19 = vector.load %arg1[%c0_34, %c0_35, %c0_36, %c1_37, %c0_38, %c0_39] : memref<1x2x2x9x9x16xf32, #tpu.memory_space<vmem>>, vector<1x1x1x8x8x16xf32>
    %20 = vector.shape_cast %19 : vector<1x1x1x8x8x16xf32> to vector<8x8x16xf32>
    %21 = arith.addf %18, %20 : vector<8x8x16xf32>
    %c0_40 = arith.constant 0 : index
    %c0_41 = arith.constant 0 : index
    %c1_42 = arith.constant 1 : index
    %c1_43 = arith.constant 1 : index
    %c0_44 = arith.constant 0 : index
    %c0_45 = arith.constant 0 : index
    %22 = vector.load %arg1[%c0_40, %c0_41, %c1_42, %c1_43, %c0_44, %c0_45] : memref<1x2x2x9x9x16xf32, #tpu.memory_space<vmem>>, vector<1x1x1x8x8x16xf32>
    %23 = vector.shape_cast %22 : vector<1x1x1x8x8x16xf32> to vector<8x8x16xf32>
    %24 = arith.addf %21, %23 : vector<8x8x16xf32>
    %c0_46 = arith.constant 0 : index
    %c0_47 = arith.constant 0 : index
    %c0_48 = arith.constant 0 : index
    %c1_49 = arith.constant 1 : index
    %c1_50 = arith.constant 1 : index
    %c0_51 = arith.constant 0 : index
    %25 = vector.load %arg1[%c0_46, %c0_47, %c0_48, %c1_49, %c1_50, %c0_51] : memref<1x2x2x9x9x16xf32, #tpu.memory_space<vmem>>, vector<1x1x1x8x8x16xf32>
    %26 = vector.shape_cast %25 : vector<1x1x1x8x8x16xf32> to vector<8x8x16xf32>
    %27 = arith.addf %24, %26 : vector<8x8x16xf32>
    %cst_52 = arith.constant 0.111111112 : f32
    %28 = vector.broadcast %cst_52 : f32 to vector<8x8x16xf32>
    %29 = arith.mulf %27, %28 : vector<8x8x16xf32>
    %cst_53 = arith.constant 0.000000e+00 : f32
    %30 = vector.broadcast %cst_53 : f32 to vector<8x8x16xf32>
    %31 = arith.cmpf oge, %29, %30 : vector<8x8x16xf32>
    %c0_54 = arith.constant 0 : index
    %c0_55 = arith.constant 0 : index
    %32 = vector.load %arg13[%c0_54, %c0_55] : memref<1x16xf32, #tpu.memory_space<vmem>>, vector<1x16xf32>
    %33 = vector.shape_cast %32 : vector<1x16xf32> to vector<1x1x16xf32>
    %34 = vector.broadcast %33 : vector<1x1x16xf32> to vector<8x8x16xf32>
    %35 = arith.mulf %34, %29 : vector<8x8x16xf32>
    %36 = arith.select %31, %29, %35 : vector<8x8x16xi1>, vector<8x8x16xf32>
    %c0_56 = arith.constant 0 : index
    %c0_57 = arith.constant 0 : index
    %c0_58 = arith.constant 0 : index
    %c0_59 = arith.constant 0 : index
    %37 = vector.load %arg15[%c0_56, %c0_57, %c0_58, %c0_59] : memref<1x8x8x16xf32, #tpu.memory_space<vmem>>, vector<1x8x8x16xf32>
    %38 = vector.shape_cast %37 : vector<1x8x8x16xf32> to vector<8x8x16xf32>
    %39 = vector.shape_cast %36 : vector<8x8x16xf32> to vector<1x8x8x16xf32>
    tpu.vector_store %arg15[%c0_56, %c0_57, %c0_58, %c0_59], %39 {strides = array<i32>} : memref<1x8x8x16xf32, #tpu.memory_space<vmem>>, vector<1x8x8x16xf32>,
    %cst_60 = arith.constant 0.000000e+00 : f32
    %40 = vector.broadcast %cst_60 : f32 to vector<2x2x12x12x8xf32>
    %c0_61 = arith.constant 0 : index
    %c0_62 = arith.constant 0 : index
    %c0_63 = arith.constant 0 : index
    %c0_64 = arith.constant 0 : index
    %c0_65 = arith.constant 0 : index
    %41 = vector.load %arg17[%c0_61, %c0_62, %c0_63, %c0_64, %c0_65] : memref<2x2x12x12x8xf32, #tpu.memory_space<vmem>>, vector<2x2x12x12x8xf32>
    tpu.vector_store %arg17[%c0_61, %c0_62, %c0_63, %c0_64, %c0_65], %40 {strides = array<i32>} : memref<2x2x12x12x8xf32, #tpu.memory_space<vmem>>, vector<2x2x12x12x8xf32>,
    %c0_66 = arith.constant 0 : index
    %c0_67 = arith.constant 0 : index
    %42 = vector.load %arg2[%c0_66, %c0_67] : memref<16x8xf32, #tpu.memory_space<vmem>>, vector<16x8xf32>
    %c0_68 = arith.constant 0 : index
    %c0_69 = arith.constant 0 : index
    %43 = vector.load %arg3[%c0_68, %c0_69] : memref<1x8xf32, #tpu.memory_space<vmem>>, vector<1x8xf32>
    %c0_70 = arith.constant 0 : index
    %c0_71 = arith.constant 0 : index
    %44 = vector.load %arg4[%c0_70, %c0_71] : memref<1x8xf32, #tpu.memory_space<vmem>>, vector<1x8xf32>
    %c0_72 = arith.constant 0 : index
    %c0_73 = arith.constant 0 : index
    %45 = vector.load %arg5[%c0_72, %c0_73] : memref<1x8xf32, #tpu.memory_space<vmem>>, vector<1x8xf32>
    %c0_74 = arith.constant 0 : index
    %c1_75 = arith.constant 1 : index
    %c1_76 = arith.constant 1 : index
    %c0_77 = arith.constant 0 : index
    %c0_78 = arith.constant 0 : index
    %c0_79 = arith.constant 0 : index
    %46 = vector.load %arg1[%c0_74, %c1_75, %c1_76, %c0_77, %c0_78, %c0_79] : memref<1x2x2x9x9x16xf32, #tpu.memory_space<vmem>>, vector<1x1x1x8x8x16xf32>
    %47 = vector.shape_cast %46 : vector<1x1x1x8x8x16xf32> to vector<8x8x16xf32>
    %48 = vector.shape_cast %47 : vector<8x8x16xf32> to vector<64x16xf32>
    %cst_80 = arith.constant dense<0.000000e+00> : vector<64x8xf32>
    %49 = tpu.matmul %48, %42, %cst_80 {dimension_numbers = #tpu.dot_dimension_numbers<[1], [0], [0], [1], [0, 0, 1, 1], [], []>} : vector<64x16xf32>, vector<16x8xf32>, vector<64x8xf32> -> vector<64x8xf32>
    %50 = vector.broadcast %43 : vector<1x8xf32> to vector<64x8xf32>
    %51 = arith.mulf %49, %50 : vector<64x8xf32>
    %52 = vector.broadcast %44 : vector<1x8xf32> to vector<64x8xf32>
    %53 = arith.addf %51, %52 : vector<64x8xf32>
    %cst_81 = arith.constant 0.000000e+00 : f32
    %54 = vector.broadcast %cst_81 : f32 to vector<64x8xf32>
    %55 = arith.cmpf oge, %53, %54 : vector<64x8xf32>
    %56 = vector.broadcast %45 : vector<1x8xf32> to vector<64x8xf32>
    %57 = arith.mulf %56, %53 : vector<64x8xf32>
    %58 = arith.select %55, %53, %57 : vector<64x8xi1>, vector<64x8xf32>
    %59 = vector.shape_cast %58 : vector<64x8xf32> to vector<8x8x8xf32>
    %c0_82 = arith.constant 0 : index
    %c0_83 = arith.constant 0 : index
    %c2 = arith.constant 2 : index
    %c2_84 = arith.constant 2 : index
    %c0_85 = arith.constant 0 : index
    %60 = vector.load %arg17[%c0_82, %c0_83, %c2, %c2_84, %c0_85] : memref<2x2x12x12x8xf32, #tpu.memory_space<vmem>>, vector<1x1x8x8x8xf32>
    %61 = vector.shape_cast %60 : vector<1x1x8x8x8xf32> to vector<8x8x8xf32>
    %62 = vector.shape_cast %59 : vector<8x8x8xf32> to vector<1x1x8x8x8xf32>
    tpu.vector_store %arg17[%c0_82, %c0_83, %c2, %c2_84, %c0_85], %62 {strides = array<i32>} : memref<2x2x12x12x8xf32, #tpu.memory_space<vmem>>, vector<1x1x8x8x8xf32>,
    %c0_86 = arith.constant 0 : index
    %c1_87 = arith.constant 1 : index
    %c0_88 = arith.constant 0 : index
    %c0_89 = arith.constant 0 : index
    %c1_90 = arith.constant 1 : index
    %c0_91 = arith.constant 0 : index
    %63 = vector.load %arg1[%c0_86, %c1_87, %c0_88, %c0_89, %c1_90, %c0_91] : memref<1x2x2x9x9x16xf32, #tpu.memory_space<vmem>>, vector<1x1x1x8x8x16xf32>
    %64 = vector.shape_cast %63 : vector<1x1x1x8x8x16xf32> to vector<8x8x16xf32>
    %65 = vector.shape_cast %64 : vector<8x8x16xf32> to vector<64x16xf32>
    %cst_92 = arith.constant dense<0.000000e+00> : vector<64x8xf32>
    %66 = tpu.matmul %65, %42, %cst_92 {dimension_numbers = #tpu.dot_dimension_numbers<[1], [0], [0], [1], [0, 0, 1, 1], [], []>} : vector<64x16xf32>, vector<16x8xf32>, vector<64x8xf32> -> vector<64x8xf32>
    %67 = vector.broadcast %43 : vector<1x8xf32> to vector<64x8xf32>
    %68 = arith.mulf %66, %67 : vector<64x8xf32>
    %69 = vector.broadcast %44 : vector<1x8xf32> to vector<64x8xf32>
    %70 = arith.addf %68, %69 : vector<64x8xf32>
    %cst_93 = arith.constant 0.000000e+00 : f32
    %71 = vector.broadcast %cst_93 : f32 to vector<64x8xf32>
    %72 = arith.cmpf oge, %70, %71 : vector<64x8xf32>
    %73 = vector.broadcast %45 : vector<1x8xf32> to vector<64x8xf32>
    %74 = arith.mulf %73, %70 : vector<64x8xf32>
    %75 = arith.select %72, %70, %74 : vector<64x8xi1>, vector<64x8xf32>
    %76 = vector.shape_cast %75 : vector<64x8xf32> to vector<8x8x8xf32>
    %c0_94 = arith.constant 0 : index
    %c1_95 = arith.constant 1 : index
    %c2_96 = arith.constant 2 : index
    %c2_97 = arith.constant 2 : index
    %c0_98 = arith.constant 0 : index
    %77 = vector.load %arg17[%c0_94, %c1_95, %c2_96, %c2_97, %c0_98] : memref<2x2x12x12x8xf32, #tpu.memory_space<vmem>>, vector<1x1x8x8x8xf32>
    %78 = vector.shape_cast %77 : vector<1x1x8x8x8xf32> to vector<8x8x8xf32>
    %79 = vector.shape_cast %76 : vector<8x8x8xf32> to vector<1x1x8x8x8xf32>
    tpu.vector_store %arg17[%c0_94, %c1_95, %c2_96, %c2_97, %c0_98], %79 {strides = array<i32>} : memref<2x2x12x12x8xf32, #tpu.memory_space<vmem>>, vector<1x1x8x8x8xf32>,
    %c0_99 = arith.constant 0 : index
    %c0_100 = arith.constant 0 : index
    %c1_101 = arith.constant 1 : index
    %c1_102 = arith.constant 1 : index
    %c0_103 = arith.constant 0 : index
    %c0_104 = arith.constant 0 : index
    %80 = vector.load %arg1[%c0_99, %c0_100, %c1_101, %c1_102, %c0_103, %c0_104] : memref<1x2x2x9x9x16xf32, #tpu.memory_space<vmem>>, vector<1x1x1x8x8x16xf32>
    %81 = vector.shape_cast %80 : vector<1x1x1x8x8x16xf32> to vector<8x8x16xf32>
    %82 = vector.shape_cast %81 : vector<8x8x16xf32> to vector<64x16xf32>
    %cst_105 = arith.constant dense<0.000000e+00> : vector<64x8xf32>
    %83 = tpu.matmul %82, %42, %cst_105 {dimension_numbers = #tpu.dot_dimension_numbers<[1], [0], [0], [1], [0, 0, 1, 1], [], []>} : vector<64x16xf32>, vector<16x8xf32>, vector<64x8xf32> -> vector<64x8xf32>
    %84 = vector.broadcast %43 : vector<1x8xf32> to vector<64x8xf32>
    %85 = arith.mulf %83, %84 : vector<64x8xf32>
    %86 = vector.broadcast %44 : vector<1x8xf32> to vector<64x8xf32>
    %87 = arith.addf %85, %86 : vector<64x8xf32>
    %cst_106 = arith.constant 0.000000e+00 : f32
    %88 = vector.broadcast %cst_106 : f32 to vector<64x8xf32>
    %89 = arith.cmpf oge, %87, %88 : vector<64x8xf32>
    %90 = vector.broadcast %45 : vector<1x8xf32> to vector<64x8xf32>
    %91 = arith.mulf %90, %87 : vector<64x8xf32>
    %92 = arith.select %89, %87, %91 : vector<64x8xi1>, vector<64x8xf32>
    %93 = vector.shape_cast %92 : vector<64x8xf32> to vector<8x8x8xf32>
    %c1_107 = arith.constant 1 : index
    %c0_108 = arith.constant 0 : index
    %c2_109 = arith.constant 2 : index
    %c2_110 = arith.constant 2 : index
    %c0_111 = arith.constant 0 : index
    %94 = vector.load %arg17[%c1_107, %c0_108, %c2_109, %c2_110, %c0_111] : memref<2x2x12x12x8xf32, #tpu.memory_space<vmem>>, vector<1x1x8x8x8xf32>
    %95 = vector.shape_cast %94 : vector<1x1x8x8x8xf32> to vector<8x8x8xf32>
    %96 = vector.shape_cast %93 : vector<8x8x8xf32> to vector<1x1x8x8x8xf32>
    tpu.vector_store %arg17[%c1_107, %c0_108, %c2_109, %c2_110, %c0_111], %96 {strides = array<i32>} : memref<2x2x12x12x8xf32, #tpu.memory_space<vmem>>, vector<1x1x8x8x8xf32>,
    %c0_112 = arith.constant 0 : index
    %c0_113 = arith.constant 0 : index
    %c0_114 = arith.constant 0 : index
    %c1_115 = arith.constant 1 : index
    %c1_116 = arith.constant 1 : index
    %c0_117 = arith.constant 0 : index
    %97 = vector.load %arg1[%c0_112, %c0_113, %c0_114, %c1_115, %c1_116, %c0_117] : memref<1x2x2x9x9x16xf32, #tpu.memory_space<vmem>>, vector<1x1x1x8x8x16xf32>
    %98 = vector.shape_cast %97 : vector<1x1x1x8x8x16xf32> to vector<8x8x16xf32>
    %99 = vector.shape_cast %98 : vector<8x8x16xf32> to vector<64x16xf32>
    %cst_118 = arith.constant dense<0.000000e+00> : vector<64x8xf32>
    %100 = tpu.matmul %99, %42, %cst_118 {dimension_numbers = #tpu.dot_dimension_numbers<[1], [0], [0], [1], [0, 0, 1, 1], [], []>} : vector<64x16xf32>, vector<16x8xf32>, vector<64x8xf32> -> vector<64x8xf32>
    %101 = vector.broadcast %43 : vector<1x8xf32> to vector<64x8xf32>
    %102 = arith.mulf %100, %101 : vector<64x8xf32>
    %103 = vector.broadcast %44 : vector<1x8xf32> to vector<64x8xf32>
    %104 = arith.addf %102, %103 : vector<64x8xf32>
    %cst_119 = arith.constant 0.000000e+00 : f32
    %105 = vector.broadcast %cst_119 : f32 to vector<64x8xf32>
    %106 = arith.cmpf oge, %104, %105 : vector<64x8xf32>
    %107 = vector.broadcast %45 : vector<1x8xf32> to vector<64x8xf32>
    %108 = arith.mulf %107, %104 : vector<64x8xf32>
    %109 = arith.select %106, %104, %108 : vector<64x8xi1>, vector<64x8xf32>
    %110 = vector.shape_cast %109 : vector<64x8xf32> to vector<8x8x8xf32>
    %c1_120 = arith.constant 1 : index
    %c1_121 = arith.constant 1 : index
    %c2_122 = arith.constant 2 : index
    %c2_123 = arith.constant 2 : index
    %c0_124 = arith.constant 0 : index
    %111 = vector.load %arg17[%c1_120, %c1_121, %c2_122, %c2_123, %c0_124] : memref<2x2x12x12x8xf32, #tpu.memory_space<vmem>>, vector<1x1x8x8x8xf32>
    %112 = vector.shape_cast %111 : vector<1x1x8x8x8xf32> to vector<8x8x8xf32>
    %113 = vector.shape_cast %110 : vector<8x8x8xf32> to vector<1x1x8x8x8xf32>
    tpu.vector_store %arg17[%c1_120, %c1_121, %c2_122, %c2_123, %c0_124], %113 {strides = array<i32>} : memref<2x2x12x12x8xf32, #tpu.memory_space<vmem>>, vector<1x1x8x8x8xf32>,
    %c0_125 = arith.constant 0 : index
    %c0_126 = arith.constant 0 : index
    %c0_127 = arith.constant 0 : index
    %114 = vector.load %arg6[%c0_125, %c0_126, %c0_127] : memref<4x9x8xf32, #tpu.memory_space<vmem>>, vector<4x9x8xf32>
    %c0_128 = arith.constant 0 : index
    %c0_129 = arith.constant 0 : index
    %c0_130 = arith.constant 0 : index
    %115 = vector.load %arg10[%c0_128, %c0_129, %c0_130] : memref<4x8x8xf32, #tpu.memory_space<vmem>>, vector<4x8x8xf32>
    %c0_131 = arith.constant 0 : index
    %c0_132 = arith.constant 0 : index
    %116 = vector.load %arg7[%c0_131, %c0_132] : memref<1x32xf32, #tpu.memory_space<vmem>>, vector<1x32xf32>
    %c0_133 = arith.constant 0 : index
    %c0_134 = arith.constant 0 : index
    %117 = vector.load %arg8[%c0_133, %c0_134] : memref<1x32xf32, #tpu.memory_space<vmem>>, vector<1x32xf32>
    %c0_135 = arith.constant 0 : index
    %c0_136 = arith.constant 0 : index
    %118 = vector.load %arg9[%c0_135, %c0_136] : memref<1x32xf32, #tpu.memory_space<vmem>>, vector<1x32xf32>
    %c0_137 = arith.constant 0 : index
    %c0_138 = arith.constant 0 : index
    %119 = vector.load %arg11[%c0_137, %c0_138] : memref<1x32xf32, #tpu.memory_space<vmem>>, vector<1x32xf32>
    %c0_139 = arith.constant 0 : index
    %c0_140 = arith.constant 0 : index
    %120 = vector.load %arg12[%c0_139, %c0_140] : memref<1x32xf32, #tpu.memory_space<vmem>>, vector<1x32xf32>
    %c0_141 = arith.constant 0 : index
    %c0_142 = arith.constant 0 : index
    %121 = vector.load %arg14[%c0_141, %c0_142] : memref<1x32xf32, #tpu.memory_space<vmem>>, vector<1x32xf32>
    %cst_143 = arith.constant 0.000000e+00 : f32
    %122 = vector.broadcast %cst_143 : f32 to vector<8x8x8xf32>
    %c1_144 = arith.constant 1 : index
    %c1_145 = arith.constant 1 : index
    %c1_146 = arith.constant 1 : index
    %c1_147 = arith.constant 1 : index
    %c0_148 = arith.constant 0 : index
    %123 = vector.load %arg17[%c1_144, %c1_145, %c1_146, %c1_147, %c0_148] : memref<2x2x12x12x8xf32, #tpu.memory_space<vmem>>, vector<1x1x8x8x8xf32>
    %124 = vector.shape_cast %123 : vector<1x1x8x8x8xf32> to vector<8x8x8xf32>
    %125 = vector.extract_strided_slice %114 {offsets = [0, 0, 0], sizes = [1, 1, 8], strides = [1, 1, 1]} : vector<4x9x8xf32> to vector<1x1x8xf32>
    %126 = vector.shape_cast %125 : vector<1x1x8xf32> to vector<8xf32>
    %127 = vector.shape_cast %126 : vector<8xf32> to vector<1x1x8xf32>
    %128 = vector.broadcast %127 : vector<1x1x8xf32> to vector<8x8x8xf32>
    %129 = arith.mulf %124, %128 : vector<8x8x8xf32>
    %130 = arith.addf %122, %129 : vector<8x8x8xf32>
    %c1_149 = arith.constant 1 : index
    %c0_150 = arith.constant 0 : index
    %c1_151 = arith.constant 1 : index
    %c2_152 = arith.constant 2 : index
    %c0_153 = arith.constant 0 : index
    %131 = vector.load %arg17[%c1_149, %c0_150, %c1_151, %c2_152, %c0_153] : memref<2x2x12x12x8xf32, #tpu.memory_space<vmem>>, vector<1x1x8x8x8xf32>
    %132 = vector.shape_cast %131 : vector<1x1x8x8x8xf32> to vector<8x8x8xf32>
    %133 = vector.extract_strided_slice %114 {offsets = [0, 1, 0], sizes = [1, 1, 8], strides = [1, 1, 1]} : vector<4x9x8xf32> to vector<1x1x8xf32>
    %134 = vector.shape_cast %133 : vector<1x1x8xf32> to vector<8xf32>
    %135 = vector.shape_cast %134 : vector<8xf32> to vector<1x1x8xf32>
    %136 = vector.broadcast %135 : vector<1x1x8xf32> to vector<8x8x8xf32>
    %137 = arith.mulf %132, %136 : vector<8x8x8xf32>
    %138 = arith.addf %130, %137 : vector<8x8x8xf32>
    %c1_154 = arith.constant 1 : index
    %c1_155 = arith.constant 1 : index
    %c1_156 = arith.constant 1 : index
    %c2_157 = arith.constant 2 : index
    %c0_158 = arith.constant 0 : index
    %139 = vector.load %arg17[%c1_154, %c1_155, %c1_156, %c2_157, %c0_158] : memref<2x2x12x12x8xf32, #tpu.memory_space<vmem>>, vector<1x1x8x8x8xf32>
    %140 = vector.shape_cast %139 : vector<1x1x8x8x8xf32> to vector<8x8x8xf32>
    %141 = vector.extract_strided_slice %114 {offsets = [0, 2, 0], sizes = [1, 1, 8], strides = [1, 1, 1]} : vector<4x9x8xf32> to vector<1x1x8xf32>
    %142 = vector.shape_cast %141 : vector<1x1x8xf32> to vector<8xf32>
    %143 = vector.shape_cast %142 : vector<8xf32> to vector<1x1x8xf32>
    %144 = vector.broadcast %143 : vector<1x1x8xf32> to vector<8x8x8xf32>
    %145 = arith.mulf %140, %144 : vector<8x8x8xf32>
    %146 = arith.addf %138, %145 : vector<8x8x8xf32>
    %c0_159 = arith.constant 0 : index
    %c1_160 = arith.constant 1 : index
    %c2_161 = arith.constant 2 : index
    %c1_162 = arith.constant 1 : index
    %c0_163 = arith.constant 0 : index
    %147 = vector.load %arg17[%c0_159, %c1_160, %c2_161, %c1_162, %c0_163] : memref<2x2x12x12x8xf32, #tpu.memory_space<vmem>>, vector<1x1x8x8x8xf32>
    %148 = vector.shape_cast %147 : vector<1x1x8x8x8xf32> to vector<8x8x8xf32>
    %149 = vector.extract_strided_slice %114 {offsets = [0, 3, 0], sizes = [1, 1, 8], strides = [1, 1, 1]} : vector<4x9x8xf32> to vector<1x1x8xf32>
    %150 = vector.shape_cast %149 : vector<1x1x8xf32> to vector<8xf32>
    %151 = vector.shape_cast %150 : vector<8xf32> to vector<1x1x8xf32>
    %152 = vector.broadcast %151 : vector<1x1x8xf32> to vector<8x8x8xf32>
    %153 = arith.mulf %148, %152 : vector<8x8x8xf32>
    %154 = arith.addf %146, %153 : vector<8x8x8xf32>
    %c0_164 = arith.constant 0 : index
    %c0_165 = arith.constant 0 : index
    %c2_166 = arith.constant 2 : index
    %c2_167 = arith.constant 2 : index
    %c0_168 = arith.constant 0 : index
    %155 = vector.load %arg17[%c0_164, %c0_165, %c2_166, %c2_167, %c0_168] : memref<2x2x12x12x8xf32, #tpu.memory_space<vmem>>, vector<1x1x8x8x8xf32>
    %156 = vector.shape_cast %155 : vector<1x1x8x8x8xf32> to vector<8x8x8xf32>
    %157 = vector.extract_strided_slice %114 {offsets = [0, 4, 0], sizes = [1, 1, 8], strides = [1, 1, 1]} : vector<4x9x8xf32> to vector<1x1x8xf32>
    %158 = vector.shape_cast %157 : vector<1x1x8xf32> to vector<8xf32>
    %159 = vector.shape_cast %158 : vector<8xf32> to vector<1x1x8xf32>
    %160 = vector.broadcast %159 : vector<1x1x8xf32> to vector<8x8x8xf32>
    %161 = arith.mulf %156, %160 : vector<8x8x8xf32>
    %162 = arith.addf %154, %161 : vector<8x8x8xf32>
    %c0_169 = arith.constant 0 : index
    %c1_170 = arith.constant 1 : index
    %c2_171 = arith.constant 2 : index
    %c2_172 = arith.constant 2 : index
    %c0_173 = arith.constant 0 : index
    %163 = vector.load %arg17[%c0_169, %c1_170, %c2_171, %c2_172, %c0_173] : memref<2x2x12x12x8xf32, #tpu.memory_space<vmem>>, vector<1x1x8x8x8xf32>
    %164 = vector.shape_cast %163 : vector<1x1x8x8x8xf32> to vector<8x8x8xf32>
    %165 = vector.extract_strided_slice %114 {offsets = [0, 5, 0], sizes = [1, 1, 8], strides = [1, 1, 1]} : vector<4x9x8xf32> to vector<1x1x8xf32>
    %166 = vector.shape_cast %165 : vector<1x1x8xf32> to vector<8xf32>
    %167 = vector.shape_cast %166 : vector<8xf32> to vector<1x1x8xf32>
    %168 = vector.broadcast %167 : vector<1x1x8xf32> to vector<8x8x8xf32>
    %169 = arith.mulf %164, %168 : vector<8x8x8xf32>
    %170 = arith.addf %162, %169 : vector<8x8x8xf32>
    %c1_174 = arith.constant 1 : index
    %c1_175 = arith.constant 1 : index
    %c2_176 = arith.constant 2 : index
    %c1_177 = arith.constant 1 : index
    %c0_178 = arith.constant 0 : index
    %171 = vector.load %arg17[%c1_174, %c1_175, %c2_176, %c1_177, %c0_178] : memref<2x2x12x12x8xf32, #tpu.memory_space<vmem>>, vector<1x1x8x8x8xf32>
    %172 = vector.shape_cast %171 : vector<1x1x8x8x8xf32> to vector<8x8x8xf32>
    %173 = vector.extract_strided_slice %114 {offsets = [0, 6, 0], sizes = [1, 1, 8], strides = [1, 1, 1]} : vector<4x9x8xf32> to vector<1x1x8xf32>
    %174 = vector.shape_cast %173 : vector<1x1x8xf32> to vector<8xf32>
    %175 = vector.shape_cast %174 : vector<8xf32> to vector<1x1x8xf32>
    %176 = vector.broadcast %175 : vector<1x1x8xf32> to vector<8x8x8xf32>
    %177 = arith.mulf %172, %176 : vector<8x8x8xf32>
    %178 = arith.addf %170, %177 : vector<8x8x8xf32>
    %c1_179 = arith.constant 1 : index
    %c0_180 = arith.constant 0 : index
    %c2_181 = arith.constant 2 : index
    %c2_182 = arith.constant 2 : index
    %c0_183 = arith.constant 0 : index
    %179 = vector.load %arg17[%c1_179, %c0_180, %c2_181, %c2_182, %c0_183] : memref<2x2x12x12x8xf32, #tpu.memory_space<vmem>>, vector<1x1x8x8x8xf32>
    %180 = vector.shape_cast %179 : vector<1x1x8x8x8xf32> to vector<8x8x8xf32>
    %181 = vector.extract_strided_slice %114 {offsets = [0, 7, 0], sizes = [1, 1, 8], strides = [1, 1, 1]} : vector<4x9x8xf32> to vector<1x1x8xf32>
    %182 = vector.shape_cast %181 : vector<1x1x8xf32> to vector<8xf32>
    %183 = vector.shape_cast %182 : vector<8xf32> to vector<1x1x8xf32>
    %184 = vector.broadcast %183 : vector<1x1x8xf32> to vector<8x8x8xf32>
    %185 = arith.mulf %180, %184 : vector<8x8x8xf32>
    %186 = arith.addf %178, %185 : vector<8x8x8xf32>
    %c1_184 = arith.constant 1 : index
    %c1_185 = arith.constant 1 : index
    %c2_186 = arith.constant 2 : index
    %c2_187 = arith.constant 2 : index
    %c0_188 = arith.constant 0 : index
    %187 = vector.load %arg17[%c1_184, %c1_185, %c2_186, %c2_187, %c0_188] : memref<2x2x12x12x8xf32, #tpu.memory_space<vmem>>, vector<1x1x8x8x8xf32>
    %188 = vector.shape_cast %187 : vector<1x1x8x8x8xf32> to vector<8x8x8xf32>
    %189 = vector.extract_strided_slice %114 {offsets = [0, 8, 0], sizes = [1, 1, 8], strides = [1, 1, 1]} : vector<4x9x8xf32> to vector<1x1x8xf32>
    %190 = vector.shape_cast %189 : vector<1x1x8xf32> to vector<8xf32>
    %191 = vector.shape_cast %190 : vector<8xf32> to vector<1x1x8xf32>
    %192 = vector.broadcast %191 : vector<1x1x8xf32> to vector<8x8x8xf32>
    %193 = arith.mulf %188, %192 : vector<8x8x8xf32>
    %194 = arith.addf %186, %193 : vector<8x8x8xf32>
    %195 = vector.shape_cast %194 : vector<8x8x8xf32> to vector<64x8xf32>
    %196 = vector.extract_strided_slice %116 {offsets = [0, 0], sizes = [1, 8], strides = [1, 1]} : vector<1x32xf32> to vector<1x8xf32>
    %197 = vector.broadcast %196 : vector<1x8xf32> to vector<64x8xf32>
    %198 = arith.mulf %195, %197 : vector<64x8xf32>
    %199 = vector.extract_strided_slice %117 {offsets = [0, 0], sizes = [1, 8], strides = [1, 1]} : vector<1x32xf32> to vector<1x8xf32>
    %200 = vector.broadcast %199 : vector<1x8xf32> to vector<64x8xf32>
    %201 = arith.addf %198, %200 : vector<64x8xf32>
    %cst_189 = arith.constant 0.000000e+00 : f32
    %202 = vector.broadcast %cst_189 : f32 to vector<64x8xf32>
    %203 = arith.cmpf oge, %201, %202 : vector<64x8xf32>
    %204 = vector.extract_strided_slice %118 {offsets = [0, 0], sizes = [1, 8], strides = [1, 1]} : vector<1x32xf32> to vector<1x8xf32>
    %205 = vector.broadcast %204 : vector<1x8xf32> to vector<64x8xf32>
    %206 = arith.mulf %205, %201 : vector<64x8xf32>
    %207 = arith.select %203, %201, %206 : vector<64x8xi1>, vector<64x8xf32>
    %208 = vector.extract_strided_slice %115 {offsets = [0, 0, 0], sizes = [1, 8, 8], strides = [1, 1, 1]} : vector<4x8x8xf32> to vector<1x8x8xf32>
    %209 = vector.shape_cast %208 : vector<1x8x8xf32> to vector<8x8xf32>
    %cst_190 = arith.constant dense<0.000000e+00> : vector<64x8xf32>
    %210 = tpu.matmul %207, %209, %cst_190 {dimension_numbers = #tpu.dot_dimension_numbers<[1], [0], [0], [1], [0, 0, 1, 1], [], []>} : vector<64x8xf32>, vector<8x8xf32>, vector<64x8xf32> -> vector<64x8xf32>
    %211 = vector.extract_strided_slice %119 {offsets = [0, 0], sizes = [1, 8], strides = [1, 1]} : vector<1x32xf32> to vector<1x8xf32>
    %212 = vector.broadcast %211 : vector<1x8xf32> to vector<64x8xf32>
    %213 = arith.mulf %210, %212 : vector<64x8xf32>
    %214 = vector.extract_strided_slice %120 {offsets = [0, 0], sizes = [1, 8], strides = [1, 1]} : vector<1x32xf32> to vector<1x8xf32>
    %215 = vector.broadcast %214 : vector<1x8xf32> to vector<64x8xf32>
    %216 = arith.addf %213, %215 : vector<64x8xf32>
    %cst_191 = arith.constant 0.000000e+00 : f32
    %217 = vector.broadcast %cst_191 : f32 to vector<64x8xf32>
    %218 = arith.cmpf oge, %216, %217 : vector<64x8xf32>
    %219 = vector.extract_strided_slice %121 {offsets = [0, 0], sizes = [1, 8], strides = [1, 1]} : vector<1x32xf32> to vector<1x8xf32>
    %220 = vector.broadcast %219 : vector<1x8xf32> to vector<64x8xf32>
    %221 = arith.mulf %220, %216 : vector<64x8xf32>
    %222 = arith.select %218, %216, %221 : vector<64x8xi1>, vector<64x8xf32>
    %223 = vector.shape_cast %222 : vector<64x8xf32> to vector<8x8x8xf32>
    %c0_192 = arith.constant 0 : index
    %c0_193 = arith.constant 0 : index
    %c0_194 = arith.constant 0 : index
    %c0_195 = arith.constant 0 : index
    %224 = vector.load %arg16[%c0_192, %c0_193, %c0_194, %c0_195] : memref<1x8x8x32xf32, #tpu.memory_space<vmem>>, vector<1x8x8x8xf32>
    %225 = vector.shape_cast %224 : vector<1x8x8x8xf32> to vector<8x8x8xf32>
    %226 = vector.shape_cast %223 : vector<8x8x8xf32> to vector<1x8x8x8xf32>
    tpu.vector_store %arg16[%c0_192, %c0_193, %c0_194, %c0_195], %226 {strides = array<i32>} : memref<1x8x8x32xf32, #tpu.memory_space<vmem>>, vector<1x8x8x8xf32>,
    %cst_196 = arith.constant 0.000000e+00 : f32
    %227 = vector.broadcast %cst_196 : f32 to vector<8x8x8xf32>
    %c0_197 = arith.constant 0 : index
    %c0_198 = arith.constant 0 : index
    %c1_199 = arith.constant 1 : index
    %c1_200 = arith.constant 1 : index
    %c0_201 = arith.constant 0 : index
    %228 = vector.load %arg17[%c0_197, %c0_198, %c1_199, %c1_200, %c0_201] : memref<2x2x12x12x8xf32, #tpu.memory_space<vmem>>, vector<1x1x8x8x8xf32>
    %229 = vector.shape_cast %228 : vector<1x1x8x8x8xf32> to vector<8x8x8xf32>
    %230 = vector.extract_strided_slice %114 {offsets = [1, 0, 0], sizes = [1, 1, 8], strides = [1, 1, 1]} : vector<4x9x8xf32> to vector<1x1x8xf32>
    %231 = vector.shape_cast %230 : vector<1x1x8xf32> to vector<8xf32>
    %232 = vector.shape_cast %231 : vector<8xf32> to vector<1x1x8xf32>
    %233 = vector.broadcast %232 : vector<1x1x8xf32> to vector<8x8x8xf32>
    %234 = arith.mulf %229, %233 : vector<8x8x8xf32>
    %235 = arith.addf %227, %234 : vector<8x8x8xf32>
    %c0_202 = arith.constant 0 : index
    %c0_203 = arith.constant 0 : index
    %c1_204 = arith.constant 1 : index
    %c2_205 = arith.constant 2 : index
    %c0_206 = arith.constant 0 : index
    %236 = vector.load %arg17[%c0_202, %c0_203, %c1_204, %c2_205, %c0_206] : memref<2x2x12x12x8xf32, #tpu.memory_space<vmem>>, vector<1x1x8x8x8xf32>
    %237 = vector.shape_cast %236 : vector<1x1x8x8x8xf32> to vector<8x8x8xf32>
    %238 = vector.extract_strided_slice %114 {offsets = [1, 1, 0], sizes = [1, 1, 8], strides = [1, 1, 1]} : vector<4x9x8xf32> to vector<1x1x8xf32>
    %239 = vector.shape_cast %238 : vector<1x1x8xf32> to vector<8xf32>
    %240 = vector.shape_cast %239 : vector<8xf32> to vector<1x1x8xf32>
    %241 = vector.broadcast %240 : vector<1x1x8xf32> to vector<8x8x8xf32>
    %242 = arith.mulf %237, %241 : vector<8x8x8xf32>
    %243 = arith.addf %235, %242 : vector<8x8x8xf32>
    %c0_207 = arith.constant 0 : index
    %c0_208 = arith.constant 0 : index
    %c1_209 = arith.constant 1 : index
    %c3 = arith.constant 3 : index
    %c0_210 = arith.constant 0 : index
    %244 = vector.load %arg17[%c0_207, %c0_208, %c1_209, %c3, %c0_210] : memref<2x2x12x12x8xf32, #tpu.memory_space<vmem>>, vector<1x1x8x8x8xf32>
    %245 = vector.shape_cast %244 : vector<1x1x8x8x8xf32> to vector<8x8x8xf32>
    %246 = vector.extract_strided_slice %114 {offsets = [1, 2, 0], sizes = [1, 1, 8], strides = [1, 1, 1]} : vector<4x9x8xf32> to vector<1x1x8xf32>
    %247 = vector.shape_cast %246 : vector<1x1x8xf32> to vector<8xf32>
    %248 = vector.shape_cast %247 : vector<8xf32> to vector<1x1x8xf32>
    %249 = vector.broadcast %248 : vector<1x1x8xf32> to vector<8x8x8xf32>
    %250 = arith.mulf %245, %249 : vector<8x8x8xf32>
    %251 = arith.addf %243, %250 : vector<8x8x8xf32>
    %c0_211 = arith.constant 0 : index
    %c0_212 = arith.constant 0 : index
    %c2_213 = arith.constant 2 : index
    %c1_214 = arith.constant 1 : index
    %c0_215 = arith.constant 0 : index
    %252 = vector.load %arg17[%c0_211, %c0_212, %c2_213, %c1_214, %c0_215] : memref<2x2x12x12x8xf32, #tpu.memory_space<vmem>>, vector<1x1x8x8x8xf32>
    %253 = vector.shape_cast %252 : vector<1x1x8x8x8xf32> to vector<8x8x8xf32>
    %254 = vector.extract_strided_slice %114 {offsets = [1, 3, 0], sizes = [1, 1, 8], strides = [1, 1, 1]} : vector<4x9x8xf32> to vector<1x1x8xf32>
    %255 = vector.shape_cast %254 : vector<1x1x8xf32> to vector<8xf32>
    %256 = vector.shape_cast %255 : vector<8xf32> to vector<1x1x8xf32>
    %257 = vector.broadcast %256 : vector<1x1x8xf32> to vector<8x8x8xf32>
    %258 = arith.mulf %253, %257 : vector<8x8x8xf32>
    %259 = arith.addf %251, %258 : vector<8x8x8xf32>
    %c0_216 = arith.constant 0 : index
    %c0_217 = arith.constant 0 : index
    %c2_218 = arith.constant 2 : index
    %c2_219 = arith.constant 2 : index
    %c0_220 = arith.constant 0 : index
    %260 = vector.load %arg17[%c0_216, %c0_217, %c2_218, %c2_219, %c0_220] : memref<2x2x12x12x8xf32, #tpu.memory_space<vmem>>, vector<1x1x8x8x8xf32>
    %261 = vector.shape_cast %260 : vector<1x1x8x8x8xf32> to vector<8x8x8xf32>
    %262 = vector.extract_strided_slice %114 {offsets = [1, 4, 0], sizes = [1, 1, 8], strides = [1, 1, 1]} : vector<4x9x8xf32> to vector<1x1x8xf32>
    %263 = vector.shape_cast %262 : vector<1x1x8xf32> to vector<8xf32>
    %264 = vector.shape_cast %263 : vector<8xf32> to vector<1x1x8xf32>
    %265 = vector.broadcast %264 : vector<1x1x8xf32> to vector<8x8x8xf32>
    %266 = arith.mulf %261, %265 : vector<8x8x8xf32>
    %267 = arith.addf %259, %266 : vector<8x8x8xf32>
    %c0_221 = arith.constant 0 : index
    %c0_222 = arith.constant 0 : index
    %c2_223 = arith.constant 2 : index
    %c3_224 = arith.constant 3 : index
    %c0_225 = arith.constant 0 : index
    %268 = vector.load %arg17[%c0_221, %c0_222, %c2_223, %c3_224, %c0_225] : memref<2x2x12x12x8xf32, #tpu.memory_space<vmem>>, vector<1x1x8x8x8xf32>
    %269 = vector.shape_cast %268 : vector<1x1x8x8x8xf32> to vector<8x8x8xf32>
    %270 = vector.extract_strided_slice %114 {offsets = [1, 5, 0], sizes = [1, 1, 8], strides = [1, 1, 1]} : vector<4x9x8xf32> to vector<1x1x8xf32>
    %271 = vector.shape_cast %270 : vector<1x1x8xf32> to vector<8xf32>
    %272 = vector.shape_cast %271 : vector<8xf32> to vector<1x1x8xf32>
    %273 = vector.broadcast %272 : vector<1x1x8xf32> to vector<8x8x8xf32>
    %274 = arith.mulf %269, %273 : vector<8x8x8xf32>
    %275 = arith.addf %267, %274 : vector<8x8x8xf32>
    %c0_226 = arith.constant 0 : index
    %c0_227 = arith.constant 0 : index
    %c3_228 = arith.constant 3 : index
    %c1_229 = arith.constant 1 : index
    %c0_230 = arith.constant 0 : index
    %276 = vector.load %arg17[%c0_226, %c0_227, %c3_228, %c1_229, %c0_230] : memref<2x2x12x12x8xf32, #tpu.memory_space<vmem>>, vector<1x1x8x8x8xf32>
    %277 = vector.shape_cast %276 : vector<1x1x8x8x8xf32> to vector<8x8x8xf32>
    %278 = vector.extract_strided_slice %114 {offsets = [1, 6, 0], sizes = [1, 1, 8], strides = [1, 1, 1]} : vector<4x9x8xf32> to vector<1x1x8xf32>
    %279 = vector.shape_cast %278 : vector<1x1x8xf32> to vector<8xf32>
    %280 = vector.shape_cast %279 : vector<8xf32> to vector<1x1x8xf32>
    %281 = vector.broadcast %280 : vector<1x1x8xf32> to vector<8x8x8xf32>
    %282 = arith.mulf %277, %281 : vector<8x8x8xf32>
    %283 = arith.addf %275, %282 : vector<8x8x8xf32>
    %c0_231 = arith.constant 0 : index
    %c0_232 = arith.constant 0 : index
    %c3_233 = arith.constant 3 : index
    %c2_234 = arith.constant 2 : index
    %c0_235 = arith.constant 0 : index
    %284 = vector.load %arg17[%c0_231, %c0_232, %c3_233, %c2_234, %c0_235] : memref<2x2x12x12x8xf32, #tpu.memory_space<vmem>>, vector<1x1x8x8x8xf32>
    %285 = vector.shape_cast %284 : vector<1x1x8x8x8xf32> to vector<8x8x8xf32>
    %286 = vector.extract_strided_slice %114 {offsets = [1, 7, 0], sizes = [1, 1, 8], strides = [1, 1, 1]} : vector<4x9x8xf32> to vector<1x1x8xf32>
    %287 = vector.shape_cast %286 : vector<1x1x8xf32> to vector<8xf32>
    %288 = vector.shape_cast %287 : vector<8xf32> to vector<1x1x8xf32>
    %289 = vector.broadcast %288 : vector<1x1x8xf32> to vector<8x8x8xf32>
    %290 = arith.mulf %285, %289 : vector<8x8x8xf32>
    %291 = arith.addf %283, %290 : vector<8x8x8xf32>
    %c0_236 = arith.constant 0 : index
    %c0_237 = arith.constant 0 : index
    %c3_238 = arith.constant 3 : index
    %c3_239 = arith.constant 3 : index
    %c0_240 = arith.constant 0 : index
    %292 = vector.load %arg17[%c0_236, %c0_237, %c3_238, %c3_239, %c0_240] : memref<2x2x12x12x8xf32, #tpu.memory_space<vmem>>, vector<1x1x8x8x8xf32>
    %293 = vector.shape_cast %292 : vector<1x1x8x8x8xf32> to vector<8x8x8xf32>
    %294 = vector.extract_strided_slice %114 {offsets = [1, 8, 0], sizes = [1, 1, 8], strides = [1, 1, 1]} : vector<4x9x8xf32> to vector<1x1x8xf32>
    %295 = vector.shape_cast %294 : vector<1x1x8xf32> to vector<8xf32>
    %296 = vector.shape_cast %295 : vector<8xf32> to vector<1x1x8xf32>
    %297 = vector.broadcast %296 : vector<1x1x8xf32> to vector<8x8x8xf32>
    %298 = arith.mulf %293, %297 : vector<8x8x8xf32>
    %299 = arith.addf %291, %298 : vector<8x8x8xf32>
    %300 = arith.addf %299, %194 : vector<8x8x8xf32>
    %301 = vector.shape_cast %300 : vector<8x8x8xf32> to vector<64x8xf32>
    %302 = vector.extract_strided_slice %116 {offsets = [0, 8], sizes = [1, 8], strides = [1, 1]} : vector<1x32xf32> to vector<1x8xf32>
    %303 = vector.broadcast %302 : vector<1x8xf32> to vector<64x8xf32>
    %304 = arith.mulf %301, %303 : vector<64x8xf32>
    %305 = vector.extract_strided_slice %117 {offsets = [0, 8], sizes = [1, 8], strides = [1, 1]} : vector<1x32xf32> to vector<1x8xf32>
    %306 = vector.broadcast %305 : vector<1x8xf32> to vector<64x8xf32>
    %307 = arith.addf %304, %306 : vector<64x8xf32>
    %cst_241 = arith.constant 0.000000e+00 : f32
    %308 = vector.broadcast %cst_241 : f32 to vector<64x8xf32>
    %309 = arith.cmpf oge, %307, %308 : vector<64x8xf32>
    %310 = vector.extract_strided_slice %118 {offsets = [0, 8], sizes = [1, 8], strides = [1, 1]} : vector<1x32xf32> to vector<1x8xf32>
    %311 = vector.broadcast %310 : vector<1x8xf32> to vector<64x8xf32>
    %312 = arith.mulf %311, %307 : vector<64x8xf32>
    %313 = arith.select %309, %307, %312 : vector<64x8xi1>, vector<64x8xf32>
    %314 = vector.extract_strided_slice %115 {offsets = [1, 0, 0], sizes = [1, 8, 8], strides = [1, 1, 1]} : vector<4x8x8xf32> to vector<1x8x8xf32>
    %315 = vector.shape_cast %314 : vector<1x8x8xf32> to vector<8x8xf32>
    %cst_242 = arith.constant dense<0.000000e+00> : vector<64x8xf32>
    %316 = tpu.matmul %313, %315, %cst_242 {dimension_numbers = #tpu.dot_dimension_numbers<[1], [0], [0], [1], [0, 0, 1, 1], [], []>} : vector<64x8xf32>, vector<8x8xf32>, vector<64x8xf32> -> vector<64x8xf32>
    %317 = vector.extract_strided_slice %119 {offsets = [0, 8], sizes = [1, 8], strides = [1, 1]} : vector<1x32xf32> to vector<1x8xf32>
    %318 = vector.broadcast %317 : vector<1x8xf32> to vector<64x8xf32>
    %319 = arith.mulf %316, %318 : vector<64x8xf32>
    %320 = vector.extract_strided_slice %120 {offsets = [0, 8], sizes = [1, 8], strides = [1, 1]} : vector<1x32xf32> to vector<1x8xf32>
    %321 = vector.broadcast %320 : vector<1x8xf32> to vector<64x8xf32>
    %322 = arith.addf %319, %321 : vector<64x8xf32>
    %cst_243 = arith.constant 0.000000e+00 : f32
    %323 = vector.broadcast %cst_243 : f32 to vector<64x8xf32>
    %324 = arith.cmpf oge, %322, %323 : vector<64x8xf32>
    %325 = vector.extract_strided_slice %121 {offsets = [0, 8], sizes = [1, 8], strides = [1, 1]} : vector<1x32xf32> to vector<1x8xf32>
    %326 = vector.broadcast %325 : vector<1x8xf32> to vector<64x8xf32>
    %327 = arith.mulf %326, %322 : vector<64x8xf32>
    %328 = arith.select %324, %322, %327 : vector<64x8xi1>, vector<64x8xf32>
    %329 = vector.shape_cast %328 : vector<64x8xf32> to vector<8x8x8xf32>
    %c0_244 = arith.constant 0 : index
    %c0_245 = arith.constant 0 : index
    %c0_246 = arith.constant 0 : index
    %c8 = arith.constant 8 : index
    %330 = vector.load %arg16[%c0_244, %c0_245, %c0_246, %c8] : memref<1x8x8x32xf32, #tpu.memory_space<vmem>>, vector<1x8x8x8xf32>
    %331 = vector.shape_cast %330 : vector<1x8x8x8xf32> to vector<8x8x8xf32>
    %332 = vector.shape_cast %329 : vector<8x8x8xf32> to vector<1x8x8x8xf32>
    tpu.vector_store %arg16[%c0_244, %c0_245, %c0_246, %c8], %332 {strides = array<i32>} : memref<1x8x8x32xf32, #tpu.memory_space<vmem>>, vector<1x8x8x8xf32>,
    %cst_247 = arith.constant 0.000000e+00 : f32
    %333 = vector.broadcast %cst_247 : f32 to vector<8x8x8xf32>
    %c1_248 = arith.constant 1 : index
    %c1_249 = arith.constant 1 : index
    %c0_250 = arith.constant 0 : index
    %c0_251 = arith.constant 0 : index
    %c0_252 = arith.constant 0 : index
    %334 = vector.load %arg17[%c1_248, %c1_249, %c0_250, %c0_251, %c0_252] : memref<2x2x12x12x8xf32, #tpu.memory_space<vmem>>, vector<1x1x8x8x8xf32>
    %335 = vector.shape_cast %334 : vector<1x1x8x8x8xf32> to vector<8x8x8xf32>
    %336 = vector.extract_strided_slice %114 {offsets = [2, 0, 0], sizes = [1, 1, 8], strides = [1, 1, 1]} : vector<4x9x8xf32> to vector<1x1x8xf32>
    %337 = vector.shape_cast %336 : vector<1x1x8xf32> to vector<8xf32>
    %338 = vector.shape_cast %337 : vector<8xf32> to vector<1x1x8xf32>
    %339 = vector.broadcast %338 : vector<1x1x8xf32> to vector<8x8x8xf32>
    %340 = arith.mulf %335, %339 : vector<8x8x8xf32>
    %341 = arith.addf %333, %340 : vector<8x8x8xf32>
    %c1_253 = arith.constant 1 : index
    %c0_254 = arith.constant 0 : index
    %c0_255 = arith.constant 0 : index
    %c2_256 = arith.constant 2 : index
    %c0_257 = arith.constant 0 : index
    %342 = vector.load %arg17[%c1_253, %c0_254, %c0_255, %c2_256, %c0_257] : memref<2x2x12x12x8xf32, #tpu.memory_space<vmem>>, vector<1x1x8x8x8xf32>
    %343 = vector.shape_cast %342 : vector<1x1x8x8x8xf32> to vector<8x8x8xf32>
    %344 = vector.extract_strided_slice %114 {offsets = [2, 1, 0], sizes = [1, 1, 8], strides = [1, 1, 1]} : vector<4x9x8xf32> to vector<1x1x8xf32>
    %345 = vector.shape_cast %344 : vector<1x1x8xf32> to vector<8xf32>
    %346 = vector.shape_cast %345 : vector<8xf32> to vector<1x1x8xf32>
    %347 = vector.broadcast %346 : vector<1x1x8xf32> to vector<8x8x8xf32>
    %348 = arith.mulf %343, %347 : vector<8x8x8xf32>
    %349 = arith.addf %341, %348 : vector<8x8x8xf32>
    %c1_258 = arith.constant 1 : index
    %c1_259 = arith.constant 1 : index
    %c0_260 = arith.constant 0 : index
    %c3_261 = arith.constant 3 : index
    %c0_262 = arith.constant 0 : index
    %350 = vector.load %arg17[%c1_258, %c1_259, %c0_260, %c3_261, %c0_262] : memref<2x2x12x12x8xf32, #tpu.memory_space<vmem>>, vector<1x1x8x8x8xf32>
    %351 = vector.shape_cast %350 : vector<1x1x8x8x8xf32> to vector<8x8x8xf32>
    %352 = vector.extract_strided_slice %114 {offsets = [2, 2, 0], sizes = [1, 1, 8], strides = [1, 1, 1]} : vector<4x9x8xf32> to vector<1x1x8xf32>
    %353 = vector.shape_cast %352 : vector<1x1x8xf32> to vector<8xf32>
    %354 = vector.shape_cast %353 : vector<8xf32> to vector<1x1x8xf32>
    %355 = vector.broadcast %354 : vector<1x1x8xf32> to vector<8x8x8xf32>
    %356 = arith.mulf %351, %355 : vector<8x8x8xf32>
    %357 = arith.addf %349, %356 : vector<8x8x8xf32>
    %c0_263 = arith.constant 0 : index
    %c1_264 = arith.constant 1 : index
    %c2_265 = arith.constant 2 : index
    %c0_266 = arith.constant 0 : index
    %c0_267 = arith.constant 0 : index
    %358 = vector.load %arg17[%c0_263, %c1_264, %c2_265, %c0_266, %c0_267] : memref<2x2x12x12x8xf32, #tpu.memory_space<vmem>>, vector<1x1x8x8x8xf32>
    %359 = vector.shape_cast %358 : vector<1x1x8x8x8xf32> to vector<8x8x8xf32>
    %360 = vector.extract_strided_slice %114 {offsets = [2, 3, 0], sizes = [1, 1, 8], strides = [1, 1, 1]} : vector<4x9x8xf32> to vector<1x1x8xf32>
    %361 = vector.shape_cast %360 : vector<1x1x8xf32> to vector<8xf32>
    %362 = vector.shape_cast %361 : vector<8xf32> to vector<1x1x8xf32>
    %363 = vector.broadcast %362 : vector<1x1x8xf32> to vector<8x8x8xf32>
    %364 = arith.mulf %359, %363 : vector<8x8x8xf32>
    %365 = arith.addf %357, %364 : vector<8x8x8xf32>
    %c0_268 = arith.constant 0 : index
    %c0_269 = arith.constant 0 : index
    %c2_270 = arith.constant 2 : index
    %c2_271 = arith.constant 2 : index
    %c0_272 = arith.constant 0 : index
    %366 = vector.load %arg17[%c0_268, %c0_269, %c2_270, %c2_271, %c0_272] : memref<2x2x12x12x8xf32, #tpu.memory_space<vmem>>, vector<1x1x8x8x8xf32>
    %367 = vector.shape_cast %366 : vector<1x1x8x8x8xf32> to vector<8x8x8xf32>
    %368 = vector.extract_strided_slice %114 {offsets = [2, 4, 0], sizes = [1, 1, 8], strides = [1, 1, 1]} : vector<4x9x8xf32> to vector<1x1x8xf32>
    %369 = vector.shape_cast %368 : vector<1x1x8xf32> to vector<8xf32>
    %370 = vector.shape_cast %369 : vector<8xf32> to vector<1x1x8xf32>
    %371 = vector.broadcast %370 : vector<1x1x8xf32> to vector<8x8x8xf32>
    %372 = arith.mulf %367, %371 : vector<8x8x8xf32>
    %373 = arith.addf %365, %372 : vector<8x8x8xf32>
    %c0_273 = arith.constant 0 : index
    %c1_274 = arith.constant 1 : index
    %c2_275 = arith.constant 2 : index
    %c3_276 = arith.constant 3 : index
    %c0_277 = arith.constant 0 : index
    %374 = vector.load %arg17[%c0_273, %c1_274, %c2_275, %c3_276, %c0_277] : memref<2x2x12x12x8xf32, #tpu.memory_space<vmem>>, vector<1x1x8x8x8xf32>
    %375 = vector.shape_cast %374 : vector<1x1x8x8x8xf32> to vector<8x8x8xf32>
    %376 = vector.extract_strided_slice %114 {offsets = [2, 5, 0], sizes = [1, 1, 8], strides = [1, 1, 1]} : vector<4x9x8xf32> to vector<1x1x8xf32>
    %377 = vector.shape_cast %376 : vector<1x1x8xf32> to vector<8xf32>
    %378 = vector.shape_cast %377 : vector<8xf32> to vector<1x1x8xf32>
    %379 = vector.broadcast %378 : vector<1x1x8xf32> to vector<8x8x8xf32>
    %380 = arith.mulf %375, %379 : vector<8x8x8xf32>
    %381 = arith.addf %373, %380 : vector<8x8x8xf32>
    %c1_278 = arith.constant 1 : index
    %c1_279 = arith.constant 1 : index
    %c3_280 = arith.constant 3 : index
    %c0_281 = arith.constant 0 : index
    %c0_282 = arith.constant 0 : index
    %382 = vector.load %arg17[%c1_278, %c1_279, %c3_280, %c0_281, %c0_282] : memref<2x2x12x12x8xf32, #tpu.memory_space<vmem>>, vector<1x1x8x8x8xf32>
    %383 = vector.shape_cast %382 : vector<1x1x8x8x8xf32> to vector<8x8x8xf32>
    %384 = vector.extract_strided_slice %114 {offsets = [2, 6, 0], sizes = [1, 1, 8], strides = [1, 1, 1]} : vector<4x9x8xf32> to vector<1x1x8xf32>
    %385 = vector.shape_cast %384 : vector<1x1x8xf32> to vector<8xf32>
    %386 = vector.shape_cast %385 : vector<8xf32> to vector<1x1x8xf32>
    %387 = vector.broadcast %386 : vector<1x1x8xf32> to vector<8x8x8xf32>
    %388 = arith.mulf %383, %387 : vector<8x8x8xf32>
    %389 = arith.addf %381, %388 : vector<8x8x8xf32>
    %c1_283 = arith.constant 1 : index
    %c0_284 = arith.constant 0 : index
    %c3_285 = arith.constant 3 : index
    %c2_286 = arith.constant 2 : index
    %c0_287 = arith.constant 0 : index
    %390 = vector.load %arg17[%c1_283, %c0_284, %c3_285, %c2_286, %c0_287] : memref<2x2x12x12x8xf32, #tpu.memory_space<vmem>>, vector<1x1x8x8x8xf32>
    %391 = vector.shape_cast %390 : vector<1x1x8x8x8xf32> to vector<8x8x8xf32>
    %392 = vector.extract_strided_slice %114 {offsets = [2, 7, 0], sizes = [1, 1, 8], strides = [1, 1, 1]} : vector<4x9x8xf32> to vector<1x1x8xf32>
    %393 = vector.shape_cast %392 : vector<1x1x8xf32> to vector<8xf32>
    %394 = vector.shape_cast %393 : vector<8xf32> to vector<1x1x8xf32>
    %395 = vector.broadcast %394 : vector<1x1x8xf32> to vector<8x8x8xf32>
    %396 = arith.mulf %391, %395 : vector<8x8x8xf32>
    %397 = arith.addf %389, %396 : vector<8x8x8xf32>
    %c1_288 = arith.constant 1 : index
    %c1_289 = arith.constant 1 : index
    %c3_290 = arith.constant 3 : index
    %c3_291 = arith.constant 3 : index
    %c0_292 = arith.constant 0 : index
    %398 = vector.load %arg17[%c1_288, %c1_289, %c3_290, %c3_291, %c0_292] : memref<2x2x12x12x8xf32, #tpu.memory_space<vmem>>, vector<1x1x8x8x8xf32>
    %399 = vector.shape_cast %398 : vector<1x1x8x8x8xf32> to vector<8x8x8xf32>
    %400 = vector.extract_strided_slice %114 {offsets = [2, 8, 0], sizes = [1, 1, 8], strides = [1, 1, 1]} : vector<4x9x8xf32> to vector<1x1x8xf32>
    %401 = vector.shape_cast %400 : vector<1x1x8xf32> to vector<8xf32>
    %402 = vector.shape_cast %401 : vector<8xf32> to vector<1x1x8xf32>
    %403 = vector.broadcast %402 : vector<1x1x8xf32> to vector<8x8x8xf32>
    %404 = arith.mulf %399, %403 : vector<8x8x8xf32>
    %405 = arith.addf %397, %404 : vector<8x8x8xf32>
    %406 = arith.addf %405, %300 : vector<8x8x8xf32>
    %407 = vector.shape_cast %406 : vector<8x8x8xf32> to vector<64x8xf32>
    %408 = vector.extract_strided_slice %116 {offsets = [0, 16], sizes = [1, 8], strides = [1, 1]} : vector<1x32xf32> to vector<1x8xf32>
    %409 = vector.broadcast %408 : vector<1x8xf32> to vector<64x8xf32>
    %410 = arith.mulf %407, %409 : vector<64x8xf32>
    %411 = vector.extract_strided_slice %117 {offsets = [0, 16], sizes = [1, 8], strides = [1, 1]} : vector<1x32xf32> to vector<1x8xf32>
    %412 = vector.broadcast %411 : vector<1x8xf32> to vector<64x8xf32>
    %413 = arith.addf %410, %412 : vector<64x8xf32>
    %cst_293 = arith.constant 0.000000e+00 : f32
    %414 = vector.broadcast %cst_293 : f32 to vector<64x8xf32>
    %415 = arith.cmpf oge, %413, %414 : vector<64x8xf32>
    %416 = vector.extract_strided_slice %118 {offsets = [0, 16], sizes = [1, 8], strides = [1, 1]} : vector<1x32xf32> to vector<1x8xf32>
    %417 = vector.broadcast %416 : vector<1x8xf32> to vector<64x8xf32>
    %418 = arith.mulf %417, %413 : vector<64x8xf32>
    %419 = arith.select %415, %413, %418 : vector<64x8xi1>, vector<64x8xf32>
    %420 = vector.extract_strided_slice %115 {offsets = [2, 0, 0], sizes = [1, 8, 8], strides = [1, 1, 1]} : vector<4x8x8xf32> to vector<1x8x8xf32>
    %421 = vector.shape_cast %420 : vector<1x8x8xf32> to vector<8x8xf32>
    %cst_294 = arith.constant dense<0.000000e+00> : vector<64x8xf32>
    %422 = tpu.matmul %419, %421, %cst_294 {dimension_numbers = #tpu.dot_dimension_numbers<[1], [0], [0], [1], [0, 0, 1, 1], [], []>} : vector<64x8xf32>, vector<8x8xf32>, vector<64x8xf32> -> vector<64x8xf32>
    %423 = vector.extract_strided_slice %119 {offsets = [0, 16], sizes = [1, 8], strides = [1, 1]} : vector<1x32xf32> to vector<1x8xf32>
    %424 = vector.broadcast %423 : vector<1x8xf32> to vector<64x8xf32>
    %425 = arith.mulf %422, %424 : vector<64x8xf32>
    %426 = vector.extract_strided_slice %120 {offsets = [0, 16], sizes = [1, 8], strides = [1, 1]} : vector<1x32xf32> to vector<1x8xf32>
    %427 = vector.broadcast %426 : vector<1x8xf32> to vector<64x8xf32>
    %428 = arith.addf %425, %427 : vector<64x8xf32>
    %cst_295 = arith.constant 0.000000e+00 : f32
    %429 = vector.broadcast %cst_295 : f32 to vector<64x8xf32>
    %430 = arith.cmpf oge, %428, %429 : vector<64x8xf32>
    %431 = vector.extract_strided_slice %121 {offsets = [0, 16], sizes = [1, 8], strides = [1, 1]} : vector<1x32xf32> to vector<1x8xf32>
    %432 = vector.broadcast %431 : vector<1x8xf32> to vector<64x8xf32>
    %433 = arith.mulf %432, %428 : vector<64x8xf32>
    %434 = arith.select %430, %428, %433 : vector<64x8xi1>, vector<64x8xf32>
    %435 = vector.shape_cast %434 : vector<64x8xf32> to vector<8x8x8xf32>
    %c0_296 = arith.constant 0 : index
    %c0_297 = arith.constant 0 : index
    %c0_298 = arith.constant 0 : index
    %c16 = arith.constant 16 : index
    %436 = vector.load %arg16[%c0_296, %c0_297, %c0_298, %c16] : memref<1x8x8x32xf32, #tpu.memory_space<vmem>>, vector<1x8x8x8xf32>
    %437 = vector.shape_cast %436 : vector<1x8x8x8xf32> to vector<8x8x8xf32>
    %438 = vector.shape_cast %435 : vector<8x8x8xf32> to vector<1x8x8x8xf32>
    tpu.vector_store %arg16[%c0_296, %c0_297, %c0_298, %c16], %438 {strides = array<i32>} : memref<1x8x8x32xf32, #tpu.memory_space<vmem>>, vector<1x8x8x8xf32>,
    %cst_299 = arith.constant 0.000000e+00 : f32
    %439 = vector.broadcast %cst_299 : f32 to vector<8x8x8xf32>
    %c0_300 = arith.constant 0 : index
    %c0_301 = arith.constant 0 : index
    %c0_302 = arith.constant 0 : index
    %c0_303 = arith.constant 0 : index
    %c0_304 = arith.constant 0 : index
    %440 = vector.load %arg17[%c0_300, %c0_301, %c0_302, %c0_303, %c0_304] : memref<2x2x12x12x8xf32, #tpu.memory_space<vmem>>, vector<1x1x8x8x8xf32>
    %441 = vector.shape_cast %440 : vector<1x1x8x8x8xf32> to vector<8x8x8xf32>
    %442 = vector.extract_strided_slice %114 {offsets = [3, 0, 0], sizes = [1, 1, 8], strides = [1, 1, 1]} : vector<4x9x8xf32> to vector<1x1x8xf32>
    %443 = vector.shape_cast %442 : vector<1x1x8xf32> to vector<8xf32>
    %444 = vector.shape_cast %443 : vector<8xf32> to vector<1x1x8xf32>
    %445 = vector.broadcast %444 : vector<1x1x8xf32> to vector<8x8x8xf32>
    %446 = arith.mulf %441, %445 : vector<8x8x8xf32>
    %447 = arith.addf %439, %446 : vector<8x8x8xf32>
    %c0_305 = arith.constant 0 : index
    %c0_306 = arith.constant 0 : index
    %c0_307 = arith.constant 0 : index
    %c2_308 = arith.constant 2 : index
    %c0_309 = arith.constant 0 : index
    %448 = vector.load %arg17[%c0_305, %c0_306, %c0_307, %c2_308, %c0_309] : memref<2x2x12x12x8xf32, #tpu.memory_space<vmem>>, vector<1x1x8x8x8xf32>
    %449 = vector.shape_cast %448 : vector<1x1x8x8x8xf32> to vector<8x8x8xf32>
    %450 = vector.extract_strided_slice %114 {offsets = [3, 1, 0], sizes = [1, 1, 8], strides = [1, 1, 1]} : vector<4x9x8xf32> to vector<1x1x8xf32>
    %451 = vector.shape_cast %450 : vector<1x1x8xf32> to vector<8xf32>
    %452 = vector.shape_cast %451 : vector<8xf32> to vector<1x1x8xf32>
    %453 = vector.broadcast %452 : vector<1x1x8xf32> to vector<8x8x8xf32>
    %454 = arith.mulf %449, %453 : vector<8x8x8xf32>
    %455 = arith.addf %447, %454 : vector<8x8x8xf32>
    %c0_310 = arith.constant 0 : index
    %c0_311 = arith.constant 0 : index
    %c0_312 = arith.constant 0 : index
    %c4 = arith.constant 4 : index
    %c0_313 = arith.constant 0 : index
    %456 = vector.load %arg17[%c0_310, %c0_311, %c0_312, %c4, %c0_313] : memref<2x2x12x12x8xf32, #tpu.memory_space<vmem>>, vector<1x1x8x8x8xf32>
    %457 = vector.shape_cast %456 : vector<1x1x8x8x8xf32> to vector<8x8x8xf32>
    %458 = vector.extract_strided_slice %114 {offsets = [3, 2, 0], sizes = [1, 1, 8], strides = [1, 1, 1]} : vector<4x9x8xf32> to vector<1x1x8xf32>
    %459 = vector.shape_cast %458 : vector<1x1x8xf32> to vector<8xf32>
    %460 = vector.shape_cast %459 : vector<8xf32> to vector<1x1x8xf32>
    %461 = vector.broadcast %460 : vector<1x1x8xf32> to vector<8x8x8xf32>
    %462 = arith.mulf %457, %461 : vector<8x8x8xf32>
    %463 = arith.addf %455, %462 : vector<8x8x8xf32>
    %c0_314 = arith.constant 0 : index
    %c0_315 = arith.constant 0 : index
    %c2_316 = arith.constant 2 : index
    %c0_317 = arith.constant 0 : index
    %c0_318 = arith.constant 0 : index
    %464 = vector.load %arg17[%c0_314, %c0_315, %c2_316, %c0_317, %c0_318] : memref<2x2x12x12x8xf32, #tpu.memory_space<vmem>>, vector<1x1x8x8x8xf32>
    %465 = vector.shape_cast %464 : vector<1x1x8x8x8xf32> to vector<8x8x8xf32>
    %466 = vector.extract_strided_slice %114 {offsets = [3, 3, 0], sizes = [1, 1, 8], strides = [1, 1, 1]} : vector<4x9x8xf32> to vector<1x1x8xf32>
    %467 = vector.shape_cast %466 : vector<1x1x8xf32> to vector<8xf32>
    %468 = vector.shape_cast %467 : vector<8xf32> to vector<1x1x8xf32>
    %469 = vector.broadcast %468 : vector<1x1x8xf32> to vector<8x8x8xf32>
    %470 = arith.mulf %465, %469 : vector<8x8x8xf32>
    %471 = arith.addf %463, %470 : vector<8x8x8xf32>
    %c0_319 = arith.constant 0 : index
    %c0_320 = arith.constant 0 : index
    %c2_321 = arith.constant 2 : index
    %c2_322 = arith.constant 2 : index
    %c0_323 = arith.constant 0 : index
    %472 = vector.load %arg17[%c0_319, %c0_320, %c2_321, %c2_322, %c0_323] : memref<2x2x12x12x8xf32, #tpu.memory_space<vmem>>, vector<1x1x8x8x8xf32>
    %473 = vector.shape_cast %472 : vector<1x1x8x8x8xf32> to vector<8x8x8xf32>
    %474 = vector.extract_strided_slice %114 {offsets = [3, 4, 0], sizes = [1, 1, 8], strides = [1, 1, 1]} : vector<4x9x8xf32> to vector<1x1x8xf32>
    %475 = vector.shape_cast %474 : vector<1x1x8xf32> to vector<8xf32>
    %476 = vector.shape_cast %475 : vector<8xf32> to vector<1x1x8xf32>
    %477 = vector.broadcast %476 : vector<1x1x8xf32> to vector<8x8x8xf32>
    %478 = arith.mulf %473, %477 : vector<8x8x8xf32>
    %479 = arith.addf %471, %478 : vector<8x8x8xf32>
    %c0_324 = arith.constant 0 : index
    %c0_325 = arith.constant 0 : index
    %c2_326 = arith.constant 2 : index
    %c4_327 = arith.constant 4 : index
    %c0_328 = arith.constant 0 : index
    %480 = vector.load %arg17[%c0_324, %c0_325, %c2_326, %c4_327, %c0_328] : memref<2x2x12x12x8xf32, #tpu.memory_space<vmem>>, vector<1x1x8x8x8xf32>
    %481 = vector.shape_cast %480 : vector<1x1x8x8x8xf32> to vector<8x8x8xf32>
    %482 = vector.extract_strided_slice %114 {offsets = [3, 5, 0], sizes = [1, 1, 8], strides = [1, 1, 1]} : vector<4x9x8xf32> to vector<1x1x8xf32>
    %483 = vector.shape_cast %482 : vector<1x1x8xf32> to vector<8xf32>
    %484 = vector.shape_cast %483 : vector<8xf32> to vector<1x1x8xf32>
    %485 = vector.broadcast %484 : vector<1x1x8xf32> to vector<8x8x8xf32>
    %486 = arith.mulf %481, %485 : vector<8x8x8xf32>
    %487 = arith.addf %479, %486 : vector<8x8x8xf32>
    %c0_329 = arith.constant 0 : index
    %c0_330 = arith.constant 0 : index
    %c4_331 = arith.constant 4 : index
    %c0_332 = arith.constant 0 : index
    %c0_333 = arith.constant 0 : index
    %488 = vector.load %arg17[%c0_329, %c0_330, %c4_331, %c0_332, %c0_333] : memref<2x2x12x12x8xf32, #tpu.memory_space<vmem>>, vector<1x1x8x8x8xf32>
    %489 = vector.shape_cast %488 : vector<1x1x8x8x8xf32> to vector<8x8x8xf32>
    %490 = vector.extract_strided_slice %114 {offsets = [3, 6, 0], sizes = [1, 1, 8], strides = [1, 1, 1]} : vector<4x9x8xf32> to vector<1x1x8xf32>
    %491 = vector.shape_cast %490 : vector<1x1x8xf32> to vector<8xf32>
    %492 = vector.shape_cast %491 : vector<8xf32> to vector<1x1x8xf32>
    %493 = vector.broadcast %492 : vector<1x1x8xf32> to vector<8x8x8xf32>
    %494 = arith.mulf %489, %493 : vector<8x8x8xf32>
    %495 = arith.addf %487, %494 : vector<8x8x8xf32>
    %c0_334 = arith.constant 0 : index
    %c0_335 = arith.constant 0 : index
    %c4_336 = arith.constant 4 : index
    %c2_337 = arith.constant 2 : index
    %c0_338 = arith.constant 0 : index
    %496 = vector.load %arg17[%c0_334, %c0_335, %c4_336, %c2_337, %c0_338] : memref<2x2x12x12x8xf32, #tpu.memory_space<vmem>>, vector<1x1x8x8x8xf32>
    %497 = vector.shape_cast %496 : vector<1x1x8x8x8xf32> to vector<8x8x8xf32>
    %498 = vector.extract_strided_slice %114 {offsets = [3, 7, 0], sizes = [1, 1, 8], strides = [1, 1, 1]} : vector<4x9x8xf32> to vector<1x1x8xf32>
    %499 = vector.shape_cast %498 : vector<1x1x8xf32> to vector<8xf32>
    %500 = vector.shape_cast %499 : vector<8xf32> to vector<1x1x8xf32>
    %501 = vector.broadcast %500 : vector<1x1x8xf32> to vector<8x8x8xf32>
    %502 = arith.mulf %497, %501 : vector<8x8x8xf32>
    %503 = arith.addf %495, %502 : vector<8x8x8xf32>
    %c0_339 = arith.constant 0 : index
    %c0_340 = arith.constant 0 : index
    %c4_341 = arith.constant 4 : index
    %c4_342 = arith.constant 4 : index
    %c0_343 = arith.constant 0 : index
    %504 = vector.load %arg17[%c0_339, %c0_340, %c4_341, %c4_342, %c0_343] : memref<2x2x12x12x8xf32, #tpu.memory_space<vmem>>, vector<1x1x8x8x8xf32>
    %505 = vector.shape_cast %504 : vector<1x1x8x8x8xf32> to vector<8x8x8xf32>
    %506 = vector.extract_strided_slice %114 {offsets = [3, 8, 0], sizes = [1, 1, 8], strides = [1, 1, 1]} : vector<4x9x8xf32> to vector<1x1x8xf32>
    %507 = vector.shape_cast %506 : vector<1x1x8xf32> to vector<8xf32>
    %508 = vector.shape_cast %507 : vector<8xf32> to vector<1x1x8xf32>
    %509 = vector.broadcast %508 : vector<1x1x8xf32> to vector<8x8x8xf32>
    %510 = arith.mulf %505, %509 : vector<8x8x8xf32>
    %511 = arith.addf %503, %510 : vector<8x8x8xf32>
    %512 = arith.addf %511, %406 : vector<8x8x8xf32>
    %513 = vector.shape_cast %512 : vector<8x8x8xf32> to vector<64x8xf32>
    %514 = vector.extract_strided_slice %116 {offsets = [0, 24], sizes = [1, 8], strides = [1, 1]} : vector<1x32xf32> to vector<1x8xf32>
    %515 = vector.broadcast %514 : vector<1x8xf32> to vector<64x8xf32>
    %516 = arith.mulf %513, %515 : vector<64x8xf32>
    %517 = vector.extract_strided_slice %117 {offsets = [0, 24], sizes = [1, 8], strides = [1, 1]} : vector<1x32xf32> to vector<1x8xf32>
    %518 = vector.broadcast %517 : vector<1x8xf32> to vector<64x8xf32>
    %519 = arith.addf %516, %518 : vector<64x8xf32>
    %cst_344 = arith.constant 0.000000e+00 : f32
    %520 = vector.broadcast %cst_344 : f32 to vector<64x8xf32>
    %521 = arith.cmpf oge, %519, %520 : vector<64x8xf32>
    %522 = vector.extract_strided_slice %118 {offsets = [0, 24], sizes = [1, 8], strides = [1, 1]} : vector<1x32xf32> to vector<1x8xf32>
    %523 = vector.broadcast %522 : vector<1x8xf32> to vector<64x8xf32>
    %524 = arith.mulf %523, %519 : vector<64x8xf32>
    %525 = arith.select %521, %519, %524 : vector<64x8xi1>, vector<64x8xf32>
    %526 = vector.extract_strided_slice %115 {offsets = [3, 0, 0], sizes = [1, 8, 8], strides = [1, 1, 1]} : vector<4x8x8xf32> to vector<1x8x8xf32>
    %527 = vector.shape_cast %526 : vector<1x8x8xf32> to vector<8x8xf32>
    %cst_345 = arith.constant dense<0.000000e+00> : vector<64x8xf32>
    %528 = tpu.matmul %525, %527, %cst_345 {dimension_numbers = #tpu.dot_dimension_numbers<[1], [0], [0], [1], [0, 0, 1, 1], [], []>} : vector<64x8xf32>, vector<8x8xf32>, vector<64x8xf32> -> vector<64x8xf32>
    %529 = vector.extract_strided_slice %119 {offsets = [0, 24], sizes = [1, 8], strides = [1, 1]} : vector<1x32xf32> to vector<1x8xf32>
    %530 = vector.broadcast %529 : vector<1x8xf32> to vector<64x8xf32>
    %531 = arith.mulf %528, %530 : vector<64x8xf32>
    %532 = vector.extract_strided_slice %120 {offsets = [0, 24], sizes = [1, 8], strides = [1, 1]} : vector<1x32xf32> to vector<1x8xf32>
    %533 = vector.broadcast %532 : vector<1x8xf32> to vector<64x8xf32>
    %534 = arith.addf %531, %533 : vector<64x8xf32>
    %cst_346 = arith.constant 0.000000e+00 : f32
    %535 = vector.broadcast %cst_346 : f32 to vector<64x8xf32>
    %536 = arith.cmpf oge, %534, %535 : vector<64x8xf32>
    %537 = vector.extract_strided_slice %121 {offsets = [0, 24], sizes = [1, 8], strides = [1, 1]} : vector<1x32xf32> to vector<1x8xf32>
    %538 = vector.broadcast %537 : vector<1x8xf32> to vector<64x8xf32>
    %539 = arith.mulf %538, %534 : vector<64x8xf32>
    %540 = arith.select %536, %534, %539 : vector<64x8xi1>, vector<64x8xf32>
    %541 = vector.shape_cast %540 : vector<64x8xf32> to vector<8x8x8xf32>
    %c0_347 = arith.constant 0 : index
    %c0_348 = arith.constant 0 : index
    %c0_349 = arith.constant 0 : index
    %c24 = arith.constant 24 : index
    %542 = vector.load %arg16[%c0_347, %c0_348, %c0_349, %c24] : memref<1x8x8x32xf32, #tpu.memory_space<vmem>>, vector<1x8x8x8xf32>
    %543 = vector.shape_cast %542 : vector<1x8x8x8xf32> to vector<8x8x8xf32>
    %544 = vector.shape_cast %541 : vector<8x8x8xf32> to vector<1x8x8x8xf32>
    tpu.vector_store %arg16[%c0_347, %c0_348, %c0_349, %c24], %544 {strides = array<i32>} : memref<1x8x8x32xf32, #tpu.memory_space<vmem>>, vector<1x8x8x8xf32>,
    return
  }
  func.func @transform_0(%arg0: i32) -> (i32, i32, i32, i32, i32, i32) {
    %c0_i32 = arith.constant 0 : i32
    %c0_i32_0 = arith.constant 0 : i32
    %c0_i32_1 = arith.constant 0 : i32
    %c0_i32_2 = arith.constant 0 : i32
    %c0_i32_3 = arith.constant 0 : i32
    %c0_i32_4 = arith.constant 0 : i32
    return %arg0, %c0_i32, %c0_i32_0, %c0_i32_1, %c0_i32_2, %c0_i32_3 : i32, i32, i32, i32, i32, i32
  }
  func.func @transform_1(%arg0: i32) -> (i32, i32) {
    %c0_i32 = arith.constant 0 : i32
    %c0_i32_0 = arith.constant 0 : i32
    %c0_i32_1 = arith.constant 0 : i32
    return %c0_i32, %c0_i32_0 : i32, i32
  }
  func.func @transform_2(%arg0: i32) -> (i32, i32) {
    %c0_i32 = arith.constant 0 : i32
    %c0_i32_0 = arith.constant 0 : i32
    %c0_i32_1 = arith.constant 0 : i32
    return %c0_i32, %c0_i32_0 : i32, i32
  }
  func.func @transform_3(%arg0: i32) -> (i32, i32) {
    %c0_i32 = arith.constant 0 : i32
    %c0_i32_0 = arith.constant 0 : i32
    %c0_i32_1 = arith.constant 0 : i32
    return %c0_i32, %c0_i32_0 : i32, i32
  }
  func.func @transform_4(%arg0: i32) -> (i32, i32) {
    %c0_i32 = arith.constant 0 : i32
    %c0_i32_0 = arith.constant 0 : i32
    %c0_i32_1 = arith.constant 0 : i32
    return %c0_i32, %c0_i32_0 : i32, i32
  }
  func.func @transform_5(%arg0: i32) -> (i32, i32, i32) {
    %c0_i32 = arith.constant 0 : i32
    %c0_i32_0 = arith.constant 0 : i32
    %c0_i32_1 = arith.constant 0 : i32
    %c0_i32_2 = arith.constant 0 : i32
    return %c0_i32, %c0_i32_0, %c0_i32_1 : i32, i32, i32
  }
  func.func @transform_6(%arg0: i32) -> (i32, i32) {
    %c0_i32 = arith.constant 0 : i32
    %c0_i32_0 = arith.constant 0 : i32
    %c0_i32_1 = arith.constant 0 : i32
    return %c0_i32, %c0_i32_0 : i32, i32
  }
  func.func @transform_7(%arg0: i32) -> (i32, i32) {
    %c0_i32 = arith.constant 0 : i32
    %c0_i32_0 = arith.constant 0 : i32
    %c0_i32_1 = arith.constant 0 : i32
    return %c0_i32, %c0_i32_0 : i32, i32
  }
  func.func @transform_8(%arg0: i32) -> (i32, i32) {
    %c0_i32 = arith.constant 0 : i32
    %c0_i32_0 = arith.constant 0 : i32
    %c0_i32_1 = arith.constant 0 : i32
    return %c0_i32, %c0_i32_0 : i32, i32
  }
  func.func @transform_9(%arg0: i32) -> (i32, i32, i32) {
    %c0_i32 = arith.constant 0 : i32
    %c0_i32_0 = arith.constant 0 : i32
    %c0_i32_1 = arith.constant 0 : i32
    %c0_i32_2 = arith.constant 0 : i32
    return %c0_i32, %c0_i32_0, %c0_i32_1 : i32, i32, i32
  }
  func.func @transform_10(%arg0: i32) -> (i32, i32) {
    %c0_i32 = arith.constant 0 : i32
    %c0_i32_0 = arith.constant 0 : i32
    %c0_i32_1 = arith.constant 0 : i32
    return %c0_i32, %c0_i32_0 : i32, i32
  }
  func.func @transform_11(%arg0: i32) -> (i32, i32) {
    %c0_i32 = arith.constant 0 : i32
    %c0_i32_0 = arith.constant 0 : i32
    %c0_i32_1 = arith.constant 0 : i32
    return %c0_i32, %c0_i32_0 : i32, i32
  }
  func.func @transform_12(%arg0: i32) -> (i32, i32) {
    %c0_i32 = arith.constant 0 : i32
    %c0_i32_0 = arith.constant 0 : i32
    %c0_i32_1 = arith.constant 0 : i32
    return %c0_i32, %c0_i32_0 : i32, i32
  }
  func.func @transform_13(%arg0: i32) -> (i32, i32) {
    %c0_i32 = arith.constant 0 : i32
    %c0_i32_0 = arith.constant 0 : i32
    %c0_i32_1 = arith.constant 0 : i32
    return %c0_i32, %c0_i32_0 : i32, i32
  }
  func.func @transform_14(%arg0: i32) -> (i32, i32, i32, i32) {
    %c0_i32 = arith.constant 0 : i32
    %c0_i32_0 = arith.constant 0 : i32
    %c0_i32_1 = arith.constant 0 : i32
    %c0_i32_2 = arith.constant 0 : i32
    return %arg0, %c0_i32, %c0_i32_0, %c0_i32_1 : i32, i32, i32, i32
  }
  func.func @transform_15(%arg0: i32) -> (i32, i32, i32, i32) {
    %c0_i32 = arith.constant 0 : i32
    %c0_i32_0 = arith.constant 0 : i32
    %c0_i32_1 = arith.constant 0 : i32
    %c0_i32_2 = arith.constant 0 : i32
    return %arg0, %c0_i32, %c0_i32_0, %c0_i32_1 : i32, i32, i32, i32
  }
}

</mosaic_0001>

<llo_original>
// kernel: downsampler_forward.1
$region0: #{downsampler_forward.1}
  #allocation0 [shape = 'u32[]', space=smem, size = 0x4, offset = 0x4, fixed_abs, tag = 'smem constant byte address 0x4 - core index']
  #allocation1 [shape = 'u32[144,128]{1,0:T(1,128)}', space=vmem, size = 0x12000, scoped, tag = 'internal scratch']
  #allocation2 [shape = 'f32[2,2,12,12,8]{4,3,2,1,0:T(8,128)}', space=vmem, size = 0x60000, scoped, tag = 'scratch operand']
  %s0 = inlined_call_operand.vmem [shape: f32[2,2,2,9,9,16], index: 0, kind: input, shape index: {}]
  %s1 = inlined_call_operand.vmem [shape: f32[16,8], index: 1, kind: input, shape index: {}]
  %s2 = inlined_call_operand.vmem [shape: f32[1,8], index: 2, kind: input, shape index: {}]
  %s3 = inlined_call_operand.vmem [shape: f32[1,8], index: 3, kind: input, shape index: {}]
  %s4 = inlined_call_operand.vmem [shape: f32[1,8], index: 4, kind: input, shape index: {}]
  %s5 = inlined_call_operand.vmem [shape: f32[4,9,8], index: 5, kind: input, shape index: {}]
  %s6 = inlined_call_operand.vmem [shape: f32[1,32], index: 6, kind: input, shape index: {}]
  %s7 = inlined_call_operand.vmem [shape: f32[1,32], index: 7, kind: input, shape index: {}]
  %s8 = inlined_call_operand.vmem [shape: f32[1,32], index: 8, kind: input, shape index: {}]
  %s9 = inlined_call_operand.vmem [shape: f32[4,8,8], index: 9, kind: input, shape index: {}]
  %s10 = inlined_call_operand.vmem [shape: f32[1,32], index: 10, kind: input, shape index: {}]
  %s11 = inlined_call_operand.vmem [shape: f32[1,32], index: 11, kind: input, shape index: {}]
  %s12 = inlined_call_operand.vmem [shape: f32[1,16], index: 12, kind: input, shape index: {}]
  %s13 = inlined_call_operand.vmem [shape: f32[1,32], index: 13, kind: input, shape index: {}]
  %s14 = inlined_call_operand.vmem [shape: f32[2,8,8,16], index: 14, kind: output, shape index: {0}]
  %s15 = inlined_call_operand.vmem [shape: f32[2,8,8,32], index: 15, kind: output, shape index: {1}]
  %16 = xla_tuple %s14, %s15
  %s17 = sld [smem:[#allocation0]]
  $region97: #{downsampler_forward.1} parent=0
    _
  %s19 = ssub.s32 1, %s17
  %s20 = scalar_select 0, %s19, %s17
  loop: start=0, step=1, limit=4
  $region2: #{downsampler_forward.1} parent=0 // loop_pre_header
    _
  $region3: #{downsampler_forward.1} parent=0 // loop_header
    %s22 = sphi 0, %s26
    %p23 = scmp.ge.s32.totalorder %s22, 4
    %s32 = sphi 0, %s34
    %s35 = sphi 0, %s32
    %s36 = sphi 0, %s35
    %s52 = sphi 0, %s36
    %s56 = sphi 0, %s56
    %s58 = sphi 0, %s56
    %s59 = sphi 0, %s58
    %s73 = sphi 0, %s59
    %s77 = sphi 0, %s77
    %s79 = sphi 0, %s77
    %s80 = sphi 0, %s79
    %s94 = sphi 0, %s80
    %s98 = sphi 0, %s98
    %s100 = sphi 0, %s98
    %s101 = sphi 0, %s100
    %s115 = sphi 0, %s101
    %s119 = sphi 0, %s119
    %s121 = sphi 0, %s119
    %s122 = sphi 0, %s121
    %s136 = sphi 0, %s122
    %s140 = sphi 0, %s140
    %s142 = sphi 0, %s140
    %s143 = sphi 0, %s142
    %s157 = sphi 0, %s143
    %s161 = sphi 0, %s161
    %s163 = sphi 0, %s161
    %s164 = sphi 0, %s163
    %s178 = sphi 0, %s164
    %s182 = sphi 0, %s182
    %s184 = sphi 0, %s182
    %s185 = sphi 0, %s184
    %s199 = sphi 0, %s185
    %s203 = sphi 0, %s203
    %s205 = sphi 0, %s203
    %s206 = sphi 0, %s205
    %s220 = sphi 0, %s206
    %s224 = sphi 0, %s224
    %s226 = sphi 0, %s224
    %s227 = sphi 0, %s226
    %s241 = sphi 0, %s227
    %s245 = sphi 0, %s245
    %s247 = sphi 0, %s245
    %s248 = sphi 0, %s247
    %s262 = sphi 0, %s248
    %s266 = sphi 0, %s266
    %s268 = sphi 0, %s266
    %s269 = sphi 0, %s268
    %s283 = sphi 0, %s269
    %s287 = sphi 0, %s287
    %s289 = sphi 0, %s287
    %s290 = sphi 0, %s289
    %s304 = sphi 0, %s290
    %s308 = sphi 0, %s308
    %s310 = sphi 0, %s308
    %s311 = sphi 0, %s310
    %s325 = sphi 0, %s311
    %s331 = sphi 0, %s333
    %s334 = sphi 0, %s331
    %s335 = sphi 0, %s334
    %s351 = sphi 0, %s335
    %s357 = sphi 0, %s359
    %s360 = sphi 0, %s357
    %s361 = sphi 0, %s360
    %s377 = sphi 0, %s361
  $region4: #{downsampler_forward.1} parent=0 // loop_header_branch
    %25 = sbr.rel (%p23) target = $region8
  $region5: #{downsampler_forward.1} parent=0 // loop_body
    %s27 = ssub.s32 %s22, 1
    %s28 = ssub.s32 %s22, 2
    %s29 = sadd.s32 %s22, 1
    %s30 = ssub.s32 %s22, %s29
    %p31 = scmp.eq.s32.totalorder %s30, 0
    %s33 = sadd.s32 %s32, 1
    %s34 = scalar_select %p31, %s32, %s33
    %p37 = pneg %p31
    %p38 = scmp.eq.s32.totalorder %s22, 1
    %p39 = por %p37, %p38
    %p40 = scmp.ne.s32.totalorder %s32, %s35
    %p41 = scmp.eq.s32.totalorder %s22, 0
    %p42 = por %p40, %p41
    %p43 = scmp.ne.s32.totalorder %s32, %s35
    %p44 = scmp.eq.s32.totalorder %s27, 1
    %p45 = por %p43, %p44
    %p46 = scmp.ne.s32.totalorder %s35, %s36
    %p47 = scmp.eq.s32.totalorder %s27, 0
    %p48 = por %p46, %p47
    %p49 = scmp.ne.s32.totalorder %s35, %s36
    %p50 = scmp.eq.s32.totalorder %s28, 1
    %p51 = por %p49, %p50
    %p53 = scmp.ne.s32.totalorder %s36, %s52
    %p54 = scmp.eq.s32.totalorder %s28, 0
    %p55 = por %p53, %p54
    %s57 = sadd.s32 %s56, 1
    %p60 = scmp.eq.s32.totalorder %s22, 1
    %p61 = scmp.ne.s32.totalorder %s56, %s58
    %p62 = scmp.eq.s32.totalorder %s22, 0
    %p63 = por %p61, %p62
    %p64 = scmp.ne.s32.totalorder %s56, %s58
    %p65 = scmp.eq.s32.totalorder %s27, 1
    %p66 = por %p64, %p65
    %p67 = scmp.ne.s32.totalorder %s58, %s59
    %p68 = scmp.eq.s32.totalorder %s27, 0
    %p69 = por %p67, %p68
    %p70 = scmp.ne.s32.totalorder %s58, %s59
    %p71 = scmp.eq.s32.totalorder %s28, 1
    %p72 = por %p70, %p71
    %p74 = scmp.ne.s32.totalorder %s59, %s73
    %p75 = scmp.eq.s32.totalorder %s28, 0
    %p76 = por %p74, %p75
    %s78 = sadd.s32 %s77, 1
    %p81 = scmp.eq.s32.totalorder %s22, 1
    %p82 = scmp.ne.s32.totalorder %s77, %s79
    %p83 = scmp.eq.s32.totalorder %s22, 0
    %p84 = por %p82, %p83
    %p85 = scmp.ne.s32.totalorder %s77, %s79
    %p86 = scmp.eq.s32.totalorder %s27, 1
    %p87 = por %p85, %p86
    %p88 = scmp.ne.s32.totalorder %s79, %s80
    %p89 = scmp.eq.s32.totalorder %s27, 0
    %p90 = por %p88, %p89
    %p91 = scmp.ne.s32.totalorder %s79, %s80
    %p92 = scmp.eq.s32.totalorder %s28, 1
    %p93 = por %p91, %p92
    %p95 = scmp.ne.s32.totalorder %s80, %s94
    %p96 = scmp.eq.s32.totalorder %s28, 0
    %p97 = por %p95, %p96
    %s99 = sadd.s32 %s98, 1
    %p102 = scmp.eq.s32.totalorder %s22, 1
    %p103 = scmp.ne.s32.totalorder %s98, %s100
    %p104 = scmp.eq.s32.totalorder %s22, 0
    %p105 = por %p103, %p104
    %p106 = scmp.ne.s32.totalorder %s98, %s100
    %p107 = scmp.eq.s32.totalorder %s27, 1
    %p108 = por %p106, %p107
    %p109 = scmp.ne.s32.totalorder %s100, %s101
    %p110 = scmp.eq.s32.totalorder %s27, 0
    %p111 = por %p109, %p110
    %p112 = scmp.ne.s32.totalorder %s100, %s101
    %p113 = scmp.eq.s32.totalorder %s28, 1
    %p114 = por %p112, %p113
    %p116 = scmp.ne.s32.totalorder %s101, %s115
    %p117 = scmp.eq.s32.totalorder %s28, 0
    %p118 = por %p116, %p117
    %s120 = sadd.s32 %s119, 1
    %p123 = scmp.eq.s32.totalorder %s22, 1
    %p124 = scmp.ne.s32.totalorder %s119, %s121
    %p125 = scmp.eq.s32.totalorder %s22, 0
    %p126 = por %p124, %p125
    %p127 = scmp.ne.s32.totalorder %s119, %s121
    %p128 = scmp.eq.s32.totalorder %s27, 1
    %p129 = por %p127, %p128
    %p130 = scmp.ne.s32.totalorder %s121, %s122
    %p131 = scmp.eq.s32.totalorder %s27, 0
    %p132 = por %p130, %p131
    %p133 = scmp.ne.s32.totalorder %s121, %s122
    %p134 = scmp.eq.s32.totalorder %s28, 1
    %p135 = por %p133, %p134
    %p137 = scmp.ne.s32.totalorder %s122, %s136
    %p138 = scmp.eq.s32.totalorder %s28, 0
    %p139 = por %p137, %p138
    %s141 = sadd.s32 %s140, 1
    %p144 = scmp.eq.s32.totalorder %s22, 1
    %p145 = scmp.ne.s32.totalorder %s140, %s142
    %p146 = scmp.eq.s32.totalorder %s22, 0
    %p147 = por %p145, %p146
    %p148 = scmp.ne.s32.totalorder %s140, %s142
    %p149 = scmp.eq.s32.totalorder %s27, 1
    %p150 = por %p148, %p149
    %p151 = scmp.ne.s32.totalorder %s142, %s143
    %p152 = scmp.eq.s32.totalorder %s27, 0
    %p153 = por %p151, %p152
    %p154 = scmp.ne.s32.totalorder %s142, %s143
    %p155 = scmp.eq.s32.totalorder %s28, 1
    %p156 = por %p154, %p155
    %p158 = scmp.ne.s32.totalorder %s143, %s157
    %p159 = scmp.eq.s32.totalorder %s28, 0
    %p160 = por %p158, %p159
    %s162 = sadd.s32 %s161, 1
    %p165 = scmp.eq.s32.totalorder %s22, 1
    %p166 = scmp.ne.s32.totalorder %s161, %s163
    %p167 = scmp.eq.s32.totalorder %s22, 0
    %p168 = por %p166, %p167
    %p169 = scmp.ne.s32.totalorder %s161, %s163
    %p170 = scmp.eq.s32.totalorder %s27, 1
    %p171 = por %p169, %p170
    %p172 = scmp.ne.s32.totalorder %s163, %s164
    %p173 = scmp.eq.s32.totalorder %s27, 0
    %p174 = por %p172, %p173
    %p175 = scmp.ne.s32.totalorder %s163, %s164
    %p176 = scmp.eq.s32.totalorder %s28, 1
    %p177 = por %p175, %p176
    %p179 = scmp.ne.s32.totalorder %s164, %s178
    %p180 = scmp.eq.s32.totalorder %s28, 0
    %p181 = por %p179, %p180
    %s183 = sadd.s32 %s182, 1
    %p186 = scmp.eq.s32.totalorder %s22, 1
    %p187 = scmp.ne.s32.totalorder %s182, %s184
    %p188 = scmp.eq.s32.totalorder %s22, 0
    %p189 = por %p187, %p188
    %p190 = scmp.ne.s32.totalorder %s182, %s184
    %p191 = scmp.eq.s32.totalorder %s27, 1
    %p192 = por %p190, %p191
    %p193 = scmp.ne.s32.totalorder %s184, %s185
    %p194 = scmp.eq.s32.totalorder %s27, 0
    %p195 = por %p193, %p194
    %p196 = scmp.ne.s32.totalorder %s184, %s185
    %p197 = scmp.eq.s32.totalorder %s28, 1
    %p198 = por %p196, %p197
    %p200 = scmp.ne.s32.totalorder %s185, %s199
    %p201 = scmp.eq.s32.totalorder %s28, 0
    %p202 = por %p200, %p201
    %s204 = sadd.s32 %s203, 1
    %p207 = scmp.eq.s32.totalorder %s22, 1
    %p208 = scmp.ne.s32.totalorder %s203, %s205
    %p209 = scmp.eq.s32.totalorder %s22, 0
    %p210 = por %p208, %p209
    %p211 = scmp.ne.s32.totalorder %s203, %s205
    %p212 = scmp.eq.s32.totalorder %s27, 1
    %p213 = por %p211, %p212
    %p214 = scmp.ne.s32.totalorder %s205, %s206
    %p215 = scmp.eq.s32.totalorder %s27, 0
    %p216 = por %p214, %p215
    %p217 = scmp.ne.s32.totalorder %s205, %s206
    %p218 = scmp.eq.s32.totalorder %s28, 1
    %p219 = por %p217, %p218
    %p221 = scmp.ne.s32.totalorder %s206, %s220
    %p222 = scmp.eq.s32.totalorder %s28, 0
    %p223 = por %p221, %p222
    %s225 = sadd.s32 %s224, 1
    %p228 = scmp.eq.s32.totalorder %s22, 1
    %p229 = scmp.ne.s32.totalorder %s224, %s226
    %p230 = scmp.eq.s32.totalorder %s22, 0
    %p231 = por %p229, %p230
    %p232 = scmp.ne.s32.totalorder %s224, %s226
    %p233 = scmp.eq.s32.totalorder %s27, 1
    %p234 = por %p232, %p233
    %p235 = scmp.ne.s32.totalorder %s226, %s227
    %p236 = scmp.eq.s32.totalorder %s27, 0
    %p237 = por %p235, %p236
    %p238 = scmp.ne.s32.totalorder %s226, %s227
    %p239 = scmp.eq.s32.totalorder %s28, 1
    %p240 = por %p238, %p239
    %p242 = scmp.ne.s32.totalorder %s227, %s241
    %p243 = scmp.eq.s32.totalorder %s28, 0
    %p244 = por %p242, %p243
    %s246 = sadd.s32 %s245, 1
    %p249 = scmp.eq.s32.totalorder %s22, 1
    %p250 = scmp.ne.s32.totalorder %s245, %s247
    %p251 = scmp.eq.s32.totalorder %s22, 0
    %p252 = por %p250, %p251
    %p253 = scmp.ne.s32.totalorder %s245, %s247
    %p254 = scmp.eq.s32.totalorder %s27, 1
    %p255 = por %p253, %p254
    %p256 = scmp.ne.s32.totalorder %s247, %s248
    %p257 = scmp.eq.s32.totalorder %s27, 0
    %p258 = por %p256, %p257
    %p259 = scmp.ne.s32.totalorder %s247, %s248
    %p260 = scmp.eq.s32.totalorder %s28, 1
    %p261 = por %p259, %p260
    %p263 = scmp.ne.s32.totalorder %s248, %s262
    %p264 = scmp.eq.s32.totalorder %s28, 0
    %p265 = por %p263, %p264
    %s267 = sadd.s32 %s266, 1
    %p270 = scmp.eq.s32.totalorder %s22, 1
    %p271 = scmp.ne.s32.totalorder %s266, %s268
    %p272 = scmp.eq.s32.totalorder %s22, 0
    %p273 = por %p271, %p272
    %p274 = scmp.ne.s32.totalorder %s266, %s268
    %p275 = scmp.eq.s32.totalorder %s27, 1
    %p276 = por %p274, %p275
    %p277 = scmp.ne.s32.totalorder %s268, %s269
    %p278 = scmp.eq.s32.totalorder %s27, 0
    %p279 = por %p277, %p278
    %p280 = scmp.ne.s32.totalorder %s268, %s269
    %p281 = scmp.eq.s32.totalorder %s28, 1
    %p282 = por %p280, %p281
    %p284 = scmp.ne.s32.totalorder %s269, %s283
    %p285 = scmp.eq.s32.totalorder %s28, 0
    %p286 = por %p284, %p285
    %s288 = sadd.s32 %s287, 1
    %p291 = scmp.eq.s32.totalorder %s22, 1
    %p292 = scmp.ne.s32.totalorder %s287, %s289
    %p293 = scmp.eq.s32.totalorder %s22, 0
    %p294 = por %p292, %p293
    %p295 = scmp.ne.s32.totalorder %s287, %s289
    %p296 = scmp.eq.s32.totalorder %s27, 1
    %p297 = por %p295, %p296
    %p298 = scmp.ne.s32.totalorder %s289, %s290
    %p299 = scmp.eq.s32.totalorder %s27, 0
    %p300 = por %p298, %p299
    %p301 = scmp.ne.s32.totalorder %s289, %s290
    %p302 = scmp.eq.s32.totalorder %s28, 1
    %p303 = por %p301, %p302
    %p305 = scmp.ne.s32.totalorder %s290, %s304
    %p306 = scmp.eq.s32.totalorder %s28, 0
    %p307 = por %p305, %p306
    %s309 = sadd.s32 %s308, 1
    %p312 = scmp.eq.s32.totalorder %s22, 1
    %p313 = scmp.ne.s32.totalorder %s308, %s310
    %p314 = scmp.eq.s32.totalorder %s22, 0
    %p315 = por %p313, %p314
    %p316 = scmp.ne.s32.totalorder %s308, %s310
    %p317 = scmp.eq.s32.totalorder %s27, 1
    %p318 = por %p316, %p317
    %p319 = scmp.ne.s32.totalorder %s310, %s311
    %p320 = scmp.eq.s32.totalorder %s27, 0
    %p321 = por %p319, %p320
    %p322 = scmp.ne.s32.totalorder %s310, %s311
    %p323 = scmp.eq.s32.totalorder %s28, 1
    %p324 = por %p322, %p323
    %p326 = scmp.ne.s32.totalorder %s311, %s325
    %p327 = scmp.eq.s32.totalorder %s28, 0
    %p328 = por %p326, %p327
    %s329 = ssub.s32 %s22, %s29
    %p330 = scmp.eq.s32.totalorder %s329, 0
    %s332 = sadd.s32 %s331, 1
    %s333 = scalar_select %p330, %s331, %s332
    %p336 = pneg %p330
    %p337 = scmp.eq.s32.totalorder %s22, 1
    %p338 = por %p336, %p337
    %p339 = scmp.ne.s32.totalorder %s331, %s334
    %p340 = scmp.eq.s32.totalorder %s22, 0
    %p341 = por %p339, %p340
    %p342 = scmp.ne.s32.totalorder %s331, %s334
    %p343 = scmp.eq.s32.totalorder %s27, 1
    %p344 = por %p342, %p343
    %p345 = scmp.ne.s32.totalorder %s334, %s335
    %p346 = scmp.eq.s32.totalorder %s27, 0
    %p347 = por %p345, %p346
    %p348 = scmp.ne.s32.totalorder %s334, %s335
    %p349 = scmp.eq.s32.totalorder %s28, 1
    %p350 = por %p348, %p349
    %p352 = scmp.ne.s32.totalorder %s335, %s351
    %p353 = scmp.eq.s32.totalorder %s28, 0
    %p354 = por %p352, %p353
    %s355 = ssub.s32 %s22, %s29
    %p356 = scmp.eq.s32.totalorder %s355, 0
    %s358 = sadd.s32 %s357, 1
    %s359 = scalar_select %p356, %s357, %s358
    %p362 = pneg %p356
    %p363 = scmp.eq.s32.totalorder %s22, 1
    %p364 = por %p362, %p363
    %p365 = scmp.ne.s32.totalorder %s357, %s360
    %p366 = scmp.eq.s32.totalorder %s22, 0
    %p367 = por %p365, %p366
    %p368 = scmp.ne.s32.totalorder %s357, %s360
    %p369 = scmp.eq.s32.totalorder %s27, 1
    %p370 = por %p368, %p369
    %p371 = scmp.ne.s32.totalorder %s360, %s361
    %p372 = scmp.eq.s32.totalorder %s27, 0
    %p373 = por %p371, %p372
    %p374 = scmp.ne.s32.totalorder %s360, %s361
    %p375 = scmp.eq.s32.totalorder %s28, 1
    %p376 = por %p374, %p375
    %p378 = scmp.ne.s32.totalorder %s361, %s377
    %p379 = scmp.eq.s32.totalorder %s28, 0
    %p380 = por %p378, %p379
    %p381 = scmp.le.s32.totalorder 1, %s22
    %p382 = scmp.lt.s32.totalorder %s22, 3
    %p383 = pnand %p381, %p382
    %p384 = pneg %p383
    // Predicated region
    $region9: #{downsampler_forward.1} parent=5 // pred_check
      _
    $region10: #{downsampler_forward.1} parent=5 // pred_check_branch
      %386 = sbr.rel (%p383) target = $region12
    $region11: #{downsampler_forward.1} parent=5 // pred_region
      %s387 = ssub.s32 %s22, 1
      // Predicated region
      $region13: #{downsampler_forward.1} parent=11 // pred_check
        %p388 = pneg %p69
      $region14: #{downsampler_forward.1} parent=11 // pred_check_branch
        %390 = sbr.rel (%p388) target = $region16
      $region15: #{downsampler_forward.1} parent=11 // pred_region
        _
      $region16: #{downsampler_forward.1} parent=11 // pred_fallthru
        _
      // Predicated region
      $region17: #{downsampler_forward.1} parent=11 // pred_check
        %p391 = pneg %p90
      $region18: #{downsampler_forward.1} parent=11 // pred_check_branch
        %393 = sbr.rel (%p391) target = $region20
      $region19: #{downsampler_forward.1} parent=11 // pred_region
        _
      $region20: #{downsampler_forward.1} parent=11 // pred_fallthru
        _
      // Predicated region
      $region21: #{downsampler_forward.1} parent=11 // pred_check
        %p394 = pneg %p111
      $region22: #{downsampler_forward.1} parent=11 // pred_check_branch
        %396 = sbr.rel (%p394) target = $region24
      $region23: #{downsampler_forward.1} parent=11 // pred_region
        _
      $region24: #{downsampler_forward.1} parent=11 // pred_fallthru
        _
      // Predicated region
      $region25: #{downsampler_forward.1} parent=11 // pred_check
        %p397 = pneg %p132
      $region26: #{downsampler_forward.1} parent=11 // pred_check_branch
        %399 = sbr.rel (%p397) target = $region28
      $region27: #{downsampler_forward.1} parent=11 // pred_region
        _
      $region28: #{downsampler_forward.1} parent=11 // pred_fallthru
        _
      // Predicated region
      $region29: #{downsampler_forward.1} parent=11 // pred_check
        %p400 = pneg %p153
      $region30: #{downsampler_forward.1} parent=11 // pred_check_branch
        %402 = sbr.rel (%p400) target = $region32
      $region31: #{downsampler_forward.1} parent=11 // pred_region
        _
      $region32: #{downsampler_forward.1} parent=11 // pred_fallthru
        _
      // Predicated region
      $region33: #{downsampler_forward.1} parent=11 // pred_check
        %p403 = pneg %p174
      $region34: #{downsampler_forward.1} parent=11 // pred_check_branch
        %405 = sbr.rel (%p403) target = $region36
      $region35: #{downsampler_forward.1} parent=11 // pred_region
        _
      $region36: #{downsampler_forward.1} parent=11 // pred_fallthru
        _
      // Predicated region
      $region37: #{downsampler_forward.1} parent=11 // pred_check
        %p406 = pneg %p195
      $region38: #{downsampler_forward.1} parent=11 // pred_check_branch
        %408 = sbr.rel (%p406) target = $region40
      $region39: #{downsampler_forward.1} parent=11 // pred_region
        _
      $region40: #{downsampler_forward.1} parent=11 // pred_fallthru
        _
      // Predicated region
      $region41: #{downsampler_forward.1} parent=11 // pred_check
        %p409 = pneg %p216
      $region42: #{downsampler_forward.1} parent=11 // pred_check_branch
        %411 = sbr.rel (%p409) target = $region44
      $region43: #{downsampler_forward.1} parent=11 // pred_region
        _
      $region44: #{downsampler_forward.1} parent=11 // pred_fallthru
        _
      // Predicated region
      $region45: #{downsampler_forward.1} parent=11 // pred_check
        %p412 = pneg %p237
      $region46: #{downsampler_forward.1} parent=11 // pred_check_branch
        %414 = sbr.rel (%p412) target = $region48
      $region47: #{downsampler_forward.1} parent=11 // pred_region
        _
      $region48: #{downsampler_forward.1} parent=11 // pred_fallthru
        _
      // Predicated region
      $region49: #{downsampler_forward.1} parent=11 // pred_check
        %p415 = pneg %p258
      $region50: #{downsampler_forward.1} parent=11 // pred_check_branch
        %417 = sbr.rel (%p415) target = $region52
      $region51: #{downsampler_forward.1} parent=11 // pred_region
        _
      $region52: #{downsampler_forward.1} parent=11 // pred_fallthru
        _
      // Predicated region
      $region53: #{downsampler_forward.1} parent=11 // pred_check
        %p418 = pneg %p279
      $region54: #{downsampler_forward.1} parent=11 // pred_check_branch
        %420 = sbr.rel (%p418) target = $region56
      $region55: #{downsampler_forward.1} parent=11 // pred_region
        _
      $region56: #{downsampler_forward.1} parent=11 // pred_fallthru
        _
      // Predicated region
      $region57: #{downsampler_forward.1} parent=11 // pred_check
        %p421 = pneg %p300
      $region58: #{downsampler_forward.1} parent=11 // pred_check_branch
        %423 = sbr.rel (%p421) target = $region60
      $region59: #{downsampler_forward.1} parent=11 // pred_region
        _
      $region60: #{downsampler_forward.1} parent=11 // pred_fallthru
        _
      // Predicated region
      $region61: #{downsampler_forward.1} parent=11 // pred_check
        %p424 = pneg %p321
      $region62: #{downsampler_forward.1} parent=11 // pred_check_branch
        %426 = sbr.rel (%p424) target = $region64
      $region63: #{downsampler_forward.1} parent=11 // pred_region
        _
      $region64: #{downsampler_forward.1} parent=11 // pred_fallthru
        _
    $region12: #{downsampler_forward.1} parent=5 // pred_fallthru
      _
    %p427 = scmp.lt.s32.totalorder %s22, 2
    // Predicated region
    $region65: #{downsampler_forward.1} parent=5 // pred_check
      %p428 = pneg %p427
    $region66: #{downsampler_forward.1} parent=5 // pred_check_branch
      %430 = sbr.rel (%p428) target = $region68
    $region67: #{downsampler_forward.1} parent=5 // pred_region
      // Predicated region
      $region69: #{downsampler_forward.1} parent=67 // pred_check
        %p431 = pneg %p42
      $region70: #{downsampler_forward.1} parent=67 // pred_check_branch
        %433 = sbr.rel (%p431) target = $region72
      $region71: #{downsampler_forward.1} parent=67 // pred_region
        %p434 = scmp.lt.s32.totalorder %s22, 1
        %s435 = scalar_select %p434, %s22, 1
        %s436 = smul.addr %s435, 72
        %s437 = smul.addr %s436, 8
        %s438 = scalar_lea.vmem %s0, %s437
      $region72: #{downsampler_forward.1} parent=67 // pred_fallthru
        _
    $region68: #{downsampler_forward.1} parent=5 // pred_fallthru
      _
    %p439 = scmp.le.s32.totalorder 1, %s22
    %p440 = scmp.lt.s32.totalorder %s22, 3
    %p441 = pnand %p439, %p440
    %p442 = pneg %p441
    // Predicated region
    $region73: #{downsampler_forward.1} parent=5 // pred_check
      _
    $region74: #{downsampler_forward.1} parent=5 // pred_check_branch
      %444 = sbr.rel (%p441) target = $region76
    $region75: #{downsampler_forward.1} parent=5 // pred_region
      %s445 = ssub.s32 %s22, 1
      %p446 = scmp.lt.s32.totalorder %s27, 1
      %s447 = scalar_select %p446, %s27, 1
      %s448 = smul.addr %s447, 72
      %s449 = smul.addr %s448, 8
      %s450 = scalar_lea.vmem %s0, %s449
      %p451 = pneg %p48
      %p452 = pneg %p45
      %p453 = pneg %p69
      %p454 = pneg %p66
      %p455 = pneg %p90
      %p456 = pneg %p87
      %p457 = pneg %p111
      %p458 = pneg %p108
      %p459 = pneg %p132
      %p460 = pneg %p129
      %p461 = pneg %p153
      %p462 = pneg %p150
      %p463 = pneg %p174
      %p464 = pneg %p171
      %p465 = pneg %p195
      %p466 = pneg %p192
      %p467 = pneg %p216
      %p468 = pneg %p213
      %p469 = pneg %p237
      %p470 = pneg %p234
      %p471 = pneg %p258
      %p472 = pneg %p255
      %p473 = pneg %p279
      %p474 = pneg %p276
      %p475 = pneg %p300
      %p476 = pneg %p297
      %p477 = pneg %p321
      %p478 = pneg %p318
      %p479 = pneg %p347
      %p480 = pneg %p344
      %p481 = scmp.lt.s32.totalorder %s27, 1
      %s482 = scalar_select %p481, %s27, 1
      %s483 = smul.addr %s482, 8
      %s484 = smul.addr %s483, 8
      %s485 = scalar_lea.vmem %s14, %s484
      %p486 = pneg %p373
      %p487 = pneg %p370
      %p488 = scmp.lt.s32.totalorder %s27, 1
      %s489 = scalar_select %p488, %s27, 1
      %s490 = smul.addr %s489, 8
      %s491 = smul.addr %s490, 8
      %s492 = scalar_lea.vmem %s15, %s491
      %p493 = scmp.lt.s32.totalorder %s27, 1
      %s494 = scalar_select %p493, %s27, 1
      %s495 = smul.addr %s494, 72
      %s496 = smul.addr %s495, 8
      %s497 = scalar_lea.vmem %s0, %s496
      %p498 = scmp.lt.s32.totalorder %s27, 1
      %s499 = scalar_select %p498, %s27, 1
      %s500 = smul.addr %s499, 8
      %s501 = smul.addr %s500, 8
      %s502 = scalar_lea.vmem %s14, %s501
      %p503 = scmp.lt.s32.totalorder %s27, 1
      %s504 = scalar_select %p503, %s27, 1
      %s505 = smul.addr %s504, 8
      %s506 = smul.addr %s505, 8
      %s507 = scalar_lea.vmem %s15, %s506
      %v508 = vld [vmem:[%s497] sm:$0xff]
      %v509 = vld [vmem:[%s497 + $0x10] sm:$0xff]
      %v510 = vld [vmem:[%s497 + $0x20] sm:$0xff]
      %v511 = vld [vmem:[%s497 + $0x30] sm:$0xff]
      %v512 = vld [vmem:[%s497 + $0x40] sm:$0xff]
      %v513 = vld [vmem:[%s497 + $0x50] sm:$0xff]
      %v514 = vld [vmem:[%s497 + $0x60] sm:$0xff]
      %v515 = vld [vmem:[%s497 + $0x70] sm:$0xff]
      %v516 = vadd.f32 %v508, 0.0
      %v517 = vadd.f32 %v509, 0.0
      %v518 = vadd.f32 %v510, 0.0
      %v519 = vadd.f32 %v511, 0.0
      %v520 = vadd.f32 %v512, 0.0
      %v521 = vadd.f32 %v513, 0.0
      %v522 = vadd.f32 %v514, 0.0
      %v523 = vadd.f32 %v515, 0.0
      %s524 = scalar_lea.vmem %s497, 144
      %v525 = vld [vmem:[%s524] sm:$0xff]
      %v526 = vld [vmem:[%s524 + $0x10] sm:$0xff]
      %v527 = vld [vmem:[%s524 + $0x20] sm:$0xff]
      %v528 = vld [vmem:[%s524 + $0x30] sm:$0xff]
      %v529 = vld [vmem:[%s524 + $0x40] sm:$0xff]
      %v530 = vld [vmem:[%s524 + $0x50] sm:$0xff]
      %v531 = vld [vmem:[%s524 + $0x60] sm:$0xff]
      %v532 = vld [vmem:[%s524 + $0x70] sm:$0xff]
      %v533 = vadd.f32 %v516, %v525
      %v534 = vadd.f32 %v517, %v526
      %v535 = vadd.f32 %v518, %v527
      %v536 = vadd.f32 %v519, %v528
      %v537 = vadd.f32 %v520, %v529
      %v538 = vadd.f32 %v521, %v530
      %v539 = vadd.f32 %v522, %v531
      %v540 = vadd.f32 %v523, %v532
      %v541 = vld [vmem:[%s497 + $0x1] sm:$0xff]
      %v542 = vld [vmem:[%s497 + $0x11] sm:$0xff]
      %v543 = vld [vmem:[%s497 + $0x21] sm:$0xff]
      %v544 = vld [vmem:[%s497 + $0x31] sm:$0xff]
      %v545 = vld [vmem:[%s497 + $0x41] sm:$0xff]
      %v546 = vld [vmem:[%s497 + $0x51] sm:$0xff]
      %v547 = vld [vmem:[%s497 + $0x61] sm:$0xff]
      %v548 = vld [vmem:[%s497 + $0x71] sm:$0xff]
      %v549 = vadd.f32 %v533, %v541
      %v550 = vadd.f32 %v534, %v542
      %v551 = vadd.f32 %v535, %v543
      %v552 = vadd.f32 %v536, %v544
      %v553 = vadd.f32 %v537, %v545
      %v554 = vadd.f32 %v538, %v546
      %v555 = vadd.f32 %v539, %v547
      %v556 = vadd.f32 %v540, %v548
      %s557 = scalar_lea.vmem %s497, 288
      %v558 = vld [vmem:[%s557] sm:$0xff]
      %v559 = vld [vmem:[%s557 + $0x10] sm:$0xff]
      %v560 = vld [vmem:[%s557 + $0x20] sm:$0xff]
      %v561 = vld [vmem:[%s557 + $0x30] sm:$0xff]
      %v562 = vld [vmem:[%s557 + $0x40] sm:$0xff]
      %v563 = vld [vmem:[%s557 + $0x50] sm:$0xff]
      %v564 = vld [vmem:[%s557 + $0x60] sm:$0xff]
      %v565 = vld [vmem:[%s557 + $0x70] sm:$0xff]
      %v566 = vadd.f32 %v549, %v558
      %v567 = vadd.f32 %v550, %v559
      %v568 = vadd.f32 %v551, %v560
      %v569 = vadd.f32 %v552, %v561
      %v570 = vadd.f32 %v553, %v562
      %v571 = vadd.f32 %v554, %v563
      %v572 = vadd.f32 %v555, %v564
      %v573 = vadd.f32 %v556, %v565
      %s574 = scalar_lea.vmem %s497, 432
      %v575 = vld [vmem:[%s574] sm:$0xff]
      %v576 = vld [vmem:[%s574 + $0x10] sm:$0xff]
      %v577 = vld [vmem:[%s574 + $0x20] sm:$0xff]
      %v578 = vld [vmem:[%s574 + $0x30] sm:$0xff]
      %v579 = vld [vmem:[%s574 + $0x40] sm:$0xff]
      %v580 = vld [vmem:[%s574 + $0x50] sm:$0xff]
      %v581 = vld [vmem:[%s574 + $0x60] sm:$0xff]
      %v582 = vld [vmem:[%s574 + $0x70] sm:$0xff]
      %v583 = vadd.f32 %v566, %v575
      %v584 = vadd.f32 %v567, %v576
      %v585 = vadd.f32 %v568, %v577
      %v586 = vadd.f32 %v569, %v578
      %v587 = vadd.f32 %v570, %v579
      %v588 = vadd.f32 %v571, %v580
      %v589 = vadd.f32 %v572, %v581
      %v590 = vadd.f32 %v573, %v582
      %v591 = vld [vmem:[%s557 + $0x1] sm:$0xff]
      %v592 = vld [vmem:[%s557 + $0x11] sm:$0xff]
      %v593 = vld [vmem:[%s557 + $0x21] sm:$0xff]
      %v594 = vld [vmem:[%s557 + $0x31] sm:$0xff]
      %v595 = vld [vmem:[%s557 + $0x41] sm:$0xff]
      %v596 = vld [vmem:[%s557 + $0x51] sm:$0xff]
      %v597 = vld [vmem:[%s557 + $0x61] sm:$0xff]
      %v598 = vld [vmem:[%s557 + $0x71] sm:$0xff]
      %v599 = vadd.f32 %v583, %v591
      %v600 = vadd.f32 %v584, %v592
      %v601 = vadd.f32 %v585, %v593
      %v602 = vadd.f32 %v586, %v594
      %v603 = vadd.f32 %v587, %v595
      %v604 = vadd.f32 %v588, %v596
      %v605 = vadd.f32 %v589, %v597
      %v606 = vadd.f32 %v590, %v598
      %s607 = scalar_lea.vmem %s497, 16
      %v608 = vld [vmem:[%s607] sm:$0xff]
      %v609 = vld [vmem:[%s607 + $0x10] sm:$0xff]
      %v610 = vld [vmem:[%s607 + $0x20] sm:$0xff]
      %v611 = vld [vmem:[%s607 + $0x30] sm:$0xff]
      %v612 = vld [vmem:[%s607 + $0x40] sm:$0xff]
      %v613 = vld [vmem:[%s607 + $0x50] sm:$0xff]
      %v614 = vld [vmem:[%s607 + $0x60] sm:$0xff]
      %v615 = vld [vmem:[%s607 + $0x70] sm:$0xff]
      %v616 = vadd.f32 %v599, %v608
      %v617 = vadd.f32 %v600, %v609
      %v618 = vadd.f32 %v601, %v610
      %v619 = vadd.f32 %v602, %v611
      %v620 = vadd.f32 %v603, %v612
      %v621 = vadd.f32 %v604, %v613
      %v622 = vadd.f32 %v605, %v614
      %v623 = vadd.f32 %v606, %v615
      %s624 = scalar_lea.vmem %s497, 160
      %v625 = vld [vmem:[%s624] sm:$0xff]
      %v626 = vld [vmem:[%s624 + $0x10] sm:$0xff]
      %v627 = vld [vmem:[%s624 + $0x20] sm:$0xff]
      %v628 = vld [vmem:[%s624 + $0x30] sm:$0xff]
      %v629 = vld [vmem:[%s624 + $0x40] sm:$0xff]
      %v630 = vld [vmem:[%s624 + $0x50] sm:$0xff]
      %v631 = vld [vmem:[%s624 + $0x60] sm:$0xff]
      %v632 = vld [vmem:[%s624 + $0x70] sm:$0xff]
      %v633 = vadd.f32 %v616, %v625
      %v634 = vadd.f32 %v617, %v626
      %v635 = vadd.f32 %v618, %v627
      %v636 = vadd.f32 %v619, %v628
      %v637 = vadd.f32 %v620, %v629
      %v638 = vadd.f32 %v621, %v630
      %v639 = vadd.f32 %v622, %v631
      %v640 = vadd.f32 %v623, %v632
      %v641 = vld [vmem:[%s607 + $0x1] sm:$0xff]
      %v642 = vld [vmem:[%s607 + $0x11] sm:$0xff]
      %v643 = vld [vmem:[%s607 + $0x21] sm:$0xff]
      %v644 = vld [vmem:[%s607 + $0x31] sm:$0xff]
      %v645 = vld [vmem:[%s607 + $0x41] sm:$0xff]
      %v646 = vld [vmem:[%s607 + $0x51] sm:$0xff]
      %v647 = vld [vmem:[%s607 + $0x61] sm:$0xff]
      %v648 = vld [vmem:[%s607 + $0x71] sm:$0xff]
      %v649 = vadd.f32 %v633, %v641
      %v650 = vadd.f32 %v634, %v642
      %v651 = vadd.f32 %v635, %v643
      %v652 = vadd.f32 %v636, %v644
      %v653 = vadd.f32 %v637, %v645
      %v654 = vadd.f32 %v638, %v646
      %v655 = vadd.f32 %v639, %v647
      %v656 = vadd.f32 %v640, %v648
      %v657 = vmul.f32 %v649, 0.11111111
      %v658 = vmul.f32 %v650, 0.11111111
      %v659 = vmul.f32 %v651, 0.11111111
      %v660 = vmul.f32 %v652, 0.11111111
      %v661 = vmul.f32 %v653, 0.11111111
      %v662 = vmul.f32 %v654, 0.11111111
      %v663 = vmul.f32 %v655, 0.11111111
      %v664 = vmul.f32 %v656, 0.11111111
      %vm665 = vcmp.ge.f32.partialorder %v657, 0.0
      %vm666 = vcmp.ge.f32.partialorder %v658, 0.0
      %vm667 = vcmp.ge.f32.partialorder %v659, 0.0
      %vm668 = vcmp.ge.f32.partialorder %v660, 0.0
      %vm669 = vcmp.ge.f32.partialorder %v661, 0.0
      %vm670 = vcmp.ge.f32.partialorder %v662, 0.0
      %vm671 = vcmp.ge.f32.partialorder %v663, 0.0
      %vm672 = vcmp.ge.f32.partialorder %v664, 0.0
      %v673 = vld [vmem:[%s12] sm:$0x1]
      %v675 = vlaneseq
      %v676 = vshrl.u32 %v675, 7
      %v677 = vsub.s32 0, %v676
      %v678 = vrot.slane %v673, %v677
      %v680 = vmul.f32 %v678, %v657
      %v681 = vmul.f32 %v678, %v658
      %v682 = vmul.f32 %v678, %v659
      %v683 = vmul.f32 %v678, %v660
      %v684 = vmul.f32 %v678, %v661
      %v685 = vmul.f32 %v678, %v662
      %v686 = vmul.f32 %v678, %v663
      %v687 = vmul.f32 %v678, %v664
      %v688 = vsel %vm665, %v657, %v680
      %v689 = vsel %vm666, %v658, %v681
      %v690 = vsel %vm667, %v659, %v682
      %v691 = vsel %vm668, %v660, %v683
      %v692 = vsel %vm669, %v661, %v684
      %v693 = vsel %vm670, %v662, %v685
      %v694 = vsel %vm671, %v663, %v686
      %v695 = vsel %vm672, %v664, %v687
      %vm696 = vcmask 130048
      %697 = vst.msk [vmem:[%s502] sm:$0xff] %vm696, %v688
      %698 = vst.msk [vmem:[%s502 + $0x8] sm:$0xff] %vm696, %v689
      %699 = vst.msk [vmem:[%s502 + $0x10] sm:$0xff] %vm696, %v690
      %700 = vst.msk [vmem:[%s502 + $0x18] sm:$0xff] %vm696, %v691
      %701 = vst.msk [vmem:[%s502 + $0x20] sm:$0xff] %vm696, %v692
      %702 = vst.msk [vmem:[%s502 + $0x28] sm:$0xff] %vm696, %v693
      %703 = vst.msk [vmem:[%s502 + $0x30] sm:$0xff] %vm696, %v694
      %704 = vst.msk [vmem:[%s502 + $0x38] sm:$0xff] %vm696, %v695
      %vm705 = vcmask 64512
      %706 = vst.msk [vmem:[#allocation2] sm:$0xff] %vm705, 0.0
      %vm707 = vcmask 60416
      %708 = vst.msk [vmem:[#allocation2 + $0x8] sm:$0xf] %vm707, 0.0
      %709 = vst.msk [vmem:[#allocation2 + $0x10] sm:$0xff] %vm705, 0.0
      %710 = vst.msk [vmem:[#allocation2 + $0x18] sm:$0xf] %vm707, 0.0
      %711 = vst.msk [vmem:[#allocation2 + $0x20] sm:$0xff] %vm705, 0.0
      %712 = vst.msk [vmem:[#allocation2 + $0x28] sm:$0xf] %vm707, 0.0
      %713 = vst.msk [vmem:[#allocation2 + $0x30] sm:$0xff] %vm705, 0.0
      %714 = vst.msk [vmem:[#allocation2 + $0x38] sm:$0xf] %vm707, 0.0
      %715 = vst.msk [vmem:[#allocation2 + $0x40] sm:$0xff] %vm705, 0.0
      %716 = vst.msk [vmem:[#allocation2 + $0x48] sm:$0xf] %vm707, 0.0
      %717 = vst.msk [vmem:[#allocation2 + $0x50] sm:$0xff] %vm705, 0.0
      %718 = vst.msk [vmem:[#allocation2 + $0x58] sm:$0xf] %vm707, 0.0
      %719 = vst.msk [vmem:[#allocation2 + $0x60] sm:$0xff] %vm705, 0.0
      %720 = vst.msk [vmem:[#allocation2 + $0x68] sm:$0xf] %vm707, 0.0
      %721 = vst.msk [vmem:[#allocation2 + $0x70] sm:$0xff] %vm705, 0.0
      %722 = vst.msk [vmem:[#allocation2 + $0x78] sm:$0xf] %vm707, 0.0
      %723 = vst.msk [vmem:[#allocation2 + $0x80] sm:$0xff] %vm705, 0.0
      %724 = vst.msk [vmem:[#allocation2 + $0x88] sm:$0xf] %vm707, 0.0
      %725 = vst.msk [vmem:[#allocation2 + $0x90] sm:$0xff] %vm705, 0.0
      %726 = vst.msk [vmem:[#allocation2 + $0x98] sm:$0xf] %vm707, 0.0
      %727 = vst.msk [vmem:[#allocation2 + $0xa0] sm:$0xff] %vm705, 0.0
      %728 = vst.msk [vmem:[#allocation2 + $0xa8] sm:$0xf] %vm707, 0.0
      %729 = vst.msk [vmem:[#allocation2 + $0xb0] sm:$0xff] %vm705, 0.0
      %730 = vst.msk [vmem:[#allocation2 + $0xb8] sm:$0xf] %vm707, 0.0
      %731 = vst.msk [vmem:[#allocation2 + $0xc0] sm:$0xff] %vm705, 0.0
      %732 = vst.msk [vmem:[#allocation2 + $0xc8] sm:$0xf] %vm707, 0.0
      %733 = vst.msk [vmem:[#allocation2 + $0xd0] sm:$0xff] %vm705, 0.0
      %734 = vst.msk [vmem:[#allocation2 + $0xd8] sm:$0xf] %vm707, 0.0
      %735 = vst.msk [vmem:[#allocation2 + $0xe0] sm:$0xff] %vm705, 0.0
      %736 = vst.msk [vmem:[#allocation2 + $0xe8] sm:$0xf] %vm707, 0.0
      %737 = vst.msk [vmem:[#allocation2 + $0xf0] sm:$0xff] %vm705, 0.0
      %738 = vst.msk [vmem:[#allocation2 + $0xf8] sm:$0xf] %vm707, 0.0
      %739 = vst.msk [vmem:[#allocation2 + $0x100] sm:$0xff] %vm705, 0.0
      %740 = vst.msk [vmem:[#allocation2 + $0x108] sm:$0xf] %vm707, 0.0
      %741 = vst.msk [vmem:[#allocation2 + $0x110] sm:$0xff] %vm705, 0.0
      %742 = vst.msk [vmem:[#allocation2 + $0x118] sm:$0xf] %vm707, 0.0
      %743 = vst.msk [vmem:[#allocation2 + $0x120] sm:$0xff] %vm705, 0.0
      %744 = vst.msk [vmem:[#allocation2 + $0x128] sm:$0xf] %vm707, 0.0
      %745 = vst.msk [vmem:[#allocation2 + $0x130] sm:$0xff] %vm705, 0.0
      %746 = vst.msk [vmem:[#allocation2 + $0x138] sm:$0xf] %vm707, 0.0
      %747 = vst.msk [vmem:[#allocation2 + $0x140] sm:$0xff] %vm705, 0.0
      %748 = vst.msk [vmem:[#allocation2 + $0x148] sm:$0xf] %vm707, 0.0
      %749 = vst.msk [vmem:[#allocation2 + $0x150] sm:$0xff] %vm705, 0.0
      %750 = vst.msk [vmem:[#allocation2 + $0x158] sm:$0xf] %vm707, 0.0
      %751 = vst.msk [vmem:[#allocation2 + $0x160] sm:$0xff] %vm705, 0.0
      %752 = vst.msk [vmem:[#allocation2 + $0x168] sm:$0xf] %vm707, 0.0
      %753 = vst.msk [vmem:[#allocation2 + $0x170] sm:$0xff] %vm705, 0.0
      %754 = vst.msk [vmem:[#allocation2 + $0x178] sm:$0xf] %vm707, 0.0
      %755 = vst.msk [vmem:[#allocation2 + $0x180] sm:$0xff] %vm705, 0.0
      %756 = vst.msk [vmem:[#allocation2 + $0x188] sm:$0xf] %vm707, 0.0
      %757 = vst.msk [vmem:[#allocation2 + $0x190] sm:$0xff] %vm705, 0.0
      %758 = vst.msk [vmem:[#allocation2 + $0x198] sm:$0xf] %vm707, 0.0
      %759 = vst.msk [vmem:[#allocation2 + $0x1a0] sm:$0xff] %vm705, 0.0
      %760 = vst.msk [vmem:[#allocation2 + $0x1a8] sm:$0xf] %vm707, 0.0
      %761 = vst.msk [vmem:[#allocation2 + $0x1b0] sm:$0xff] %vm705, 0.0
      %762 = vst.msk [vmem:[#allocation2 + $0x1b8] sm:$0xf] %vm707, 0.0
      %763 = vst.msk [vmem:[#allocation2 + $0x1c0] sm:$0xff] %vm705, 0.0
      %764 = vst.msk [vmem:[#allocation2 + $0x1c8] sm:$0xf] %vm707, 0.0
      %765 = vst.msk [vmem:[#allocation2 + $0x1d0] sm:$0xff] %vm705, 0.0
      %766 = vst.msk [vmem:[#allocation2 + $0x1d8] sm:$0xf] %vm707, 0.0
      %767 = vst.msk [vmem:[#allocation2 + $0x1e0] sm:$0xff] %vm705, 0.0
      %768 = vst.msk [vmem:[#allocation2 + $0x1e8] sm:$0xf] %vm707, 0.0
      %769 = vst.msk [vmem:[#allocation2 + $0x1f0] sm:$0xff] %vm705, 0.0
      %770 = vst.msk [vmem:[#allocation2 + $0x1f8] sm:$0xf] %vm707, 0.0
      %771 = vst.msk [vmem:[#allocation2 + $0x200] sm:$0xff] %vm705, 0.0
      %772 = vst.msk [vmem:[#allocation2 + $0x208] sm:$0xf] %vm707, 0.0
      %773 = vst.msk [vmem:[#allocation2 + $0x210] sm:$0xff] %vm705, 0.0
      %774 = vst.msk [vmem:[#allocation2 + $0x218] sm:$0xf] %vm707, 0.0
      %775 = vst.msk [vmem:[#allocation2 + $0x220] sm:$0xff] %vm705, 0.0
      %776 = vst.msk [vmem:[#allocation2 + $0x228] sm:$0xf] %vm707, 0.0
      %777 = vst.msk [vmem:[#allocation2 + $0x230] sm:$0xff] %vm705, 0.0
      %778 = vst.msk [vmem:[#allocation2 + $0x238] sm:$0xf] %vm707, 0.0
      %779 = vst.msk [vmem:[#allocation2 + $0x240] sm:$0xff] %vm705, 0.0
      %780 = vst.msk [vmem:[#allocation2 + $0x248] sm:$0xf] %vm707, 0.0
      %781 = vst.msk [vmem:[#allocation2 + $0x250] sm:$0xff] %vm705, 0.0
      %782 = vst.msk [vmem:[#allocation2 + $0x258] sm:$0xf] %vm707, 0.0
      %783 = vst.msk [vmem:[#allocation2 + $0x260] sm:$0xff] %vm705, 0.0
      %784 = vst.msk [vmem:[#allocation2 + $0x268] sm:$0xf] %vm707, 0.0
      %785 = vst.msk [vmem:[#allocation2 + $0x270] sm:$0xff] %vm705, 0.0
      %786 = vst.msk [vmem:[#allocation2 + $0x278] sm:$0xf] %vm707, 0.0
      %787 = vst.msk [vmem:[#allocation2 + $0x280] sm:$0xff] %vm705, 0.0
      %788 = vst.msk [vmem:[#allocation2 + $0x288] sm:$0xf] %vm707, 0.0
      %789 = vst.msk [vmem:[#allocation2 + $0x290] sm:$0xff] %vm705, 0.0
      %790 = vst.msk [vmem:[#allocation2 + $0x298] sm:$0xf] %vm707, 0.0
      %791 = vst.msk [vmem:[#allocation2 + $0x2a0] sm:$0xff] %vm705, 0.0
      %792 = vst.msk [vmem:[#allocation2 + $0x2a8] sm:$0xf] %vm707, 0.0
      %793 = vst.msk [vmem:[#allocation2 + $0x2b0] sm:$0xff] %vm705, 0.0
      %794 = vst.msk [vmem:[#allocation2 + $0x2b8] sm:$0xf] %vm707, 0.0
      %795 = vst.msk [vmem:[#allocation2 + $0x2c0] sm:$0xff] %vm705, 0.0
      %796 = vst.msk [vmem:[#allocation2 + $0x2c8] sm:$0xf] %vm707, 0.0
      %797 = vst.msk [vmem:[#allocation2 + $0x2d0] sm:$0xff] %vm705, 0.0
      %798 = vst.msk [vmem:[#allocation2 + $0x2d8] sm:$0xf] %vm707, 0.0
      %799 = vst.msk [vmem:[#allocation2 + $0x2e0] sm:$0xff] %vm705, 0.0
      %800 = vst.msk [vmem:[#allocation2 + $0x2e8] sm:$0xf] %vm707, 0.0
      %801 = vst.msk [vmem:[#allocation2 + $0x2f0] sm:$0xff] %vm705, 0.0
      %802 = vst.msk [vmem:[#allocation2 + $0x2f8] sm:$0xf] %vm707, 0.0
      %v803 = vld [vmem:[%s1] sm:$0xff]
      %v804 = vld [vmem:[%s1 + $0x8] sm:$0xff]
      %v805 = vld [vmem:[%s2] sm:$0x1]
      %v806 = vld [vmem:[%s3] sm:$0x1]
      %v807 = vld [vmem:[%s4] sm:$0x1]
      %v808 = vld [vmem:[%s574] sm:$0xff]
      %v809 = vld [vmem:[%s574 + $0x10] sm:$0xff]
      %v810 = vld [vmem:[%s574 + $0x20] sm:$0xff]
      %v811 = vld [vmem:[%s574 + $0x30] sm:$0xff]
      %v812 = vld [vmem:[%s574 + $0x40] sm:$0xff]
      %v813 = vld [vmem:[%s574 + $0x50] sm:$0xff]
      %v814 = vld [vmem:[%s574 + $0x60] sm:$0xff]
      %v815 = vld [vmem:[%s574 + $0x70] sm:$0xff]
      %v817 = vsel %vm696, %v808, 0
      %v820 = vsel %vm696, %v809, 0
      %v823 = vsel %vm696, %v810, 0
      %v826 = vsel %vm696, %v811, 0
      %v829 = vsel %vm696, %v812, 0
      %v832 = vsel %vm696, %v813, 0
      %v835 = vsel %vm696, %v814, 0
      %v838 = vsel %vm696, %v815, 0
      %840 = vmatprep.subr.mxu0 0.0
      %841 = vmatpush1.msra.mxu0 0.0
      %842 = vmatprep.subr.mxu0 0.0
      %843 = vmatpush1.msra.mxu0 0.0
      %844 = vmatprep.subr.mxu0 0.0
      %845 = vmatpush1.msra.mxu0 0.0
      %846 = vmatprep.subr.mxu0 0.0
      %847 = vmatpush1.msra.mxu0 0.0
      %848 = vmatprep.subr.mxu0 0.0
      %849 = vmatpush1.msra.mxu0 0.0
      %850 = vmatprep.subr.mxu0 0.0
      %851 = vmatpush1.msra.mxu0 0.0
      %852 = vmatprep.subr.mxu0 0.0
      %853 = vmatpush1.msra.mxu0 0.0
      %854 = vmatprep.subr.mxu0 0.0
      %855 = vmatpush1.msra.mxu0 0.0
      %856 = vmatprep.subr.mxu0 0.0
      %857 = vmatpush1.msra.mxu0 0.0
      %858 = vmatprep.subr.mxu0 0.0
      %859 = vmatpush1.msra.mxu0 0.0
      %860 = vmatprep.subr.mxu0 0.0
      %861 = vmatpush1.msra.mxu0 0.0
      %862 = vmatprep.subr.mxu0 0.0
      %863 = vmatpush1.msra.mxu0 0.0
      %864 = vmatprep.subr.mxu0 0.0
      %865 = vmatpush1.msra.mxu0 0.0
      %866 = vmatprep.subr.mxu0 0.0
      %867 = vmatpush1.msra.mxu0 0.0
      %868 = vmatprep.subr.mxu0 0.0
      %869 = vmatpush1.msra.mxu0 %v804
      %870 = vmatprep.subr.mxu0 0.0
      %871 = vmatpush1.msra.mxu0 %v803
      %872 = vmatprep.subr.mxu0 0.0
      %873 = vmatpush2.msra.mxu0 0.0
      %874 = vmatprep.subr.mxu0 0.0
      %875 = vmatpush2.msra.mxu0 0.0
      %876 = vmatprep.subr.mxu0 0.0
      %877 = vmatpush2.msra.mxu0 0.0
      %878 = vmatprep.subr.mxu0 0.0
      %879 = vmatpush2.msra.mxu0 0.0
      %880 = vmatprep.subr.mxu0 0.0
      %881 = vmatpush2.msra.mxu0 0.0
      %882 = vmatprep.subr.mxu0 0.0
      %883 = vmatpush2.msra.mxu0 0.0
      %884 = vmatprep.subr.mxu0 0.0
      %885 = vmatpush2.msra.mxu0 0.0
      %886 = vmatprep.subr.mxu0 0.0
      %887 = vmatpush2.msra.mxu0 0.0
      %888 = vmatprep.subr.mxu0 0.0
      %889 = vmatpush2.msra.mxu0 0.0
      %890 = vmatprep.subr.mxu0 0.0
      %891 = vmatpush2.msra.mxu0 0.0
      %892 = vmatprep.subr.mxu0 0.0
      %893 = vmatpush2.msra.mxu0 0.0
      %894 = vmatprep.subr.mxu0 0.0
      %895 = vmatpush2.msra.mxu0 0.0
      %896 = vmatprep.subr.mxu0 0.0
      %897 = vmatpush2.msra.mxu0 0.0
      %898 = vmatprep.subr.mxu0 0.0
      %899 = vmatpush2.msra.mxu0 0.0
      %900 = vmatprep.subr.mxu0 0.0
      %901 = vmatpush2.msra.mxu0 0.0
      %902 = vmatprep.subr.mxu0 0.0
      %903 = vmatpush2.msra.mxu0 0.0
      %904 = vmatprep.mubr.f32.mxu0 0.0
      %905 = vmatmul.mubr.f32.gmra.mxu0 %v817
      %v906 = vpop.f32.mrf.mxu0
      %v907 = vadd.f32 0.0, %v906
      %v908 = vpop.f32.mrf.mxu0
      %909 = vmatprep.mubr.f32.mxu0 0.0
      %910 = vmatmul.mubr.f32.gmra.mxu0 %v820
      %v911 = vpop.f32.mrf.mxu0
      %v912 = vadd.f32 0.0, %v911
      %v913 = vpop.f32.mrf.mxu0
      %914 = vmatprep.mubr.f32.mxu0 0.0
      %915 = vmatmul.mubr.f32.gmra.mxu0 %v823
      %v916 = vpop.f32.mrf.mxu0
      %v917 = vadd.f32 0.0, %v916
      %v918 = vpop.f32.mrf.mxu0
      %919 = vmatprep.mubr.f32.mxu0 0.0
      %920 = vmatmul.mubr.f32.gmra.mxu0 %v826
      %v921 = vpop.f32.mrf.mxu0
      %v922 = vadd.f32 0.0, %v921
      %v923 = vpop.f32.mrf.mxu0
      %924 = vmatprep.mubr.f32.mxu0 0.0
      %925 = vmatmul.mubr.f32.gmra.mxu0 %v829
      %v926 = vpop.f32.mrf.mxu0
      %v927 = vadd.f32 0.0, %v926
      %v928 = vpop.f32.mrf.mxu0
      %929 = vmatprep.mubr.f32.mxu0 0.0
      %930 = vmatmul.mubr.f32.gmra.mxu0 %v832
      %v931 = vpop.f32.mrf.mxu0
      %v932 = vadd.f32 0.0, %v931
      %v933 = vpop.f32.mrf.mxu0
      %934 = vmatprep.mubr.f32.mxu0 0.0
      %935 = vmatmul.mubr.f32.gmra.mxu0 %v835
      %v936 = vpop.f32.mrf.mxu0
      %v937 = vadd.f32 0.0, %v936
      %v938 = vpop.f32.mrf.mxu0
      %939 = vmatprep.mubr.f32.mxu0 0.0
      %940 = vmatmul.mubr.f32.gmra.mxu0 %v838
      %v941 = vpop.f32.mrf.mxu0
      %v942 = vadd.f32 0.0, %v941
      %v943 = vpop.f32.mrf.mxu0
      %944 = vdwg.mxu0
      %v946 = vlaneseq
      %v947 = vshrl.u32 %v946, 7
      %v948 = vsub.s32 0, %v947
      %v949 = vrot.slane %v805, %v948
      %v951 = vmul.f32 %v907, %v949
      %v952 = vmul.f32 %v912, %v949
      %v953 = vmul.f32 %v917, %v949
      %v954 = vmul.f32 %v922, %v949
      %v955 = vmul.f32 %v927, %v949
      %v956 = vmul.f32 %v932, %v949
      %v957 = vmul.f32 %v937, %v949
      %v958 = vmul.f32 %v942, %v949
      %v960 = vlaneseq
      %v961 = vshrl.u32 %v960, 7
      %v962 = vsub.s32 0, %v961
      %v963 = vrot.slane %v806, %v962
      %v965 = vadd.f32 %v951, %v963
      %v966 = vadd.f32 %v952, %v963
      %v967 = vadd.f32 %v953, %v963
      %v968 = vadd.f32 %v954, %v963
      %v969 = vadd.f32 %v955, %v963
      %v970 = vadd.f32 %v956, %v963
      %v971 = vadd.f32 %v957, %v963
      %v972 = vadd.f32 %v958, %v963
      %vm973 = vcmp.ge.f32.partialorder %v965, 0.0
      %vm974 = vcmp.ge.f32.partialorder %v966, 0.0
      %vm975 = vcmp.ge.f32.partialorder %v967, 0.0
      %vm976 = vcmp.ge.f32.partialorder %v968, 0.0
      %vm977 = vcmp.ge.f32.partialorder %v969, 0.0
      %vm978 = vcmp.ge.f32.partialorder %v970, 0.0
      %vm979 = vcmp.ge.f32.partialorder %v971, 0.0
      %vm980 = vcmp.ge.f32.partialorder %v972, 0.0
      %v982 = vlaneseq
      %v983 = vshrl.u32 %v982, 7
      %v984 = vsub.s32 0, %v983
      %v985 = vrot.slane %v807, %v984
      %v987 = vmul.f32 %v985, %v965
      %v988 = vmul.f32 %v985, %v966
      %v989 = vmul.f32 %v985, %v967
      %v990 = vmul.f32 %v985, %v968
      %v991 = vmul.f32 %v985, %v969
      %v992 = vmul.f32 %v985, %v970
      %v993 = vmul.f32 %v985, %v971
      %v994 = vmul.f32 %v985, %v972
      %v995 = vsel %vm973, %v965, %v987
      %v996 = vsel %vm974, %v966, %v988
      %v997 = vsel %vm975, %v967, %v989
      %v998 = vsel %vm976, %v968, %v990
      %v999 = vsel %vm977, %v969, %v991
      %v1000 = vsel %vm978, %v970, %v992
      %v1001 = vsel %vm979, %v971, %v993
      %v1002 = vsel %vm980, %v972, %v994
      %s1003 = scalar_lea.vmem [#allocation2], 32
      %1004 = vst.msk [vmem:[%s1003 + $0x2] sm:$0xff] %vm705, %v995
      %1005 = vst.msk [vmem:[%s1003 + $0x12] sm:$0xff] %vm705, %v996
      %1006 = vst.msk [vmem:[%s1003 + $0x22] sm:$0xff] %vm705, %v997
      %1007 = vst.msk [vmem:[%s1003 + $0x32] sm:$0xff] %vm705, %v998
      %1008 = vst.msk [vmem:[%s1003 + $0x42] sm:$0xff] %vm705, %v999
      %1009 = vst.msk [vmem:[%s1003 + $0x52] sm:$0xff] %vm705, %v1000
      %1010 = vst.msk [vmem:[%s1003 + $0x62] sm:$0xff] %vm705, %v1001
      %1011 = vst.msk [vmem:[%s1003 + $0x72] sm:$0xff] %vm705, %v1002
      %v1012 = vld [vmem:[%s557 + $0x1] sm:$0xff]
      %v1013 = vld [vmem:[%s557 + $0x11] sm:$0xff]
      %v1014 = vld [vmem:[%s557 + $0x21] sm:$0xff]
      %v1015 = vld [vmem:[%s557 + $0x31] sm:$0xff]
      %v1016 = vld [vmem:[%s557 + $0x41] sm:$0xff]
      %v1017 = vld [vmem:[%s557 + $0x51] sm:$0xff]
      %v1018 = vld [vmem:[%s557 + $0x61] sm:$0xff]
      %v1019 = vld [vmem:[%s557 + $0x71] sm:$0xff]
      %v1021 = vsel %vm696, %v1012, 0
      %v1024 = vsel %vm696, %v1013, 0
      %v1027 = vsel %vm696, %v1014, 0
      %v1030 = vsel %vm696, %v1015, 0
      %v1033 = vsel %vm696, %v1016, 0
      %v1036 = vsel %vm696, %v1017, 0
      %v1039 = vsel %vm696, %v1018, 0
      %v1042 = vsel %vm696, %v1019, 0
      %1044 = vmatprep.subr.mxu0 0.0
      %1045 = vmatpush1.msra.mxu0 0.0
      %1046 = vmatprep.subr.mxu0 0.0
      %1047 = vmatpush1.msra.mxu0 0.0
      %1048 = vmatprep.subr.mxu0 0.0
      %1049 = vmatpush1.msra.mxu0 0.0
      %1050 = vmatprep.subr.mxu0 0.0
      %1051 = vmatpush1.msra.mxu0 0.0
      %1052 = vmatprep.subr.mxu0 0.0
      %1053 = vmatpush1.msra.mxu0 0.0
      %1054 = vmatprep.subr.mxu0 0.0
      %1055 = vmatpush1.msra.mxu0 0.0
      %1056 = vmatprep.subr.mxu0 0.0
      %1057 = vmatpush1.msra.mxu0 0.0
      %1058 = vmatprep.subr.mxu0 0.0
      %1059 = vmatpush1.msra.mxu0 0.0
      %1060 = vmatprep.subr.mxu0 0.0
      %1061 = vmatpush1.msra.mxu0 0.0
      %1062 = vmatprep.subr.mxu0 0.0
      %1063 = vmatpush1.msra.mxu0 0.0
      %1064 = vmatprep.subr.mxu0 0.0
      %1065 = vmatpush1.msra.mxu0 0.0
      %1066 = vmatprep.subr.mxu0 0.0
      %1067 = vmatpush1.msra.mxu0 0.0
      %1068 = vmatprep.subr.mxu0 0.0
      %1069 = vmatpush1.msra.mxu0 0.0
      %1070 = vmatprep.subr.mxu0 0.0
      %1071 = vmatpush1.msra.mxu0 0.0
      %1072 = vmatprep.subr.mxu0 0.0
      %1073 = vmatpush1.msra.mxu0 %v804
      %1074 = vmatprep.subr.mxu0 0.0
      %1075 = vmatpush1.msra.mxu0 %v803
      %1076 = vmatprep.subr.mxu0 0.0
      %1077 = vmatpush2.msra.mxu0 0.0
      %1078 = vmatprep.subr.mxu0 0.0
      %1079 = vmatpush2.msra.mxu0 0.0
      %1080 = vmatprep.subr.mxu0 0.0
      %1081 = vmatpush2.msra.mxu0 0.0
      %1082 = vmatprep.subr.mxu0 0.0
      %1083 = vmatpush2.msra.mxu0 0.0
      %1084 = vmatprep.subr.mxu0 0.0
      %1085 = vmatpush2.msra.mxu0 0.0
      %1086 = vmatprep.subr.mxu0 0.0
      %1087 = vmatpush2.msra.mxu0 0.0
      %1088 = vmatprep.subr.mxu0 0.0
      %1089 = vmatpush2.msra.mxu0 0.0
      %1090 = vmatprep.subr.mxu0 0.0
      %1091 = vmatpush2.msra.mxu0 0.0
      %1092 = vmatprep.subr.mxu0 0.0
      %1093 = vmatpush2.msra.mxu0 0.0
      %1094 = vmatprep.subr.mxu0 0.0
      %1095 = vmatpush2.msra.mxu0 0.0
      %1096 = vmatprep.subr.mxu0 0.0
      %1097 = vmatpush2.msra.mxu0 0.0
      %1098 = vmatprep.subr.mxu0 0.0
      %1099 = vmatpush2.msra.mxu0 0.0
      %1100 = vmatprep.subr.mxu0 0.0
      %1101 = vmatpush2.msra.mxu0 0.0
      %1102 = vmatprep.subr.mxu0 0.0
      %1103 = vmatpush2.msra.mxu0 0.0
      %1104 = vmatprep.subr.mxu0 0.0
      %1105 = vmatpush2.msra.mxu0 0.0
      %1106 = vmatprep.subr.mxu0 0.0
      %1107 = vmatpush2.msra.mxu0 0.0
      %1108 = vmatprep.mubr.f32.mxu0 0.0
      %1109 = vmatmul.mubr.f32.gmra.mxu0 %v1021
      %v1110 = vpop.f32.mrf.mxu0
      %v1111 = vadd.f32 0.0, %v1110
      %v1112 = vpop.f32.mrf.mxu0
      %1113 = vmatprep.mubr.f32.mxu0 0.0
      %1114 = vmatmul.mubr.f32.gmra.mxu0 %v1024
      %v1115 = vpop.f32.mrf.mxu0
      %v1116 = vadd.f32 0.0, %v1115
      %v1117 = vpop.f32.mrf.mxu0
      %1118 = vmatprep.mubr.f32.mxu0 0.0
      %1119 = vmatmul.mubr.f32.gmra.mxu0 %v1027
      %v1120 = vpop.f32.mrf.mxu0
      %v1121 = vadd.f32 0.0, %v1120
      %v1122 = vpop.f32.mrf.mxu0
      %1123 = vmatprep.mubr.f32.mxu0 0.0
      %1124 = vmatmul.mubr.f32.gmra.mxu0 %v1030
      %v1125 = vpop.f32.mrf.mxu0
      %v1126 = vadd.f32 0.0, %v1125
      %v1127 = vpop.f32.mrf.mxu0
      %1128 = vmatprep.mubr.f32.mxu0 0.0
      %1129 = vmatmul.mubr.f32.gmra.mxu0 %v1033
      %v1130 = vpop.f32.mrf.mxu0
      %v1131 = vadd.f32 0.0, %v1130
      %v1132 = vpop.f32.mrf.mxu0
      %1133 = vmatprep.mubr.f32.mxu0 0.0
      %1134 = vmatmul.mubr.f32.gmra.mxu0 %v1036
      %v1135 = vpop.f32.mrf.mxu0
      %v1136 = vadd.f32 0.0, %v1135
      %v1137 = vpop.f32.mrf.mxu0
      %1138 = vmatprep.mubr.f32.mxu0 0.0
      %1139 = vmatmul.mubr.f32.gmra.mxu0 %v1039
      %v1140 = vpop.f32.mrf.mxu0
      %v1141 = vadd.f32 0.0, %v1140
      %v1142 = vpop.f32.mrf.mxu0
      %1143 = vmatprep.mubr.f32.mxu0 0.0
      %1144 = vmatmul.mubr.f32.gmra.mxu0 %v1042
      %v1145 = vpop.f32.mrf.mxu0
      %v1146 = vadd.f32 0.0, %v1145
      %v1147 = vpop.f32.mrf.mxu0
      %1148 = vdwg.mxu0
      %v1149 = vmul.f32 %v1111, %v949
      %v1150 = vmul.f32 %v1116, %v949
      %v1151 = vmul.f32 %v1121, %v949
      %v1152 = vmul.f32 %v1126, %v949
      %v1153 = vmul.f32 %v1131, %v949
      %v1154 = vmul.f32 %v1136, %v949
      %v1155 = vmul.f32 %v1141, %v949
      %v1156 = vmul.f32 %v1146, %v949
      %v1157 = vadd.f32 %v1149, %v963
      %v1158 = vadd.f32 %v1150, %v963
      %v1159 = vadd.f32 %v1151, %v963
      %v1160 = vadd.f32 %v1152, %v963
      %v1161 = vadd.f32 %v1153, %v963
      %v1162 = vadd.f32 %v1154, %v963
      %v1163 = vadd.f32 %v1155, %v963
      %v1164 = vadd.f32 %v1156, %v963
      %vm1165 = vcmp.ge.f32.partialorder %v1157, 0.0
      %vm1166 = vcmp.ge.f32.partialorder %v1158, 0.0
      %vm1167 = vcmp.ge.f32.partialorder %v1159, 0.0
      %vm1168 = vcmp.ge.f32.partialorder %v1160, 0.0
      %vm1169 = vcmp.ge.f32.partialorder %v1161, 0.0
      %vm1170 = vcmp.ge.f32.partialorder %v1162, 0.0
      %vm1171 = vcmp.ge.f32.partialorder %v1163, 0.0
      %vm1172 = vcmp.ge.f32.partialorder %v1164, 0.0
      %v1173 = vmul.f32 %v985, %v1157
      %v1174 = vmul.f32 %v985, %v1158
      %v1175 = vmul.f32 %v985, %v1159
      %v1176 = vmul.f32 %v985, %v1160
      %v1177 = vmul.f32 %v985, %v1161
      %v1178 = vmul.f32 %v985, %v1162
      %v1179 = vmul.f32 %v985, %v1163
      %v1180 = vmul.f32 %v985, %v1164
      %v1181 = vsel %vm1165, %v1157, %v1173
      %v1182 = vsel %vm1166, %v1158, %v1174
      %v1183 = vsel %vm1167, %v1159, %v1175
      %v1184 = vsel %vm1168, %v1160, %v1176
      %v1185 = vsel %vm1169, %v1161, %v1177
      %v1186 = vsel %vm1170, %v1162, %v1178
      %v1187 = vsel %vm1171, %v1163, %v1179
      %v1188 = vsel %vm1172, %v1164, %v1180
      %s1189 = scalar_lea.vmem [#allocation2], 224
      %1190 = vst.msk [vmem:[%s1189 + $0x2] sm:$0xff] %vm705, %v1181
      %1191 = vst.msk [vmem:[%s1189 + $0x12] sm:$0xff] %vm705, %v1182
      %1192 = vst.msk [vmem:[%s1189 + $0x22] sm:$0xff] %vm705, %v1183
      %1193 = vst.msk [vmem:[%s1189 + $0x32] sm:$0xff] %vm705, %v1184
      %1194 = vst.msk [vmem:[%s1189 + $0x42] sm:$0xff] %vm705, %v1185
      %1195 = vst.msk [vmem:[%s1189 + $0x52] sm:$0xff] %vm705, %v1186
      %1196 = vst.msk [vmem:[%s1189 + $0x62] sm:$0xff] %vm705, %v1187
      %1197 = vst.msk [vmem:[%s1189 + $0x72] sm:$0xff] %vm705, %v1188
      %v1198 = vld [vmem:[%s624] sm:$0xff]
      %v1199 = vld [vmem:[%s624 + $0x10] sm:$0xff]
      %v1200 = vld [vmem:[%s624 + $0x20] sm:$0xff]
      %v1201 = vld [vmem:[%s624 + $0x30] sm:$0xff]
      %v1202 = vld [vmem:[%s624 + $0x40] sm:$0xff]
      %v1203 = vld [vmem:[%s624 + $0x50] sm:$0xff]
      %v1204 = vld [vmem:[%s624 + $0x60] sm:$0xff]
      %v1205 = vld [vmem:[%s624 + $0x70] sm:$0xff]
      %v1207 = vsel %vm696, %v1198, 0
      %v1210 = vsel %vm696, %v1199, 0
      %v1213 = vsel %vm696, %v1200, 0
      %v1216 = vsel %vm696, %v1201, 0
      %v1219 = vsel %vm696, %v1202, 0
      %v1222 = vsel %vm696, %v1203, 0
      %v1225 = vsel %vm696, %v1204, 0
      %v1228 = vsel %vm696, %v1205, 0
      %1230 = vmatprep.subr.mxu0 0.0
      %1231 = vmatpush1.msra.mxu0 0.0
      %1232 = vmatprep.subr.mxu0 0.0
      %1233 = vmatpush1.msra.mxu0 0.0
      %1234 = vmatprep.subr.mxu0 0.0
      %1235 = vmatpush1.msra.mxu0 0.0
      %1236 = vmatprep.subr.mxu0 0.0
      %1237 = vmatpush1.msra.mxu0 0.0
      %1238 = vmatprep.subr.mxu0 0.0
      %1239 = vmatpush1.msra.mxu0 0.0
      %1240 = vmatprep.subr.mxu0 0.0
      %1241 = vmatpush1.msra.mxu0 0.0
      %1242 = vmatprep.subr.mxu0 0.0
      %1243 = vmatpush1.msra.mxu0 0.0
      %1244 = vmatprep.subr.mxu0 0.0
      %1245 = vmatpush1.msra.mxu0 0.0
      %1246 = vmatprep.subr.mxu0 0.0
      %1247 = vmatpush1.msra.mxu0 0.0
      %1248 = vmatprep.subr.mxu0 0.0
      %1249 = vmatpush1.msra.mxu0 0.0
      %1250 = vmatprep.subr.mxu0 0.0
      %1251 = vmatpush1.msra.mxu0 0.0
      %1252 = vmatprep.subr.mxu0 0.0
      %1253 = vmatpush1.msra.mxu0 0.0
      %1254 = vmatprep.subr.mxu0 0.0
      %1255 = vmatpush1.msra.mxu0 0.0
      %1256 = vmatprep.subr.mxu0 0.0
      %1257 = vmatpush1.msra.mxu0 0.0
      %1258 = vmatprep.subr.mxu0 0.0
      %1259 = vmatpush1.msra.mxu0 %v804
      %1260 = vmatprep.subr.mxu0 0.0
      %1261 = vmatpush1.msra.mxu0 %v803
      %1262 = vmatprep.subr.mxu0 0.0
      %1263 = vmatpush2.msra.mxu0 0.0
      %1264 = vmatprep.subr.mxu0 0.0
      %1265 = vmatpush2.msra.mxu0 0.0
      %1266 = vmatprep.subr.mxu0 0.0
      %1267 = vmatpush2.msra.mxu0 0.0
      %1268 = vmatprep.subr.mxu0 0.0
      %1269 = vmatpush2.msra.mxu0 0.0
      %1270 = vmatprep.subr.mxu0 0.0
      %1271 = vmatpush2.msra.mxu0 0.0
      %1272 = vmatprep.subr.mxu0 0.0
      %1273 = vmatpush2.msra.mxu0 0.0
      %1274 = vmatprep.subr.mxu0 0.0
      %1275 = vmatpush2.msra.mxu0 0.0
      %1276 = vmatprep.subr.mxu0 0.0
      %1277 = vmatpush2.msra.mxu0 0.0
      %1278 = vmatprep.subr.mxu0 0.0
      %1279 = vmatpush2.msra.mxu0 0.0
      %1280 = vmatprep.subr.mxu0 0.0
      %1281 = vmatpush2.msra.mxu0 0.0
      %1282 = vmatprep.subr.mxu0 0.0
      %1283 = vmatpush2.msra.mxu0 0.0
      %1284 = vmatprep.subr.mxu0 0.0
      %1285 = vmatpush2.msra.mxu0 0.0
      %1286 = vmatprep.subr.mxu0 0.0
      %1287 = vmatpush2.msra.mxu0 0.0
      %1288 = vmatprep.subr.mxu0 0.0
      %1289 = vmatpush2.msra.mxu0 0.0
      %1290 = vmatprep.subr.mxu0 0.0
      %1291 = vmatpush2.msra.mxu0 0.0
      %1292 = vmatprep.subr.mxu0 0.0
      %1293 = vmatpush2.msra.mxu0 0.0
      %1294 = vmatprep.mubr.f32.mxu0 0.0
      %1295 = vmatmul.mubr.f32.gmra.mxu0 %v1207
      %v1296 = vpop.f32.mrf.mxu0
      %v1297 = vadd.f32 0.0, %v1296
      %v1298 = vpop.f32.mrf.mxu0
      %1299 = vmatprep.mubr.f32.mxu0 0.0
      %1300 = vmatmul.mubr.f32.gmra.mxu0 %v1210
      %v1301 = vpop.f32.mrf.mxu0
      %v1302 = vadd.f32 0.0, %v1301
      %v1303 = vpop.f32.mrf.mxu0
      %1304 = vmatprep.mubr.f32.mxu0 0.0
      %1305 = vmatmul.mubr.f32.gmra.mxu0 %v1213
      %v1306 = vpop.f32.mrf.mxu0
      %v1307 = vadd.f32 0.0, %v1306
      %v1308 = vpop.f32.mrf.mxu0
      %1309 = vmatprep.mubr.f32.mxu0 0.0
      %1310 = vmatmul.mubr.f32.gmra.mxu0 %v1216
      %v1311 = vpop.f32.mrf.mxu0
      %v1312 = vadd.f32 0.0, %v1311
      %v1313 = vpop.f32.mrf.mxu0
      %1314 = vmatprep.mubr.f32.mxu0 0.0
      %1315 = vmatmul.mubr.f32.gmra.mxu0 %v1219
      %v1316 = vpop.f32.mrf.mxu0
      %v1317 = vadd.f32 0.0, %v1316
      %v1318 = vpop.f32.mrf.mxu0
      %1319 = vmatprep.mubr.f32.mxu0 0.0
      %1320 = vmatmul.mubr.f32.gmra.mxu0 %v1222
      %v1321 = vpop.f32.mrf.mxu0
      %v1322 = vadd.f32 0.0, %v1321
      %v1323 = vpop.f32.mrf.mxu0
      %1324 = vmatprep.mubr.f32.mxu0 0.0
      %1325 = vmatmul.mubr.f32.gmra.mxu0 %v1225
      %v1326 = vpop.f32.mrf.mxu0
      %v1327 = vadd.f32 0.0, %v1326
      %v1328 = vpop.f32.mrf.mxu0
      %1329 = vmatprep.mubr.f32.mxu0 0.0
      %1330 = vmatmul.mubr.f32.gmra.mxu0 %v1228
      %v1331 = vpop.f32.mrf.mxu0
      %v1332 = vadd.f32 0.0, %v1331
      %v1333 = vpop.f32.mrf.mxu0
      %1334 = vdwg.mxu0
      %v1335 = vmul.f32 %v1297, %v949
      %v1336 = vmul.f32 %v1302, %v949
      %v1337 = vmul.f32 %v1307, %v949
      %v1338 = vmul.f32 %v1312, %v949
      %v1339 = vmul.f32 %v1317, %v949
      %v1340 = vmul.f32 %v1322, %v949
      %v1341 = vmul.f32 %v1327, %v949
      %v1342 = vmul.f32 %v1332, %v949
      %v1343 = vadd.f32 %v1335, %v963
      %v1344 = vadd.f32 %v1336, %v963
      %v1345 = vadd.f32 %v1337, %v963
      %v1346 = vadd.f32 %v1338, %v963
      %v1347 = vadd.f32 %v1339, %v963
      %v1348 = vadd.f32 %v1340, %v963
      %v1349 = vadd.f32 %v1341, %v963
      %v1350 = vadd.f32 %v1342, %v963
      %vm1351 = vcmp.ge.f32.partialorder %v1343, 0.0
      %vm1352 = vcmp.ge.f32.partialorder %v1344, 0.0
      %vm1353 = vcmp.ge.f32.partialorder %v1345, 0.0
      %vm1354 = vcmp.ge.f32.partialorder %v1346, 0.0
      %vm1355 = vcmp.ge.f32.partialorder %v1347, 0.0
      %vm1356 = vcmp.ge.f32.partialorder %v1348, 0.0
      %vm1357 = vcmp.ge.f32.partialorder %v1349, 0.0
      %vm1358 = vcmp.ge.f32.partialorder %v1350, 0.0
      %v1359 = vmul.f32 %v985, %v1343
      %v1360 = vmul.f32 %v985, %v1344
      %v1361 = vmul.f32 %v985, %v1345
      %v1362 = vmul.f32 %v985, %v1346
      %v1363 = vmul.f32 %v985, %v1347
      %v1364 = vmul.f32 %v985, %v1348
      %v1365 = vmul.f32 %v985, %v1349
      %v1366 = vmul.f32 %v985, %v1350
      %v1367 = vsel %vm1351, %v1343, %v1359
      %v1368 = vsel %vm1352, %v1344, %v1360
      %v1369 = vsel %vm1353, %v1345, %v1361
      %v1370 = vsel %vm1354, %v1346, %v1362
      %v1371 = vsel %vm1355, %v1347, %v1363
      %v1372 = vsel %vm1356, %v1348, %v1364
      %v1373 = vsel %vm1357, %v1349, %v1365
      %v1374 = vsel %vm1358, %v1350, %v1366
      %s1375 = scalar_lea.vmem [#allocation2], 416
      %1376 = vst.msk [vmem:[%s1375 + $0x2] sm:$0xff] %vm705, %v1367
      %1377 = vst.msk [vmem:[%s1375 + $0x12] sm:$0xff] %vm705, %v1368
      %1378 = vst.msk [vmem:[%s1375 + $0x22] sm:$0xff] %vm705, %v1369
      %1379 = vst.msk [vmem:[%s1375 + $0x32] sm:$0xff] %vm705, %v1370
      %1380 = vst.msk [vmem:[%s1375 + $0x42] sm:$0xff] %vm705, %v1371
      %1381 = vst.msk [vmem:[%s1375 + $0x52] sm:$0xff] %vm705, %v1372
      %1382 = vst.msk [vmem:[%s1375 + $0x62] sm:$0xff] %vm705, %v1373
      %1383 = vst.msk [vmem:[%s1375 + $0x72] sm:$0xff] %vm705, %v1374
      %v1384 = vld [vmem:[%s607 + $0x1] sm:$0xff]
      %v1385 = vld [vmem:[%s607 + $0x11] sm:$0xff]
      %v1386 = vld [vmem:[%s607 + $0x21] sm:$0xff]
      %v1387 = vld [vmem:[%s607 + $0x31] sm:$0xff]
      %v1388 = vld [vmem:[%s607 + $0x41] sm:$0xff]
      %v1389 = vld [vmem:[%s607 + $0x51] sm:$0xff]
      %v1390 = vld [vmem:[%s607 + $0x61] sm:$0xff]
      %v1391 = vld [vmem:[%s607 + $0x71] sm:$0xff]
      %v1393 = vsel %vm696, %v1384, 0
      %v1396 = vsel %vm696, %v1385, 0
      %v1399 = vsel %vm696, %v1386, 0
      %v1402 = vsel %vm696, %v1387, 0
      %v1405 = vsel %vm696, %v1388, 0
      %v1408 = vsel %vm696, %v1389, 0
      %v1411 = vsel %vm696, %v1390, 0
      %v1414 = vsel %vm696, %v1391, 0
      %1416 = vmatprep.subr.mxu0 0.0
      %1417 = vmatpush1.msra.mxu0 0.0
      %1418 = vmatprep.subr.mxu0 0.0
      %1419 = vmatpush1.msra.mxu0 0.0
      %1420 = vmatprep.subr.mxu0 0.0
      %1421 = vmatpush1.msra.mxu0 0.0
      %1422 = vmatprep.subr.mxu0 0.0
      %1423 = vmatpush1.msra.mxu0 0.0
      %1424 = vmatprep.subr.mxu0 0.0
      %1425 = vmatpush1.msra.mxu0 0.0
      %1426 = vmatprep.subr.mxu0 0.0
      %1427 = vmatpush1.msra.mxu0 0.0
      %1428 = vmatprep.subr.mxu0 0.0
      %1429 = vmatpush1.msra.mxu0 0.0
      %1430 = vmatprep.subr.mxu0 0.0
      %1431 = vmatpush1.msra.mxu0 0.0
      %1432 = vmatprep.subr.mxu0 0.0
      %1433 = vmatpush1.msra.mxu0 0.0
      %1434 = vmatprep.subr.mxu0 0.0
      %1435 = vmatpush1.msra.mxu0 0.0
      %1436 = vmatprep.subr.mxu0 0.0
      %1437 = vmatpush1.msra.mxu0 0.0
      %1438 = vmatprep.subr.mxu0 0.0
      %1439 = vmatpush1.msra.mxu0 0.0
      %1440 = vmatprep.subr.mxu0 0.0
      %1441 = vmatpush1.msra.mxu0 0.0
      %1442 = vmatprep.subr.mxu0 0.0
      %1443 = vmatpush1.msra.mxu0 0.0
      %1444 = vmatprep.subr.mxu0 0.0
      %1445 = vmatpush1.msra.mxu0 %v804
      %1446 = vmatprep.subr.mxu0 0.0
      %1447 = vmatpush1.msra.mxu0 %v803
      %1448 = vmatprep.subr.mxu0 0.0
      %1449 = vmatpush2.msra.mxu0 0.0
      %1450 = vmatprep.subr.mxu0 0.0
      %1451 = vmatpush2.msra.mxu0 0.0
      %1452 = vmatprep.subr.mxu0 0.0
      %1453 = vmatpush2.msra.mxu0 0.0
      %1454 = vmatprep.subr.mxu0 0.0
      %1455 = vmatpush2.msra.mxu0 0.0
      %1456 = vmatprep.subr.mxu0 0.0
      %1457 = vmatpush2.msra.mxu0 0.0
      %1458 = vmatprep.subr.mxu0 0.0
      %1459 = vmatpush2.msra.mxu0 0.0
      %1460 = vmatprep.subr.mxu0 0.0
      %1461 = vmatpush2.msra.mxu0 0.0
      %1462 = vmatprep.subr.mxu0 0.0
      %1463 = vmatpush2.msra.mxu0 0.0
      %1464 = vmatprep.subr.mxu0 0.0
      %1465 = vmatpush2.msra.mxu0 0.0
      %1466 = vmatprep.subr.mxu0 0.0
      %1467 = vmatpush2.msra.mxu0 0.0
      %1468 = vmatprep.subr.mxu0 0.0
      %1469 = vmatpush2.msra.mxu0 0.0
      %1470 = vmatprep.subr.mxu0 0.0
      %1471 = vmatpush2.msra.mxu0 0.0
      %1472 = vmatprep.subr.mxu0 0.0
      %1473 = vmatpush2.msra.mxu0 0.0
      %1474 = vmatprep.subr.mxu0 0.0
      %1475 = vmatpush2.msra.mxu0 0.0
      %1476 = vmatprep.subr.mxu0 0.0
      %1477 = vmatpush2.msra.mxu0 0.0
      %1478 = vmatprep.subr.mxu0 0.0
      %1479 = vmatpush2.msra.mxu0 0.0
      %1480 = vmatprep.mubr.f32.mxu0 0.0
      %1481 = vmatmul.mubr.f32.gmra.mxu0 %v1393
      %v1482 = vpop.f32.mrf.mxu0
      %v1483 = vadd.f32 0.0, %v1482
      %v1484 = vpop.f32.mrf.mxu0
      %1485 = vmatprep.mubr.f32.mxu0 0.0
      %1486 = vmatmul.mubr.f32.gmra.mxu0 %v1396
      %v1487 = vpop.f32.mrf.mxu0
      %v1488 = vadd.f32 0.0, %v1487
      %v1489 = vpop.f32.mrf.mxu0
      %1490 = vmatprep.mubr.f32.mxu0 0.0
      %1491 = vmatmul.mubr.f32.gmra.mxu0 %v1399
      %v1492 = vpop.f32.mrf.mxu0
      %v1493 = vadd.f32 0.0, %v1492
      %v1494 = vpop.f32.mrf.mxu0
      %1495 = vmatprep.mubr.f32.mxu0 0.0
      %1496 = vmatmul.mubr.f32.gmra.mxu0 %v1402
      %v1497 = vpop.f32.mrf.mxu0
      %v1498 = vadd.f32 0.0, %v1497
      %v1499 = vpop.f32.mrf.mxu0
      %1500 = vmatprep.mubr.f32.mxu0 0.0
      %1501 = vmatmul.mubr.f32.gmra.mxu0 %v1405
      %v1502 = vpop.f32.mrf.mxu0
      %v1503 = vadd.f32 0.0, %v1502
      %v1504 = vpop.f32.mrf.mxu0
      %1505 = vmatprep.mubr.f32.mxu0 0.0
      %1506 = vmatmul.mubr.f32.gmra.mxu0 %v1408
      %v1507 = vpop.f32.mrf.mxu0
      %v1508 = vadd.f32 0.0, %v1507
      %v1509 = vpop.f32.mrf.mxu0
      %1510 = vmatprep.mubr.f32.mxu0 0.0
      %1511 = vmatmul.mubr.f32.gmra.mxu0 %v1411
      %v1512 = vpop.f32.mrf.mxu0
      %v1513 = vadd.f32 0.0, %v1512
      %v1514 = vpop.f32.mrf.mxu0
      %1515 = vmatprep.mubr.f32.mxu0 0.0
      %1516 = vmatmul.mubr.f32.gmra.mxu0 %v1414
      %v1517 = vpop.f32.mrf.mxu0
      %v1518 = vadd.f32 0.0, %v1517
      %v1519 = vpop.f32.mrf.mxu0
      %1520 = vdwg.mxu0
      %v1521 = vmul.f32 %v1483, %v949
      %v1522 = vmul.f32 %v1488, %v949
      %v1523 = vmul.f32 %v1493, %v949
      %v1524 = vmul.f32 %v1498, %v949
      %v1525 = vmul.f32 %v1503, %v949
      %v1526 = vmul.f32 %v1508, %v949
      %v1527 = vmul.f32 %v1513, %v949
      %v1528 = vmul.f32 %v1518, %v949
      %v1529 = vadd.f32 %v1521, %v963
      %v1530 = vadd.f32 %v1522, %v963
      %v1531 = vadd.f32 %v1523, %v963
      %v1532 = vadd.f32 %v1524, %v963
      %v1533 = vadd.f32 %v1525, %v963
      %v1534 = vadd.f32 %v1526, %v963
      %v1535 = vadd.f32 %v1527, %v963
      %v1536 = vadd.f32 %v1528, %v963
      %vm1537 = vcmp.ge.f32.partialorder %v1529, 0.0
      %vm1538 = vcmp.ge.f32.partialorder %v1530, 0.0
      %vm1539 = vcmp.ge.f32.partialorder %v1531, 0.0
      %vm1540 = vcmp.ge.f32.partialorder %v1532, 0.0
      %vm1541 = vcmp.ge.f32.partialorder %v1533, 0.0
      %vm1542 = vcmp.ge.f32.partialorder %v1534, 0.0
      %vm1543 = vcmp.ge.f32.partialorder %v1535, 0.0
      %vm1544 = vcmp.ge.f32.partialorder %v1536, 0.0
      %v1545 = vmul.f32 %v985, %v1529
      %v1546 = vmul.f32 %v985, %v1530
      %v1547 = vmul.f32 %v985, %v1531
      %v1548 = vmul.f32 %v985, %v1532
      %v1549 = vmul.f32 %v985, %v1533
      %v1550 = vmul.f32 %v985, %v1534
      %v1551 = vmul.f32 %v985, %v1535
      %v1552 = vmul.f32 %v985, %v1536
      %v1553 = vsel %vm1537, %v1529, %v1545
      %v1554 = vsel %vm1538, %v1530, %v1546
      %v1555 = vsel %vm1539, %v1531, %v1547
      %v1556 = vsel %vm1540, %v1532, %v1548
      %v1557 = vsel %vm1541, %v1533, %v1549
      %v1558 = vsel %vm1542, %v1534, %v1550
      %v1559 = vsel %vm1543, %v1535, %v1551
      %v1560 = vsel %vm1544, %v1536, %v1552
      %s1561 = scalar_lea.vmem [#allocation2], 608
      %1562 = vst.msk [vmem:[%s1561 + $0x2] sm:$0xff] %vm705, %v1553
      %1563 = vst.msk [vmem:[%s1561 + $0x12] sm:$0xff] %vm705, %v1554
      %1564 = vst.msk [vmem:[%s1561 + $0x22] sm:$0xff] %vm705, %v1555
      %1565 = vst.msk [vmem:[%s1561 + $0x32] sm:$0xff] %vm705, %v1556
      %1566 = vst.msk [vmem:[%s1561 + $0x42] sm:$0xff] %vm705, %v1557
      %1567 = vst.msk [vmem:[%s1561 + $0x52] sm:$0xff] %vm705, %v1558
      %1568 = vst.msk [vmem:[%s1561 + $0x62] sm:$0xff] %vm705, %v1559
      %1569 = vst.msk [vmem:[%s1561 + $0x72] sm:$0xff] %vm705, %v1560
      %v1570 = vld [vmem:[%s5] sm:$0xff]
      %v1571 = vld [vmem:[%s5 + $0x8] sm:$0x1]
      %v1572 = vld [vmem:[%s5 + $0x10] sm:$0xff]
      %v1573 = vld [vmem:[%s5 + $0x18] sm:$0x1]
      %v1574 = vld [vmem:[%s5 + $0x20] sm:$0xff]
      %v1575 = vld [vmem:[%s5 + $0x28] sm:$0x1]
      %v1576 = vld [vmem:[%s5 + $0x30] sm:$0xff]
      %v1577 = vld [vmem:[%s5 + $0x38] sm:$0x1]
      %v1578 = vld [vmem:[%s9] sm:$0xff]
      %v1579 = vld [vmem:[%s9 + $0x8] sm:$0xff]
      %v1580 = vld [vmem:[%s9 + $0x10] sm:$0xff]
      %v1581 = vld [vmem:[%s9 + $0x18] sm:$0xff]
      %v1582 = vld [vmem:[%s6] sm:$0x1]
      %v1583 = vld [vmem:[%s7] sm:$0x1]
      %v1584 = vld [vmem:[%s8] sm:$0x1]
      %v1585 = vld [vmem:[%s10] sm:$0x1]
      %v1586 = vld [vmem:[%s11] sm:$0x1]
      %v1587 = vld [vmem:[%s13] sm:$0x1]
      %s1588 = scalar_lea.vmem [#allocation2], 592
      %v1589 = vld [vmem:[%s1588 + $0x1] sm:$0xff]
      %v1590 = vld [vmem:[%s1588 + $0x11] sm:$0xff]
      %v1591 = vld [vmem:[%s1588 + $0x21] sm:$0xff]
      %v1592 = vld [vmem:[%s1588 + $0x31] sm:$0xff]
      %v1593 = vld [vmem:[%s1588 + $0x41] sm:$0xff]
      %v1594 = vld [vmem:[%s1588 + $0x51] sm:$0xff]
      %v1595 = vld [vmem:[%s1588 + $0x61] sm:$0xff]
      %v1596 = vld [vmem:[%s1588 + $0x71] sm:$0xff]
      %v1597 = vlaneseq
      %v1598 = vshrl.u32 %v1597, 7
      %v1599 = vsub.s32 0, %v1598
      %v1600 = vrot.slane %v1570, %v1599
      %v1601 = vmul.f32 %v1589, %v1600
      %v1602 = vmul.f32 %v1590, %v1600
      %v1603 = vmul.f32 %v1591, %v1600
      %v1604 = vmul.f32 %v1592, %v1600
      %v1605 = vmul.f32 %v1593, %v1600
      %v1606 = vmul.f32 %v1594, %v1600
      %v1607 = vmul.f32 %v1595, %v1600
      %v1608 = vmul.f32 %v1596, %v1600
      %v1609 = vadd.f32 %v1601, 0.0
      %v1610 = vadd.f32 %v1602, 0.0
      %v1611 = vadd.f32 %v1603, 0.0
      %v1612 = vadd.f32 %v1604, 0.0
      %v1613 = vadd.f32 %v1605, 0.0
      %v1614 = vadd.f32 %v1606, 0.0
      %v1615 = vadd.f32 %v1607, 0.0
      %v1616 = vadd.f32 %v1608, 0.0
      %s1617 = scalar_lea.vmem [#allocation2], 400
      %v1618 = vld [vmem:[%s1617 + $0x2] sm:$0xff]
      %v1619 = vld [vmem:[%s1617 + $0x12] sm:$0xff]
      %v1620 = vld [vmem:[%s1617 + $0x22] sm:$0xff]
      %v1621 = vld [vmem:[%s1617 + $0x32] sm:$0xff]
      %v1622 = vld [vmem:[%s1617 + $0x42] sm:$0xff]
      %v1623 = vld [vmem:[%s1617 + $0x52] sm:$0xff]
      %v1624 = vld [vmem:[%s1617 + $0x62] sm:$0xff]
      %v1625 = vld [vmem:[%s1617 + $0x72] sm:$0xff]
      %v1626 = vlaneseq
      %v1627 = vshrl.u32 %v1626, 7
      %v1628 = vsub.s32 1, %v1627
      %v1629 = vrot.slane %v1570, %v1628
      %v1630 = vmul.f32 %v1618, %v1629
      %v1631 = vmul.f32 %v1619, %v1629
      %v1632 = vmul.f32 %v1620, %v1629
      %v1633 = vmul.f32 %v1621, %v1629
      %v1634 = vmul.f32 %v1622, %v1629
      %v1635 = vmul.f32 %v1623, %v1629
      %v1636 = vmul.f32 %v1624, %v1629
      %v1637 = vmul.f32 %v1625, %v1629
      %v1638 = vadd.f32 %v1609, %v1630
      %v1639 = vadd.f32 %v1610, %v1631
      %v1640 = vadd.f32 %v1611, %v1632
      %v1641 = vadd.f32 %v1612, %v1633
      %v1642 = vadd.f32 %v1613, %v1634
      %v1643 = vadd.f32 %v1614, %v1635
      %v1644 = vadd.f32 %v1615, %v1636
      %v1645 = vadd.f32 %v1616, %v1637
      %v1646 = vld [vmem:[%s1588 + $0x2] sm:$0xff]
      %v1647 = vld [vmem:[%s1588 + $0x12] sm:$0xff]
      %v1648 = vld [vmem:[%s1588 + $0x22] sm:$0xff]
      %v1649 = vld [vmem:[%s1588 + $0x32] sm:$0xff]
      %v1650 = vld [vmem:[%s1588 + $0x42] sm:$0xff]
      %v1651 = vld [vmem:[%s1588 + $0x52] sm:$0xff]
      %v1652 = vld [vmem:[%s1588 + $0x62] sm:$0xff]
      %v1653 = vld [vmem:[%s1588 + $0x72] sm:$0xff]
      %v1654 = vlaneseq
      %v1655 = vshrl.u32 %v1654, 7
      %v1656 = vsub.s32 2, %v1655
      %v1657 = vrot.slane %v1570, %v1656
      %v1658 = vmul.f32 %v1646, %v1657
      %v1659 = vmul.f32 %v1647, %v1657
      %v1660 = vmul.f32 %v1648, %v1657
      %v1661 = vmul.f32 %v1649, %v1657
      %v1662 = vmul.f32 %v1650, %v1657
      %v1663 = vmul.f32 %v1651, %v1657
      %v1664 = vmul.f32 %v1652, %v1657
      %v1665 = vmul.f32 %v1653, %v1657
      %v1666 = vadd.f32 %v1638, %v1658
      %v1667 = vadd.f32 %v1639, %v1659
      %v1668 = vadd.f32 %v1640, %v1660
      %v1669 = vadd.f32 %v1641, %v1661
      %v1670 = vadd.f32 %v1642, %v1662
      %v1671 = vadd.f32 %v1643, %v1663
      %v1672 = vadd.f32 %v1644, %v1664
      %v1673 = vadd.f32 %v1645, %v1665
      %v1674 = vld [vmem:[%s1189 + $0x1] sm:$0xff]
      %v1675 = vld [vmem:[%s1189 + $0x11] sm:$0xff]
      %v1676 = vld [vmem:[%s1189 + $0x21] sm:$0xff]
      %v1677 = vld [vmem:[%s1189 + $0x31] sm:$0xff]
      %v1678 = vld [vmem:[%s1189 + $0x41] sm:$0xff]
      %v1679 = vld [vmem:[%s1189 + $0x51] sm:$0xff]
      %v1680 = vld [vmem:[%s1189 + $0x61] sm:$0xff]
      %v1681 = vld [vmem:[%s1189 + $0x71] sm:$0xff]
      %v1682 = vlaneseq
      %v1683 = vshrl.u32 %v1682, 7
      %v1684 = vsub.s32 3, %v1683
      %v1685 = vrot.slane %v1570, %v1684
      %v1686 = vmul.f32 %v1674, %v1685
      %v1687 = vmul.f32 %v1675, %v1685
      %v1688 = vmul.f32 %v1676, %v1685
      %v1689 = vmul.f32 %v1677, %v1685
      %v1690 = vmul.f32 %v1678, %v1685
      %v1691 = vmul.f32 %v1679, %v1685
      %v1692 = vmul.f32 %v1680, %v1685
      %v1693 = vmul.f32 %v1681, %v1685
      %v1694 = vadd.f32 %v1666, %v1686
      %v1695 = vadd.f32 %v1667, %v1687
      %v1696 = vadd.f32 %v1668, %v1688
      %v1697 = vadd.f32 %v1669, %v1689
      %v1698 = vadd.f32 %v1670, %v1690
      %v1699 = vadd.f32 %v1671, %v1691
      %v1700 = vadd.f32 %v1672, %v1692
      %v1701 = vadd.f32 %v1673, %v1693
      %v1702 = vld [vmem:[%s1003 + $0x2] sm:$0xff]
      %v1703 = vld [vmem:[%s1003 + $0x12] sm:$0xff]
      %v1704 = vld [vmem:[%s1003 + $0x22] sm:$0xff]
      %v1705 = vld [vmem:[%s1003 + $0x32] sm:$0xff]
      %v1706 = vld [vmem:[%s1003 + $0x42] sm:$0xff]
      %v1707 = vld [vmem:[%s1003 + $0x52] sm:$0xff]
      %v1708 = vld [vmem:[%s1003 + $0x62] sm:$0xff]
      %v1709 = vld [vmem:[%s1003 + $0x72] sm:$0xff]
      %v1710 = vlaneseq
      %v1711 = vshrl.u32 %v1710, 7
      %v1712 = vsub.s32 4, %v1711
      %v1713 = vrot.slane %v1570, %v1712
      %v1714 = vmul.f32 %v1702, %v1713
      %v1715 = vmul.f32 %v1703, %v1713
      %v1716 = vmul.f32 %v1704, %v1713
      %v1717 = vmul.f32 %v1705, %v1713
      %v1718 = vmul.f32 %v1706, %v1713
      %v1719 = vmul.f32 %v1707, %v1713
      %v1720 = vmul.f32 %v1708, %v1713
      %v1721 = vmul.f32 %v1709, %v1713
      %v1722 = vadd.f32 %v1694, %v1714
      %v1723 = vadd.f32 %v1695, %v1715
      %v1724 = vadd.f32 %v1696, %v1716
      %v1725 = vadd.f32 %v1697, %v1717
      %v1726 = vadd.f32 %v1698, %v1718
      %v1727 = vadd.f32 %v1699, %v1719
      %v1728 = vadd.f32 %v1700, %v1720
      %v1729 = vadd.f32 %v1701, %v1721
      %v1730 = vld [vmem:[%s1189 + $0x2] sm:$0xff]
      %v1731 = vld [vmem:[%s1189 + $0x12] sm:$0xff]
      %v1732 = vld [vmem:[%s1189 + $0x22] sm:$0xff]
      %v1733 = vld [vmem:[%s1189 + $0x32] sm:$0xff]
      %v1734 = vld [vmem:[%s1189 + $0x42] sm:$0xff]
      %v1735 = vld [vmem:[%s1189 + $0x52] sm:$0xff]
      %v1736 = vld [vmem:[%s1189 + $0x62] sm:$0xff]
      %v1737 = vld [vmem:[%s1189 + $0x72] sm:$0xff]
      %v1738 = vlaneseq
      %v1739 = vshrl.u32 %v1738, 7
      %v1740 = vsub.s32 5, %v1739
      %v1741 = vrot.slane %v1570, %v1740
      %v1742 = vmul.f32 %v1730, %v1741
      %v1743 = vmul.f32 %v1731, %v1741
      %v1744 = vmul.f32 %v1732, %v1741
      %v1745 = vmul.f32 %v1733, %v1741
      %v1746 = vmul.f32 %v1734, %v1741
      %v1747 = vmul.f32 %v1735, %v1741
      %v1748 = vmul.f32 %v1736, %v1741
      %v1749 = vmul.f32 %v1737, %v1741
      %v1750 = vadd.f32 %v1722, %v1742
      %v1751 = vadd.f32 %v1723, %v1743
      %v1752 = vadd.f32 %v1724, %v1744
      %v1753 = vadd.f32 %v1725, %v1745
      %v1754 = vadd.f32 %v1726, %v1746
      %v1755 = vadd.f32 %v1727, %v1747
      %v1756 = vadd.f32 %v1728, %v1748
      %v1757 = vadd.f32 %v1729, %v1749
      %v1758 = vld [vmem:[%s1561 + $0x1] sm:$0xff]
      %v1759 = vld [vmem:[%s1561 + $0x11] sm:$0xff]
      %v1760 = vld [vmem:[%s1561 + $0x21] sm:$0xff]
      %v1761 = vld [vmem:[%s1561 + $0x31] sm:$0xff]
      %v1762 = vld [vmem:[%s1561 + $0x41] sm:$0xff]
      %v1763 = vld [vmem:[%s1561 + $0x51] sm:$0xff]
      %v1764 = vld [vmem:[%s1561 + $0x61] sm:$0xff]
      %v1765 = vld [vmem:[%s1561 + $0x71] sm:$0xff]
      %v1766 = vlaneseq
      %v1767 = vshrl.u32 %v1766, 7
      %v1768 = vsub.s32 6, %v1767
      %v1769 = vrot.slane %v1570, %v1768
      %v1770 = vmul.f32 %v1758, %v1769
      %v1771 = vmul.f32 %v1759, %v1769
      %v1772 = vmul.f32 %v1760, %v1769
      %v1773 = vmul.f32 %v1761, %v1769
      %v1774 = vmul.f32 %v1762, %v1769
      %v1775 = vmul.f32 %v1763, %v1769
      %v1776 = vmul.f32 %v1764, %v1769
      %v1777 = vmul.f32 %v1765, %v1769
      %v1778 = vadd.f32 %v1750, %v1770
      %v1779 = vadd.f32 %v1751, %v1771
      %v1780 = vadd.f32 %v1752, %v1772
      %v1781 = vadd.f32 %v1753, %v1773
      %v1782 = vadd.f32 %v1754, %v1774
      %v1783 = vadd.f32 %v1755, %v1775
      %v1784 = vadd.f32 %v1756, %v1776
      %v1785 = vadd.f32 %v1757, %v1777
      %v1786 = vld [vmem:[%s1375 + $0x2] sm:$0xff]
      %v1787 = vld [vmem:[%s1375 + $0x12] sm:$0xff]
      %v1788 = vld [vmem:[%s1375 + $0x22] sm:$0xff]
      %v1789 = vld [vmem:[%s1375 + $0x32] sm:$0xff]
      %v1790 = vld [vmem:[%s1375 + $0x42] sm:$0xff]
      %v1791 = vld [vmem:[%s1375 + $0x52] sm:$0xff]
      %v1792 = vld [vmem:[%s1375 + $0x62] sm:$0xff]
      %v1793 = vld [vmem:[%s1375 + $0x72] sm:$0xff]
      %v1794 = vlaneseq
      %v1795 = vshrl.u32 %v1794, 7
      %v1796 = vsub.s32 7, %v1795
      %v1797 = vrot.slane %v1570, %v1796
      %v1798 = vmul.f32 %v1786, %v1797
      %v1799 = vmul.f32 %v1787, %v1797
      %v1800 = vmul.f32 %v1788, %v1797
      %v1801 = vmul.f32 %v1789, %v1797
      %v1802 = vmul.f32 %v1790, %v1797
      %v1803 = vmul.f32 %v1791, %v1797
      %v1804 = vmul.f32 %v1792, %v1797
      %v1805 = vmul.f32 %v1793, %v1797
      %v1806 = vadd.f32 %v1778, %v1798
      %v1807 = vadd.f32 %v1779, %v1799
      %v1808 = vadd.f32 %v1780, %v1800
      %v1809 = vadd.f32 %v1781, %v1801
      %v1810 = vadd.f32 %v1782, %v1802
      %v1811 = vadd.f32 %v1783, %v1803
      %v1812 = vadd.f32 %v1784, %v1804
      %v1813 = vadd.f32 %v1785, %v1805
      %v1814 = vld [vmem:[%s1561 + $0x2] sm:$0xff]
      %v1815 = vld [vmem:[%s1561 + $0x12] sm:$0xff]
      %v1816 = vld [vmem:[%s1561 + $0x22] sm:$0xff]
      %v1817 = vld [vmem:[%s1561 + $0x32] sm:$0xff]
      %v1818 = vld [vmem:[%s1561 + $0x42] sm:$0xff]
      %v1819 = vld [vmem:[%s1561 + $0x52] sm:$0xff]
      %v1820 = vld [vmem:[%s1561 + $0x62] sm:$0xff]
      %v1821 = vld [vmem:[%s1561 + $0x72] sm:$0xff]
      %v1822 = vlaneseq
      %v1823 = vshrl.u32 %v1822, 7
      %v1824 = vsub.s32 0, %v1823
      %v1825 = vrot.slane %v1571, %v1824
      %v1826 = vmul.f32 %v1814, %v1825
      %v1827 = vmul.f32 %v1815, %v1825
      %v1828 = vmul.f32 %v1816, %v1825
      %v1829 = vmul.f32 %v1817, %v1825
      %v1830 = vmul.f32 %v1818, %v1825
      %v1831 = vmul.f32 %v1819, %v1825
      %v1832 = vmul.f32 %v1820, %v1825
      %v1833 = vmul.f32 %v1821, %v1825
      %v1834 = vadd.f32 %v1806, %v1826
      %v1835 = vadd.f32 %v1807, %v1827
      %v1836 = vadd.f32 %v1808, %v1828
      %v1837 = vadd.f32 %v1809, %v1829
      %v1838 = vadd.f32 %v1810, %v1830
      %v1839 = vadd.f32 %v1811, %v1831
      %v1840 = vadd.f32 %v1812, %v1832
      %v1841 = vadd.f32 %v1813, %v1833
      %v1843 = vlaneseq
      %v1844 = vshrl.u32 %v1843, 7
      %v1845 = vsub.s32 0, %v1844
      %v1846 = vrot.slane %v1582, %v1845
      %v1848 = vmul.f32 %v1834, %v1846
      %v1849 = vmul.f32 %v1835, %v1846
      %v1850 = vmul.f32 %v1836, %v1846
      %v1851 = vmul.f32 %v1837, %v1846
      %v1852 = vmul.f32 %v1838, %v1846
      %v1853 = vmul.f32 %v1839, %v1846
      %v1854 = vmul.f32 %v1840, %v1846
      %v1855 = vmul.f32 %v1841, %v1846
      %v1857 = vlaneseq
      %v1858 = vshrl.u32 %v1857, 7
      %v1859 = vsub.s32 0, %v1858
      %v1860 = vrot.slane %v1583, %v1859
      %v1862 = vadd.f32 %v1848, %v1860
      %v1863 = vadd.f32 %v1849, %v1860
      %v1864 = vadd.f32 %v1850, %v1860
      %v1865 = vadd.f32 %v1851, %v1860
      %v1866 = vadd.f32 %v1852, %v1860
      %v1867 = vadd.f32 %v1853, %v1860
      %v1868 = vadd.f32 %v1854, %v1860
      %v1869 = vadd.f32 %v1855, %v1860
      %vm1870 = vcmp.ge.f32.partialorder %v1862, 0.0
      %vm1871 = vcmp.ge.f32.partialorder %v1863, 0.0
      %vm1872 = vcmp.ge.f32.partialorder %v1864, 0.0
      %vm1873 = vcmp.ge.f32.partialorder %v1865, 0.0
      %vm1874 = vcmp.ge.f32.partialorder %v1866, 0.0
      %vm1875 = vcmp.ge.f32.partialorder %v1867, 0.0
      %vm1876 = vcmp.ge.f32.partialorder %v1868, 0.0
      %vm1877 = vcmp.ge.f32.partialorder %v1869, 0.0
      %v1879 = vlaneseq
      %v1880 = vshrl.u32 %v1879, 7
      %v1881 = vsub.s32 0, %v1880
      %v1882 = vrot.slane %v1584, %v1881
      %v1884 = vmul.f32 %v1882, %v1862
      %v1885 = vmul.f32 %v1882, %v1863
      %v1886 = vmul.f32 %v1882, %v1864
      %v1887 = vmul.f32 %v1882, %v1865
      %v1888 = vmul.f32 %v1882, %v1866
      %v1889 = vmul.f32 %v1882, %v1867
      %v1890 = vmul.f32 %v1882, %v1868
      %v1891 = vmul.f32 %v1882, %v1869
      %v1892 = vsel %vm1870, %v1862, %v1884
      %v1893 = vsel %vm1871, %v1863, %v1885
      %v1894 = vsel %vm1872, %v1864, %v1886
      %v1895 = vsel %vm1873, %v1865, %v1887
      %v1896 = vsel %vm1874, %v1866, %v1888
      %v1897 = vsel %vm1875, %v1867, %v1889
      %v1898 = vsel %vm1876, %v1868, %v1890
      %v1899 = vsel %vm1877, %v1869, %v1891
      %v1901 = vsel %vm705, %v1892, 0
      %v1904 = vsel %vm705, %v1893, 0
      %v1907 = vsel %vm705, %v1894, 0
      %v1910 = vsel %vm705, %v1895, 0
      %v1913 = vsel %vm705, %v1896, 0
      %v1916 = vsel %vm705, %v1897, 0
      %v1919 = vsel %vm705, %v1898, 0
      %v1922 = vsel %vm705, %v1899, 0
      %1924 = vmatprep.subr.mxu0 0.0
      %1925 = vmatpush1.msra.mxu0 0.0
      %1926 = vmatprep.subr.mxu0 0.0
      %1927 = vmatpush1.msra.mxu0 0.0
      %1928 = vmatprep.subr.mxu0 0.0
      %1929 = vmatpush1.msra.mxu0 0.0
      %1930 = vmatprep.subr.mxu0 0.0
      %1931 = vmatpush1.msra.mxu0 0.0
      %1932 = vmatprep.subr.mxu0 0.0
      %1933 = vmatpush1.msra.mxu0 0.0
      %1934 = vmatprep.subr.mxu0 0.0
      %1935 = vmatpush1.msra.mxu0 0.0
      %1936 = vmatprep.subr.mxu0 0.0
      %1937 = vmatpush1.msra.mxu0 0.0
      %1938 = vmatprep.subr.mxu0 0.0
      %1939 = vmatpush1.msra.mxu0 0.0
      %1940 = vmatprep.subr.mxu0 0.0
      %1941 = vmatpush1.msra.mxu0 0.0
      %1942 = vmatprep.subr.mxu0 0.0
      %1943 = vmatpush1.msra.mxu0 0.0
      %1944 = vmatprep.subr.mxu0 0.0
      %1945 = vmatpush1.msra.mxu0 0.0
      %1946 = vmatprep.subr.mxu0 0.0
      %1947 = vmatpush1.msra.mxu0 0.0
      %1948 = vmatprep.subr.mxu0 0.0
      %1949 = vmatpush1.msra.mxu0 0.0
      %1950 = vmatprep.subr.mxu0 0.0
      %1951 = vmatpush1.msra.mxu0 0.0
      %1952 = vmatprep.subr.mxu0 0.0
      %1953 = vmatpush1.msra.mxu0 0.0
      %1954 = vmatprep.subr.mxu0 0.0
      %1955 = vmatpush1.msra.mxu0 %v1578
      %1956 = vmatprep.subr.mxu0 0.0
      %1957 = vmatpush2.msra.mxu0 0.0
      %1958 = vmatprep.subr.mxu0 0.0
      %1959 = vmatpush2.msra.mxu0 0.0
      %1960 = vmatprep.subr.mxu0 0.0
      %1961 = vmatpush2.msra.mxu0 0.0
      %1962 = vmatprep.subr.mxu0 0.0
      %1963 = vmatpush2.msra.mxu0 0.0
      %1964 = vmatprep.subr.mxu0 0.0
      %1965 = vmatpush2.msra.mxu0 0.0
      %1966 = vmatprep.subr.mxu0 0.0
      %1967 = vmatpush2.msra.mxu0 0.0
      %1968 = vmatprep.subr.mxu0 0.0
      %1969 = vmatpush2.msra.mxu0 0.0
      %1970 = vmatprep.subr.mxu0 0.0
      %1971 = vmatpush2.msra.mxu0 0.0
      %1972 = vmatprep.subr.mxu0 0.0
      %1973 = vmatpush2.msra.mxu0 0.0
      %1974 = vmatprep.subr.mxu0 0.0
      %1975 = vmatpush2.msra.mxu0 0.0
      %1976 = vmatprep.subr.mxu0 0.0
      %1977 = vmatpush2.msra.mxu0 0.0
      %1978 = vmatprep.subr.mxu0 0.0
      %1979 = vmatpush2.msra.mxu0 0.0
      %1980 = vmatprep.subr.mxu0 0.0
      %1981 = vmatpush2.msra.mxu0 0.0
      %1982 = vmatprep.subr.mxu0 0.0
      %1983 = vmatpush2.msra.mxu0 0.0
      %1984 = vmatprep.subr.mxu0 0.0
      %1985 = vmatpush2.msra.mxu0 0.0
      %1986 = vmatprep.subr.mxu0 0.0
      %1987 = vmatpush2.msra.mxu0 0.0
      %1988 = vmatprep.mubr.f32.mxu0 0.0
      %1989 = vmatmul.mubr.f32.gmra.mxu0 %v1901
      %v1990 = vpop.f32.mrf.mxu0
      %v1991 = vadd.f32 0.0, %v1990
      %v1992 = vpop.f32.mrf.mxu0
      %1993 = vmatprep.mubr.f32.mxu0 0.0
      %1994 = vmatmul.mubr.f32.gmra.mxu0 %v1904
      %v1995 = vpop.f32.mrf.mxu0
      %v1996 = vadd.f32 0.0, %v1995
      %v1997 = vpop.f32.mrf.mxu0
      %1998 = vmatprep.mubr.f32.mxu0 0.0
      %1999 = vmatmul.mubr.f32.gmra.mxu0 %v1907
      %v2000 = vpop.f32.mrf.mxu0
      %v2001 = vadd.f32 0.0, %v2000
      %v2002 = vpop.f32.mrf.mxu0
      %2003 = vmatprep.mubr.f32.mxu0 0.0
      %2004 = vmatmul.mubr.f32.gmra.mxu0 %v1910
      %v2005 = vpop.f32.mrf.mxu0
      %v2006 = vadd.f32 0.0, %v2005
      %v2007 = vpop.f32.mrf.mxu0
      %2008 = vmatprep.mubr.f32.mxu0 0.0
      %2009 = vmatmul.mubr.f32.gmra.mxu0 %v1913
      %v2010 = vpop.f32.mrf.mxu0
      %v2011 = vadd.f32 0.0, %v2010
      %v2012 = vpop.f32.mrf.mxu0
      %2013 = vmatprep.mubr.f32.mxu0 0.0
      %2014 = vmatmul.mubr.f32.gmra.mxu0 %v1916
      %v2015 = vpop.f32.mrf.mxu0
      %v2016 = vadd.f32 0.0, %v2015
      %v2017 = vpop.f32.mrf.mxu0
      %2018 = vmatprep.mubr.f32.mxu0 0.0
      %2019 = vmatmul.mubr.f32.gmra.mxu0 %v1919
      %v2020 = vpop.f32.mrf.mxu0
      %v2021 = vadd.f32 0.0, %v2020
      %v2022 = vpop.f32.mrf.mxu0
      %2023 = vmatprep.mubr.f32.mxu0 0.0
      %2024 = vmatmul.mubr.f32.gmra.mxu0 %v1922
      %v2025 = vpop.f32.mrf.mxu0
      %v2026 = vadd.f32 0.0, %v2025
      %v2027 = vpop.f32.mrf.mxu0
      %2028 = vdwg.mxu0
      %v2030 = vlaneseq
      %v2031 = vshrl.u32 %v2030, 7
      %v2032 = vsub.s32 0, %v2031
      %v2033 = vrot.slane %v1585, %v2032
      %v2035 = vmul.f32 %v1991, %v2033
      %v2036 = vmul.f32 %v1996, %v2033
      %v2037 = vmul.f32 %v2001, %v2033
      %v2038 = vmul.f32 %v2006, %v2033
      %v2039 = vmul.f32 %v2011, %v2033
      %v2040 = vmul.f32 %v2016, %v2033
      %v2041 = vmul.f32 %v2021, %v2033
      %v2042 = vmul.f32 %v2026, %v2033
      %v2044 = vlaneseq
      %v2045 = vshrl.u32 %v2044, 7
      %v2046 = vsub.s32 0, %v2045
      %v2047 = vrot.slane %v1586, %v2046
      %v2049 = vadd.f32 %v2035, %v2047
      %v2050 = vadd.f32 %v2036, %v2047
      %v2051 = vadd.f32 %v2037, %v2047
      %v2052 = vadd.f32 %v2038, %v2047
      %v2053 = vadd.f32 %v2039, %v2047
      %v2054 = vadd.f32 %v2040, %v2047
      %v2055 = vadd.f32 %v2041, %v2047
      %v2056 = vadd.f32 %v2042, %v2047
      %vm2057 = vcmp.ge.f32.partialorder %v2049, 0.0
      %vm2058 = vcmp.ge.f32.partialorder %v2050, 0.0
      %vm2059 = vcmp.ge.f32.partialorder %v2051, 0.0
      %vm2060 = vcmp.ge.f32.partialorder %v2052, 0.0
      %vm2061 = vcmp.ge.f32.partialorder %v2053, 0.0
      %vm2062 = vcmp.ge.f32.partialorder %v2054, 0.0
      %vm2063 = vcmp.ge.f32.partialorder %v2055, 0.0
      %vm2064 = vcmp.ge.f32.partialorder %v2056, 0.0
      %v2066 = vlaneseq
      %v2067 = vshrl.u32 %v2066, 7
      %v2068 = vsub.s32 0, %v2067
      %v2069 = vrot.slane %v1587, %v2068
      %v2071 = vmul.f32 %v2069, %v2049
      %v2072 = vmul.f32 %v2069, %v2050
      %v2073 = vmul.f32 %v2069, %v2051
      %v2074 = vmul.f32 %v2069, %v2052
      %v2075 = vmul.f32 %v2069, %v2053
      %v2076 = vmul.f32 %v2069, %v2054
      %v2077 = vmul.f32 %v2069, %v2055
      %v2078 = vmul.f32 %v2069, %v2056
      %v2079 = vsel %vm2057, %v2049, %v2071
      %v2080 = vsel %vm2058, %v2050, %v2072
      %v2081 = vsel %vm2059, %v2051, %v2073
      %v2082 = vsel %vm2060, %v2052, %v2074
      %v2083 = vsel %vm2061, %v2053, %v2075
      %v2084 = vsel %vm2062, %v2054, %v2076
      %v2085 = vsel %vm2063, %v2055, %v2077
      %v2086 = vsel %vm2064, %v2056, %v2078
      %2087 = vst.msk [vmem:[%s507] sm:$0xff] %vm705, %v2079
      %2088 = vst.msk [vmem:[%s507 + $0x8] sm:$0xff] %vm705, %v2080
      %2089 = vst.msk [vmem:[%s507 + $0x10] sm:$0xff] %vm705, %v2081
      %2090 = vst.msk [vmem:[%s507 + $0x18] sm:$0xff] %vm705, %v2082
      %2091 = vst.msk [vmem:[%s507 + $0x20] sm:$0xff] %vm705, %v2083
      %2092 = vst.msk [vmem:[%s507 + $0x28] sm:$0xff] %vm705, %v2084
      %2093 = vst.msk [vmem:[%s507 + $0x30] sm:$0xff] %vm705, %v2085
      %2094 = vst.msk [vmem:[%s507 + $0x38] sm:$0xff] %vm705, %v2086
      %s2095 = scalar_lea.vmem [#allocation2], 16
      %v2096 = vld [vmem:[%s2095 + $0x1] sm:$0xff]
      %v2097 = vld [vmem:[%s2095 + $0x11] sm:$0xff]
      %v2098 = vld [vmem:[%s2095 + $0x21] sm:$0xff]
      %v2099 = vld [vmem:[%s2095 + $0x31] sm:$0xff]
      %v2100 = vld [vmem:[%s2095 + $0x41] sm:$0xff]
      %v2101 = vld [vmem:[%s2095 + $0x51] sm:$0xff]
      %v2102 = vld [vmem:[%s2095 + $0x61] sm:$0xff]
      %v2103 = vld [vmem:[%s2095 + $0x71] sm:$0xff]
      %v2104 = vlaneseq
      %v2105 = vshrl.u32 %v2104, 7
      %v2106 = vsub.s32 0, %v2105
      %v2107 = vrot.slane %v1572, %v2106
      %v2108 = vmul.f32 %v2096, %v2107
      %v2109 = vmul.f32 %v2097, %v2107
      %v2110 = vmul.f32 %v2098, %v2107
      %v2111 = vmul.f32 %v2099, %v2107
      %v2112 = vmul.f32 %v2100, %v2107
      %v2113 = vmul.f32 %v2101, %v2107
      %v2114 = vmul.f32 %v2102, %v2107
      %v2115 = vmul.f32 %v2103, %v2107
      %v2116 = vadd.f32 %v2108, 0.0
      %v2117 = vadd.f32 %v2109, 0.0
      %v2118 = vadd.f32 %v2110, 0.0
      %v2119 = vadd.f32 %v2111, 0.0
      %v2120 = vadd.f32 %v2112, 0.0
      %v2121 = vadd.f32 %v2113, 0.0
      %v2122 = vadd.f32 %v2114, 0.0
      %v2123 = vadd.f32 %v2115, 0.0
      %v2124 = vld [vmem:[%s2095 + $0x2] sm:$0xff]
      %v2125 = vld [vmem:[%s2095 + $0x12] sm:$0xff]
      %v2126 = vld [vmem:[%s2095 + $0x22] sm:$0xff]
      %v2127 = vld [vmem:[%s2095 + $0x32] sm:$0xff]
      %v2128 = vld [vmem:[%s2095 + $0x42] sm:$0xff]
      %v2129 = vld [vmem:[%s2095 + $0x52] sm:$0xff]
      %v2130 = vld [vmem:[%s2095 + $0x62] sm:$0xff]
      %v2131 = vld [vmem:[%s2095 + $0x72] sm:$0xff]
      %v2132 = vlaneseq
      %v2133 = vshrl.u32 %v2132, 7
      %v2134 = vsub.s32 1, %v2133
      %v2135 = vrot.slane %v1572, %v2134
      %v2136 = vmul.f32 %v2124, %v2135
      %v2137 = vmul.f32 %v2125, %v2135
      %v2138 = vmul.f32 %v2126, %v2135
      %v2139 = vmul.f32 %v2127, %v2135
      %v2140 = vmul.f32 %v2128, %v2135
      %v2141 = vmul.f32 %v2129, %v2135
      %v2142 = vmul.f32 %v2130, %v2135
      %v2143 = vmul.f32 %v2131, %v2135
      %v2144 = vadd.f32 %v2116, %v2136
      %v2145 = vadd.f32 %v2117, %v2137
      %v2146 = vadd.f32 %v2118, %v2138
      %v2147 = vadd.f32 %v2119, %v2139
      %v2148 = vadd.f32 %v2120, %v2140
      %v2149 = vadd.f32 %v2121, %v2141
      %v2150 = vadd.f32 %v2122, %v2142
      %v2151 = vadd.f32 %v2123, %v2143
      %v2152 = vld [vmem:[%s2095 + $0x3] sm:$0xff]
      %v2153 = vld [vmem:[%s2095 + $0x13] sm:$0xff]
      %v2154 = vld [vmem:[%s2095 + $0x23] sm:$0xff]
      %v2155 = vld [vmem:[%s2095 + $0x33] sm:$0xff]
      %v2156 = vld [vmem:[%s2095 + $0x43] sm:$0xff]
      %v2157 = vld [vmem:[%s2095 + $0x53] sm:$0xff]
      %v2158 = vld [vmem:[%s2095 + $0x63] sm:$0xff]
      %v2159 = vld [vmem:[%s2095 + $0x73] sm:$0xff]
      %v2160 = vlaneseq
      %v2161 = vshrl.u32 %v2160, 7
      %v2162 = vsub.s32 2, %v2161
      %v2163 = vrot.slane %v1572, %v2162
      %v2164 = vmul.f32 %v2152, %v2163
      %v2165 = vmul.f32 %v2153, %v2163
      %v2166 = vmul.f32 %v2154, %v2163
      %v2167 = vmul.f32 %v2155, %v2163
      %v2168 = vmul.f32 %v2156, %v2163
      %v2169 = vmul.f32 %v2157, %v2163
      %v2170 = vmul.f32 %v2158, %v2163
      %v2171 = vmul.f32 %v2159, %v2163
      %v2172 = vadd.f32 %v2144, %v2164
      %v2173 = vadd.f32 %v2145, %v2165
      %v2174 = vadd.f32 %v2146, %v2166
      %v2175 = vadd.f32 %v2147, %v2167
      %v2176 = vadd.f32 %v2148, %v2168
      %v2177 = vadd.f32 %v2149, %v2169
      %v2178 = vadd.f32 %v2150, %v2170
      %v2179 = vadd.f32 %v2151, %v2171
      %v2180 = vld [vmem:[%s1003 + $0x1] sm:$0xff]
      %v2181 = vld [vmem:[%s1003 + $0x11] sm:$0xff]
      %v2182 = vld [vmem:[%s1003 + $0x21] sm:$0xff]
      %v2183 = vld [vmem:[%s1003 + $0x31] sm:$0xff]
      %v2184 = vld [vmem:[%s1003 + $0x41] sm:$0xff]
      %v2185 = vld [vmem:[%s1003 + $0x51] sm:$0xff]
      %v2186 = vld [vmem:[%s1003 + $0x61] sm:$0xff]
      %v2187 = vld [vmem:[%s1003 + $0x71] sm:$0xff]
      %v2188 = vlaneseq
      %v2189 = vshrl.u32 %v2188, 7
      %v2190 = vsub.s32 3, %v2189
      %v2191 = vrot.slane %v1572, %v2190
      %v2192 = vmul.f32 %v2180, %v2191
      %v2193 = vmul.f32 %v2181, %v2191
      %v2194 = vmul.f32 %v2182, %v2191
      %v2195 = vmul.f32 %v2183, %v2191
      %v2196 = vmul.f32 %v2184, %v2191
      %v2197 = vmul.f32 %v2185, %v2191
      %v2198 = vmul.f32 %v2186, %v2191
      %v2199 = vmul.f32 %v2187, %v2191
      %v2200 = vadd.f32 %v2172, %v2192
      %v2201 = vadd.f32 %v2173, %v2193
      %v2202 = vadd.f32 %v2174, %v2194
      %v2203 = vadd.f32 %v2175, %v2195
      %v2204 = vadd.f32 %v2176, %v2196
      %v2205 = vadd.f32 %v2177, %v2197
      %v2206 = vadd.f32 %v2178, %v2198
      %v2207 = vadd.f32 %v2179, %v2199
      %v2208 = vld [vmem:[%s1003 + $0x2] sm:$0xff]
      %v2209 = vld [vmem:[%s1003 + $0x12] sm:$0xff]
      %v2210 = vld [vmem:[%s1003 + $0x22] sm:$0xff]
      %v2211 = vld [vmem:[%s1003 + $0x32] sm:$0xff]
      %v2212 = vld [vmem:[%s1003 + $0x42] sm:$0xff]
      %v2213 = vld [vmem:[%s1003 + $0x52] sm:$0xff]
      %v2214 = vld [vmem:[%s1003 + $0x62] sm:$0xff]
      %v2215 = vld [vmem:[%s1003 + $0x72] sm:$0xff]
      %v2216 = vlaneseq
      %v2217 = vshrl.u32 %v2216, 7
      %v2218 = vsub.s32 4, %v2217
      %v2219 = vrot.slane %v1572, %v2218
      %v2220 = vmul.f32 %v2208, %v2219
      %v2221 = vmul.f32 %v2209, %v2219
      %v2222 = vmul.f32 %v2210, %v2219
      %v2223 = vmul.f32 %v2211, %v2219
      %v2224 = vmul.f32 %v2212, %v2219
      %v2225 = vmul.f32 %v2213, %v2219
      %v2226 = vmul.f32 %v2214, %v2219
      %v2227 = vmul.f32 %v2215, %v2219
      %v2228 = vadd.f32 %v2200, %v2220
      %v2229 = vadd.f32 %v2201, %v2221
      %v2230 = vadd.f32 %v2202, %v2222
      %v2231 = vadd.f32 %v2203, %v2223
      %v2232 = vadd.f32 %v2204, %v2224
      %v2233 = vadd.f32 %v2205, %v2225
      %v2234 = vadd.f32 %v2206, %v2226
      %v2235 = vadd.f32 %v2207, %v2227
      %v2236 = vld [vmem:[%s1003 + $0x3] sm:$0xff]
      %v2237 = vld [vmem:[%s1003 + $0x13] sm:$0xff]
      %v2238 = vld [vmem:[%s1003 + $0x23] sm:$0xff]
      %v2239 = vld [vmem:[%s1003 + $0x33] sm:$0xff]
      %v2240 = vld [vmem:[%s1003 + $0x43] sm:$0xff]
      %v2241 = vld [vmem:[%s1003 + $0x53] sm:$0xff]
      %v2242 = vld [vmem:[%s1003 + $0x63] sm:$0xff]
      %v2243 = vld [vmem:[%s1003 + $0x73] sm:$0xff]
      %v2244 = vlaneseq
      %v2245 = vshrl.u32 %v2244, 7
      %v2246 = vsub.s32 5, %v2245
      %v2247 = vrot.slane %v1572, %v2246
      %v2248 = vmul.f32 %v2236, %v2247
      %v2249 = vmul.f32 %v2237, %v2247
      %v2250 = vmul.f32 %v2238, %v2247
      %v2251 = vmul.f32 %v2239, %v2247
      %v2252 = vmul.f32 %v2240, %v2247
      %v2253 = vmul.f32 %v2241, %v2247
      %v2254 = vmul.f32 %v2242, %v2247
      %v2255 = vmul.f32 %v2243, %v2247
      %v2256 = vadd.f32 %v2228, %v2248
      %v2257 = vadd.f32 %v2229, %v2249
      %v2258 = vadd.f32 %v2230, %v2250
      %v2259 = vadd.f32 %v2231, %v2251
      %v2260 = vadd.f32 %v2232, %v2252
      %v2261 = vadd.f32 %v2233, %v2253
      %v2262 = vadd.f32 %v2234, %v2254
      %v2263 = vadd.f32 %v2235, %v2255
      %s2264 = scalar_lea.vmem [#allocation2], 48
      %v2265 = vld [vmem:[%s2264 + $0x1] sm:$0xff]
      %v2266 = vld [vmem:[%s2264 + $0x11] sm:$0xff]
      %v2267 = vld [vmem:[%s2264 + $0x21] sm:$0xff]
      %v2268 = vld [vmem:[%s2264 + $0x31] sm:$0xff]
      %v2269 = vld [vmem:[%s2264 + $0x41] sm:$0xff]
      %v2270 = vld [vmem:[%s2264 + $0x51] sm:$0xff]
      %v2271 = vld [vmem:[%s2264 + $0x61] sm:$0xff]
      %v2272 = vld [vmem:[%s2264 + $0x71] sm:$0xff]
      %v2273 = vlaneseq
      %v2274 = vshrl.u32 %v2273, 7
      %v2275 = vsub.s32 6, %v2274
      %v2276 = vrot.slane %v1572, %v2275
      %v2277 = vmul.f32 %v2265, %v2276
      %v2278 = vmul.f32 %v2266, %v2276
      %v2279 = vmul.f32 %v2267, %v2276
      %v2280 = vmul.f32 %v2268, %v2276
      %v2281 = vmul.f32 %v2269, %v2276
      %v2282 = vmul.f32 %v2270, %v2276
      %v2283 = vmul.f32 %v2271, %v2276
      %v2284 = vmul.f32 %v2272, %v2276
      %v2285 = vadd.f32 %v2256, %v2277
      %v2286 = vadd.f32 %v2257, %v2278
      %v2287 = vadd.f32 %v2258, %v2279
      %v2288 = vadd.f32 %v2259, %v2280
      %v2289 = vadd.f32 %v2260, %v2281
      %v2290 = vadd.f32 %v2261, %v2282
      %v2291 = vadd.f32 %v2262, %v2283
      %v2292 = vadd.f32 %v2263, %v2284
      %v2293 = vld [vmem:[%s2264 + $0x2] sm:$0xff]
      %v2294 = vld [vmem:[%s2264 + $0x12] sm:$0xff]
      %v2295 = vld [vmem:[%s2264 + $0x22] sm:$0xff]
      %v2296 = vld [vmem:[%s2264 + $0x32] sm:$0xff]
      %v2297 = vld [vmem:[%s2264 + $0x42] sm:$0xff]
      %v2298 = vld [vmem:[%s2264 + $0x52] sm:$0xff]
      %v2299 = vld [vmem:[%s2264 + $0x62] sm:$0xff]
      %v2300 = vld [vmem:[%s2264 + $0x72] sm:$0xff]
      %v2301 = vlaneseq
      %v2302 = vshrl.u32 %v2301, 7
      %v2303 = vsub.s32 7, %v2302
      %v2304 = vrot.slane %v1572, %v2303
      %v2305 = vmul.f32 %v2293, %v2304
      %v2306 = vmul.f32 %v2294, %v2304
      %v2307 = vmul.f32 %v2295, %v2304
      %v2308 = vmul.f32 %v2296, %v2304
      %v2309 = vmul.f32 %v2297, %v2304
      %v2310 = vmul.f32 %v2298, %v2304
      %v2311 = vmul.f32 %v2299, %v2304
      %v2312 = vmul.f32 %v2300, %v2304
      %v2313 = vadd.f32 %v2285, %v2305
      %v2314 = vadd.f32 %v2286, %v2306
      %v2315 = vadd.f32 %v2287, %v2307
      %v2316 = vadd.f32 %v2288, %v2308
      %v2317 = vadd.f32 %v2289, %v2309
      %v2318 = vadd.f32 %v2290, %v2310
      %v2319 = vadd.f32 %v2291, %v2311
      %v2320 = vadd.f32 %v2292, %v2312
      %v2321 = vld [vmem:[%s2264 + $0x3] sm:$0xff]
      %v2322 = vld [vmem:[%s2264 + $0x13] sm:$0xff]
      %v2323 = vld [vmem:[%s2264 + $0x23] sm:$0xff]
      %v2324 = vld [vmem:[%s2264 + $0x33] sm:$0xff]
      %v2325 = vld [vmem:[%s2264 + $0x43] sm:$0xff]
      %v2326 = vld [vmem:[%s2264 + $0x53] sm:$0xff]
      %v2327 = vld [vmem:[%s2264 + $0x63] sm:$0xff]
      %v2328 = vld [vmem:[%s2264 + $0x73] sm:$0xff]
      %v2329 = vlaneseq
      %v2330 = vshrl.u32 %v2329, 7
      %v2331 = vsub.s32 0, %v2330
      %v2332 = vrot.slane %v1573, %v2331
      %v2333 = vmul.f32 %v2321, %v2332
      %v2334 = vmul.f32 %v2322, %v2332
      %v2335 = vmul.f32 %v2323, %v2332
      %v2336 = vmul.f32 %v2324, %v2332
      %v2337 = vmul.f32 %v2325, %v2332
      %v2338 = vmul.f32 %v2326, %v2332
      %v2339 = vmul.f32 %v2327, %v2332
      %v2340 = vmul.f32 %v2328, %v2332
      %v2341 = vadd.f32 %v2313, %v2333
      %v2342 = vadd.f32 %v2314, %v2334
      %v2343 = vadd.f32 %v2315, %v2335
      %v2344 = vadd.f32 %v2316, %v2336
      %v2345 = vadd.f32 %v2317, %v2337
      %v2346 = vadd.f32 %v2318, %v2338
      %v2347 = vadd.f32 %v2319, %v2339
      %v2348 = vadd.f32 %v2320, %v2340
      %v2349 = vadd.f32 %v2341, %v1834
      %v2350 = vadd.f32 %v2342, %v1835
      %v2351 = vadd.f32 %v2343, %v1836
      %v2352 = vadd.f32 %v2344, %v1837
      %v2353 = vadd.f32 %v2345, %v1838
      %v2354 = vadd.f32 %v2346, %v1839
      %v2355 = vadd.f32 %v2347, %v1840
      %v2356 = vadd.f32 %v2348, %v1841
      %2357 = vrot.lane.b32.xlu0 %v1846, 120
      %v2358 = vpop.permute.xlu0 %2357
      %v2360 = vmul.f32 %v2349, %v2358
      %v2361 = vmul.f32 %v2350, %v2358
      %v2362 = vmul.f32 %v2351, %v2358
      %v2363 = vmul.f32 %v2352, %v2358
      %v2364 = vmul.f32 %v2353, %v2358
      %v2365 = vmul.f32 %v2354, %v2358
      %v2366 = vmul.f32 %v2355, %v2358
      %v2367 = vmul.f32 %v2356, %v2358
      %2368 = vrot.lane.b32.xlu0 %v1860, 120
      %v2369 = vpop.permute.xlu0 %2368
      %v2371 = vadd.f32 %v2360, %v2369
      %v2372 = vadd.f32 %v2361, %v2369
      %v2373 = vadd.f32 %v2362, %v2369
      %v2374 = vadd.f32 %v2363, %v2369
      %v2375 = vadd.f32 %v2364, %v2369
      %v2376 = vadd.f32 %v2365, %v2369
      %v2377 = vadd.f32 %v2366, %v2369
      %v2378 = vadd.f32 %v2367, %v2369
      %vm2379 = vcmp.ge.f32.partialorder %v2371, 0.0
      %vm2380 = vcmp.ge.f32.partialorder %v2372, 0.0
      %vm2381 = vcmp.ge.f32.partialorder %v2373, 0.0
      %vm2382 = vcmp.ge.f32.partialorder %v2374, 0.0
      %vm2383 = vcmp.ge.f32.partialorder %v2375, 0.0
      %vm2384 = vcmp.ge.f32.partialorder %v2376, 0.0
      %vm2385 = vcmp.ge.f32.partialorder %v2377, 0.0
      %vm2386 = vcmp.ge.f32.partialorder %v2378, 0.0
      %2395 = vrot.lane.b32.xlu0 %v2371, 8
      %v2396 = vpop.permute.xlu0 %2395
      %2397 = vrot.lane.b32.xlu0 %v2372, 8
      %v2398 = vpop.permute.xlu0 %2397
      %2399 = vrot.lane.b32.xlu0 %v2373, 8
      %v2400 = vpop.permute.xlu0 %2399
      %2401 = vrot.lane.b32.xlu0 %v2374, 8
      %v2402 = vpop.permute.xlu0 %2401
      %2403 = vrot.lane.b32.xlu0 %v2375, 8
      %v2404 = vpop.permute.xlu0 %2403
      %2405 = vrot.lane.b32.xlu0 %v2376, 8
      %v2406 = vpop.permute.xlu0 %2405
      %2407 = vrot.lane.b32.xlu0 %v2377, 8
      %v2408 = vpop.permute.xlu0 %2407
      %2409 = vrot.lane.b32.xlu0 %v2378, 8
      %v2410 = vpop.permute.xlu0 %2409
      %v2419 = vmul.f32 %v1882, %v2396
      %v2420 = vmul.f32 %v1882, %v2398
      %v2421 = vmul.f32 %v1882, %v2400
      %v2422 = vmul.f32 %v1882, %v2402
      %v2423 = vmul.f32 %v1882, %v2404
      %v2424 = vmul.f32 %v1882, %v2406
      %v2425 = vmul.f32 %v1882, %v2408
      %v2426 = vmul.f32 %v1882, %v2410
      %2435 = vrot.lane.b32.xlu0 %v2419, 120
      %v2436 = vpop.permute.xlu0 %2435
      %2437 = vrot.lane.b32.xlu0 %v2420, 120
      %v2438 = vpop.permute.xlu0 %2437
      %2439 = vrot.lane.b32.xlu0 %v2421, 120
      %v2440 = vpop.permute.xlu0 %2439
      %2441 = vrot.lane.b32.xlu0 %v2422, 120
      %v2442 = vpop.permute.xlu0 %2441
      %2443 = vrot.lane.b32.xlu0 %v2423, 120
      %v2444 = vpop.permute.xlu0 %2443
      %2445 = vrot.lane.b32.xlu0 %v2424, 120
      %v2446 = vpop.permute.xlu0 %2445
      %2447 = vrot.lane.b32.xlu0 %v2425, 120
      %v2448 = vpop.permute.xlu0 %2447
      %2449 = vrot.lane.b32.xlu0 %v2426, 120
      %v2450 = vpop.permute.xlu0 %2449
      %v2459 = vsel %vm2379, %v2371, %v2436
      %v2460 = vsel %vm2380, %v2372, %v2438
      %v2461 = vsel %vm2381, %v2373, %v2440
      %v2462 = vsel %vm2382, %v2374, %v2442
      %v2463 = vsel %vm2383, %v2375, %v2444
      %v2464 = vsel %vm2384, %v2376, %v2446
      %v2465 = vsel %vm2385, %v2377, %v2448
      %v2466 = vsel %vm2386, %v2378, %v2450
      %v2468 = vsel %vm705, %v2459, 0
      %v2471 = vsel %vm705, %v2460, 0
      %v2474 = vsel %vm705, %v2461, 0
      %v2477 = vsel %vm705, %v2462, 0
      %v2480 = vsel %vm705, %v2463, 0
      %v2483 = vsel %vm705, %v2464, 0
      %v2486 = vsel %vm705, %v2465, 0
      %v2489 = vsel %vm705, %v2466, 0
      %2491 = vmatprep.subr.mxu0 0.0
      %2492 = vmatpush1.msra.mxu0 0.0
      %2493 = vmatprep.subr.mxu0 0.0
      %2494 = vmatpush1.msra.mxu0 0.0
      %2495 = vmatprep.subr.mxu0 0.0
      %2496 = vmatpush1.msra.mxu0 0.0
      %2497 = vmatprep.subr.mxu0 0.0
      %2498 = vmatpush1.msra.mxu0 0.0
      %2499 = vmatprep.subr.mxu0 0.0
      %2500 = vmatpush1.msra.mxu0 0.0
      %2501 = vmatprep.subr.mxu0 0.0
      %2502 = vmatpush1.msra.mxu0 0.0
      %2503 = vmatprep.subr.mxu0 0.0
      %2504 = vmatpush1.msra.mxu0 0.0
      %2505 = vmatprep.subr.mxu0 0.0
      %2506 = vmatpush1.msra.mxu0 0.0
      %2507 = vmatprep.subr.mxu0 0.0
      %2508 = vmatpush1.msra.mxu0 0.0
      %2509 = vmatprep.subr.mxu0 0.0
      %2510 = vmatpush1.msra.mxu0 0.0
      %2511 = vmatprep.subr.mxu0 0.0
      %2512 = vmatpush1.msra.mxu0 0.0
      %2513 = vmatprep.subr.mxu0 0.0
      %2514 = vmatpush1.msra.mxu0 0.0
      %2515 = vmatprep.subr.mxu0 0.0
      %2516 = vmatpush1.msra.mxu0 0.0
      %2517 = vmatprep.subr.mxu0 0.0
      %2518 = vmatpush1.msra.mxu0 0.0
      %2519 = vmatprep.subr.mxu0 0.0
      %2520 = vmatpush1.msra.mxu0 0.0
      %2521 = vmatprep.subr.mxu0 0.0
      %2522 = vmatpush1.msra.mxu0 %v1579
      %2523 = vmatprep.subr.mxu0 0.0
      %2524 = vmatpush2.msra.mxu0 0.0
      %2525 = vmatprep.subr.mxu0 0.0
      %2526 = vmatpush2.msra.mxu0 0.0
      %2527 = vmatprep.subr.mxu0 0.0
      %2528 = vmatpush2.msra.mxu0 0.0
      %2529 = vmatprep.subr.mxu0 0.0
      %2530 = vmatpush2.msra.mxu0 0.0
      %2531 = vmatprep.subr.mxu0 0.0
      %2532 = vmatpush2.msra.mxu0 0.0
      %2533 = vmatprep.subr.mxu0 0.0
      %2534 = vmatpush2.msra.mxu0 0.0
      %2535 = vmatprep.subr.mxu0 0.0
      %2536 = vmatpush2.msra.mxu0 0.0
      %2537 = vmatprep.subr.mxu0 0.0
      %2538 = vmatpush2.msra.mxu0 0.0
      %2539 = vmatprep.subr.mxu0 0.0
      %2540 = vmatpush2.msra.mxu0 0.0
      %2541 = vmatprep.subr.mxu0 0.0
      %2542 = vmatpush2.msra.mxu0 0.0
      %2543 = vmatprep.subr.mxu0 0.0
      %2544 = vmatpush2.msra.mxu0 0.0
      %2545 = vmatprep.subr.mxu0 0.0
      %2546 = vmatpush2.msra.mxu0 0.0
      %2547 = vmatprep.subr.mxu0 0.0
      %2548 = vmatpush2.msra.mxu0 0.0
      %2549 = vmatprep.subr.mxu0 0.0
      %2550 = vmatpush2.msra.mxu0 0.0
      %2551 = vmatprep.subr.mxu0 0.0
      %2552 = vmatpush2.msra.mxu0 0.0
      %2553 = vmatprep.subr.mxu0 0.0
      %2554 = vmatpush2.msra.mxu0 0.0
      %2555 = vmatprep.mubr.f32.mxu0 0.0
      %2556 = vmatmul.mubr.f32.gmra.mxu0 %v2468
      %v2557 = vpop.f32.mrf.mxu0
      %v2558 = vadd.f32 0.0, %v2557
      %v2559 = vpop.f32.mrf.mxu0
      %2560 = vmatprep.mubr.f32.mxu0 0.0
      %2561 = vmatmul.mubr.f32.gmra.mxu0 %v2471
      %v2562 = vpop.f32.mrf.mxu0
      %v2563 = vadd.f32 0.0, %v2562
      %v2564 = vpop.f32.mrf.mxu0
      %2565 = vmatprep.mubr.f32.mxu0 0.0
      %2566 = vmatmul.mubr.f32.gmra.mxu0 %v2474
      %v2567 = vpop.f32.mrf.mxu0
      %v2568 = vadd.f32 0.0, %v2567
      %v2569 = vpop.f32.mrf.mxu0
      %2570 = vmatprep.mubr.f32.mxu0 0.0
      %2571 = vmatmul.mubr.f32.gmra.mxu0 %v2477
      %v2572 = vpop.f32.mrf.mxu0
      %v2573 = vadd.f32 0.0, %v2572
      %v2574 = vpop.f32.mrf.mxu0
      %2575 = vmatprep.mubr.f32.mxu0 0.0
      %2576 = vmatmul.mubr.f32.gmra.mxu0 %v2480
      %v2577 = vpop.f32.mrf.mxu0
      %v2578 = vadd.f32 0.0, %v2577
      %v2579 = vpop.f32.mrf.mxu0
      %2580 = vmatprep.mubr.f32.mxu0 0.0
      %2581 = vmatmul.mubr.f32.gmra.mxu0 %v2483
      %v2582 = vpop.f32.mrf.mxu0
      %v2583 = vadd.f32 0.0, %v2582
      %v2584 = vpop.f32.mrf.mxu0
      %2585 = vmatprep.mubr.f32.mxu0 0.0
      %2586 = vmatmul.mubr.f32.gmra.mxu0 %v2486
      %v2587 = vpop.f32.mrf.mxu0
      %v2588 = vadd.f32 0.0, %v2587
      %v2589 = vpop.f32.mrf.mxu0
      %2590 = vmatprep.mubr.f32.mxu0 0.0
      %2591 = vmatmul.mubr.f32.gmra.mxu0 %v2489
      %v2592 = vpop.f32.mrf.mxu0
      %v2593 = vadd.f32 0.0, %v2592
      %v2594 = vpop.f32.mrf.mxu0
      %2595 = vdwg.mxu0
      %2596 = vrot.lane.b32.xlu0 %v2033, 120
      %v2597 = vpop.permute.xlu0 %2596
      %v2599 = vmul.f32 %v2558, %v2597
      %v2600 = vmul.f32 %v2563, %v2597
      %v2601 = vmul.f32 %v2568, %v2597
      %v2602 = vmul.f32 %v2573, %v2597
      %v2603 = vmul.f32 %v2578, %v2597
      %v2604 = vmul.f32 %v2583, %v2597
      %v2605 = vmul.f32 %v2588, %v2597
      %v2606 = vmul.f32 %v2593, %v2597
      %2607 = vrot.lane.b32.xlu0 %v2047, 120
      %v2608 = vpop.permute.xlu0 %2607
      %v2610 = vadd.f32 %v2599, %v2608
      %v2611 = vadd.f32 %v2600, %v2608
      %v2612 = vadd.f32 %v2601, %v2608
      %v2613 = vadd.f32 %v2602, %v2608
      %v2614 = vadd.f32 %v2603, %v2608
      %v2615 = vadd.f32 %v2604, %v2608
      %v2616 = vadd.f32 %v2605, %v2608
      %v2617 = vadd.f32 %v2606, %v2608
      %vm2618 = vcmp.ge.f32.partialorder %v2610, 0.0
      %vm2619 = vcmp.ge.f32.partialorder %v2611, 0.0
      %vm2620 = vcmp.ge.f32.partialorder %v2612, 0.0
      %vm2621 = vcmp.ge.f32.partialorder %v2613, 0.0
      %vm2622 = vcmp.ge.f32.partialorder %v2614, 0.0
      %vm2623 = vcmp.ge.f32.partialorder %v2615, 0.0
      %vm2624 = vcmp.ge.f32.partialorder %v2616, 0.0
      %vm2625 = vcmp.ge.f32.partialorder %v2617, 0.0
      %2634 = vrot.lane.b32.xlu0 %v2610, 8
      %v2635 = vpop.permute.xlu0 %2634
      %2636 = vrot.lane.b32.xlu0 %v2611, 8
      %v2637 = vpop.permute.xlu0 %2636
      %2638 = vrot.lane.b32.xlu0 %v2612, 8
      %v2639 = vpop.permute.xlu0 %2638
      %2640 = vrot.lane.b32.xlu0 %v2613, 8
      %v2641 = vpop.permute.xlu0 %2640
      %2642 = vrot.lane.b32.xlu0 %v2614, 8
      %v2643 = vpop.permute.xlu0 %2642
      %2644 = vrot.lane.b32.xlu0 %v2615, 8
      %v2645 = vpop.permute.xlu0 %2644
      %2646 = vrot.lane.b32.xlu0 %v2616, 8
      %v2647 = vpop.permute.xlu0 %2646
      %2648 = vrot.lane.b32.xlu0 %v2617, 8
      %v2649 = vpop.permute.xlu0 %2648
      %v2658 = vmul.f32 %v2069, %v2635
      %v2659 = vmul.f32 %v2069, %v2637
      %v2660 = vmul.f32 %v2069, %v2639
      %v2661 = vmul.f32 %v2069, %v2641
      %v2662 = vmul.f32 %v2069, %v2643
      %v2663 = vmul.f32 %v2069, %v2645
      %v2664 = vmul.f32 %v2069, %v2647
      %v2665 = vmul.f32 %v2069, %v2649
      %2674 = vrot.lane.b32.xlu0 %v2658, 120
      %v2675 = vpop.permute.xlu0 %2674
      %2676 = vrot.lane.b32.xlu0 %v2659, 120
      %v2677 = vpop.permute.xlu0 %2676
      %2678 = vrot.lane.b32.xlu0 %v2660, 120
      %v2679 = vpop.permute.xlu0 %2678
      %2680 = vrot.lane.b32.xlu0 %v2661, 120
      %v2681 = vpop.permute.xlu0 %2680
      %2682 = vrot.lane.b32.xlu0 %v2662, 120
      %v2683 = vpop.permute.xlu0 %2682
      %2684 = vrot.lane.b32.xlu0 %v2663, 120
      %v2685 = vpop.permute.xlu0 %2684
      %2686 = vrot.lane.b32.xlu0 %v2664, 120
      %v2687 = vpop.permute.xlu0 %2686
      %2688 = vrot.lane.b32.xlu0 %v2665, 120
      %v2689 = vpop.permute.xlu0 %2688
      %v2698 = vsel %vm2618, %v2610, %v2675
      %v2699 = vsel %vm2619, %v2611, %v2677
      %v2700 = vsel %vm2620, %v2612, %v2679
      %v2701 = vsel %vm2621, %v2613, %v2681
      %v2702 = vsel %vm2622, %v2614, %v2683
      %v2703 = vsel %vm2623, %v2615, %v2685
      %v2704 = vsel %vm2624, %v2616, %v2687
      %v2705 = vsel %vm2625, %v2617, %v2689
      %2714 = vrot.lane.b32.xlu0 %v2698, 8
      %v2715 = vpop.permute.xlu0 %2714
      %2716 = vrot.lane.b32.xlu0 %v2699, 8
      %v2717 = vpop.permute.xlu0 %2716
      %2718 = vrot.lane.b32.xlu0 %v2700, 8
      %v2719 = vpop.permute.xlu0 %2718
      %2720 = vrot.lane.b32.xlu0 %v2701, 8
      %v2721 = vpop.permute.xlu0 %2720
      %2722 = vrot.lane.b32.xlu0 %v2702, 8
      %v2723 = vpop.permute.xlu0 %2722
      %2724 = vrot.lane.b32.xlu0 %v2703, 8
      %v2725 = vpop.permute.xlu0 %2724
      %2726 = vrot.lane.b32.xlu0 %v2704, 8
      %v2727 = vpop.permute.xlu0 %2726
      %2728 = vrot.lane.b32.xlu0 %v2705, 8
      %v2729 = vpop.permute.xlu0 %2728
      %vm2738 = vcmask 130112
      %2739 = vst.msk [vmem:[%s507] sm:$0xff] %vm2738, %v2715
      %2740 = vst.msk [vmem:[%s507 + $0x8] sm:$0xff] %vm2738, %v2717
      %2741 = vst.msk [vmem:[%s507 + $0x10] sm:$0xff] %vm2738, %v2719
      %2742 = vst.msk [vmem:[%s507 + $0x18] sm:$0xff] %vm2738, %v2721
      %2743 = vst.msk [vmem:[%s507 + $0x20] sm:$0xff] %vm2738, %v2723
      %2744 = vst.msk [vmem:[%s507 + $0x28] sm:$0xff] %vm2738, %v2725
      %2745 = vst.msk [vmem:[%s507 + $0x30] sm:$0xff] %vm2738, %v2727
      %2746 = vst.msk [vmem:[%s507 + $0x38] sm:$0xff] %vm2738, %v2729
      %s2747 = scalar_lea.vmem [#allocation2], 576
      %v2748 = vld [vmem:[%s2747] sm:$0xff]
      %v2749 = vld [vmem:[%s2747 + $0x10] sm:$0xff]
      %v2750 = vld [vmem:[%s2747 + $0x20] sm:$0xff]
      %v2751 = vld [vmem:[%s2747 + $0x30] sm:$0xff]
      %v2752 = vld [vmem:[%s2747 + $0x40] sm:$0xff]
      %v2753 = vld [vmem:[%s2747 + $0x50] sm:$0xff]
      %v2754 = vld [vmem:[%s2747 + $0x60] sm:$0xff]
      %v2755 = vld [vmem:[%s2747 + $0x70] sm:$0xff]
      %v2756 = vlaneseq
      %v2757 = vshrl.u32 %v2756, 7
      %v2758 = vsub.s32 0, %v2757
      %v2759 = vrot.slane %v1574, %v2758
      %v2760 = vmul.f32 %v2748, %v2759
      %v2761 = vmul.f32 %v2749, %v2759
      %v2762 = vmul.f32 %v2750, %v2759
      %v2763 = vmul.f32 %v2751, %v2759
      %v2764 = vmul.f32 %v2752, %v2759
      %v2765 = vmul.f32 %v2753, %v2759
      %v2766 = vmul.f32 %v2754, %v2759
      %v2767 = vmul.f32 %v2755, %v2759
      %v2768 = vadd.f32 %v2760, 0.0
      %v2769 = vadd.f32 %v2761, 0.0
      %v2770 = vadd.f32 %v2762, 0.0
      %v2771 = vadd.f32 %v2763, 0.0
      %v2772 = vadd.f32 %v2764, 0.0
      %v2773 = vadd.f32 %v2765, 0.0
      %v2774 = vadd.f32 %v2766, 0.0
      %v2775 = vadd.f32 %v2767, 0.0
      %s2776 = scalar_lea.vmem [#allocation2], 384
      %v2777 = vld [vmem:[%s2776 + $0x2] sm:$0xff]
      %v2778 = vld [vmem:[%s2776 + $0x12] sm:$0xff]
      %v2779 = vld [vmem:[%s2776 + $0x22] sm:$0xff]
      %v2780 = vld [vmem:[%s2776 + $0x32] sm:$0xff]
      %v2781 = vld [vmem:[%s2776 + $0x42] sm:$0xff]
      %v2782 = vld [vmem:[%s2776 + $0x52] sm:$0xff]
      %v2783 = vld [vmem:[%s2776 + $0x62] sm:$0xff]
      %v2784 = vld [vmem:[%s2776 + $0x72] sm:$0xff]
      %v2785 = vlaneseq
      %v2786 = vshrl.u32 %v2785, 7
      %v2787 = vsub.s32 1, %v2786
      %v2788 = vrot.slane %v1574, %v2787
      %v2789 = vmul.f32 %v2777, %v2788
      %v2790 = vmul.f32 %v2778, %v2788
      %v2791 = vmul.f32 %v2779, %v2788
      %v2792 = vmul.f32 %v2780, %v2788
      %v2793 = vmul.f32 %v2781, %v2788
      %v2794 = vmul.f32 %v2782, %v2788
      %v2795 = vmul.f32 %v2783, %v2788
      %v2796 = vmul.f32 %v2784, %v2788
      %v2797 = vadd.f32 %v2768, %v2789
      %v2798 = vadd.f32 %v2769, %v2790
      %v2799 = vadd.f32 %v2770, %v2791
      %v2800 = vadd.f32 %v2771, %v2792
      %v2801 = vadd.f32 %v2772, %v2793
      %v2802 = vadd.f32 %v2773, %v2794
      %v2803 = vadd.f32 %v2774, %v2795
      %v2804 = vadd.f32 %v2775, %v2796
      %v2805 = vld [vmem:[%s2747 + $0x3] sm:$0xff]
      %v2806 = vld [vmem:[%s2747 + $0x13] sm:$0xff]
      %v2807 = vld [vmem:[%s2747 + $0x23] sm:$0xff]
      %v2808 = vld [vmem:[%s2747 + $0x33] sm:$0xff]
      %v2809 = vld [vmem:[%s2747 + $0x43] sm:$0xff]
      %v2810 = vld [vmem:[%s2747 + $0x53] sm:$0xff]
      %v2811 = vld [vmem:[%s2747 + $0x63] sm:$0xff]
      %v2812 = vld [vmem:[%s2747 + $0x73] sm:$0xff]
      %v2813 = vlaneseq
      %v2814 = vshrl.u32 %v2813, 7
      %v2815 = vsub.s32 2, %v2814
      %v2816 = vrot.slane %v1574, %v2815
      %v2817 = vmul.f32 %v2805, %v2816
      %v2818 = vmul.f32 %v2806, %v2816
      %v2819 = vmul.f32 %v2807, %v2816
      %v2820 = vmul.f32 %v2808, %v2816
      %v2821 = vmul.f32 %v2809, %v2816
      %v2822 = vmul.f32 %v2810, %v2816
      %v2823 = vmul.f32 %v2811, %v2816
      %v2824 = vmul.f32 %v2812, %v2816
      %v2825 = vadd.f32 %v2797, %v2817
      %v2826 = vadd.f32 %v2798, %v2818
      %v2827 = vadd.f32 %v2799, %v2819
      %v2828 = vadd.f32 %v2800, %v2820
      %v2829 = vadd.f32 %v2801, %v2821
      %v2830 = vadd.f32 %v2802, %v2822
      %v2831 = vadd.f32 %v2803, %v2823
      %v2832 = vadd.f32 %v2804, %v2824
      %v2833 = vld [vmem:[%s1189] sm:$0xff]
      %v2834 = vld [vmem:[%s1189 + $0x10] sm:$0xff]
      %v2835 = vld [vmem:[%s1189 + $0x20] sm:$0xff]
      %v2836 = vld [vmem:[%s1189 + $0x30] sm:$0xff]
      %v2837 = vld [vmem:[%s1189 + $0x40] sm:$0xff]
      %v2838 = vld [vmem:[%s1189 + $0x50] sm:$0xff]
      %v2839 = vld [vmem:[%s1189 + $0x60] sm:$0xff]
      %v2840 = vld [vmem:[%s1189 + $0x70] sm:$0xff]
      %v2841 = vlaneseq
      %v2842 = vshrl.u32 %v2841, 7
      %v2843 = vsub.s32 3, %v2842
      %v2844 = vrot.slane %v1574, %v2843
      %v2845 = vmul.f32 %v2833, %v2844
      %v2846 = vmul.f32 %v2834, %v2844
      %v2847 = vmul.f32 %v2835, %v2844
      %v2848 = vmul.f32 %v2836, %v2844
      %v2849 = vmul.f32 %v2837, %v2844
      %v2850 = vmul.f32 %v2838, %v2844
      %v2851 = vmul.f32 %v2839, %v2844
      %v2852 = vmul.f32 %v2840, %v2844
      %v2853 = vadd.f32 %v2825, %v2845
      %v2854 = vadd.f32 %v2826, %v2846
      %v2855 = vadd.f32 %v2827, %v2847
      %v2856 = vadd.f32 %v2828, %v2848
      %v2857 = vadd.f32 %v2829, %v2849
      %v2858 = vadd.f32 %v2830, %v2850
      %v2859 = vadd.f32 %v2831, %v2851
      %v2860 = vadd.f32 %v2832, %v2852
      %v2861 = vld [vmem:[%s1003 + $0x2] sm:$0xff]
      %v2862 = vld [vmem:[%s1003 + $0x12] sm:$0xff]
      %v2863 = vld [vmem:[%s1003 + $0x22] sm:$0xff]
      %v2864 = vld [vmem:[%s1003 + $0x32] sm:$0xff]
      %v2865 = vld [vmem:[%s1003 + $0x42] sm:$0xff]
      %v2866 = vld [vmem:[%s1003 + $0x52] sm:$0xff]
      %v2867 = vld [vmem:[%s1003 + $0x62] sm:$0xff]
      %v2868 = vld [vmem:[%s1003 + $0x72] sm:$0xff]
      %v2869 = vlaneseq
      %v2870 = vshrl.u32 %v2869, 7
      %v2871 = vsub.s32 4, %v2870
      %v2872 = vrot.slane %v1574, %v2871
      %v2873 = vmul.f32 %v2861, %v2872
      %v2874 = vmul.f32 %v2862, %v2872
      %v2875 = vmul.f32 %v2863, %v2872
      %v2876 = vmul.f32 %v2864, %v2872
      %v2877 = vmul.f32 %v2865, %v2872
      %v2878 = vmul.f32 %v2866, %v2872
      %v2879 = vmul.f32 %v2867, %v2872
      %v2880 = vmul.f32 %v2868, %v2872
      %v2881 = vadd.f32 %v2853, %v2873
      %v2882 = vadd.f32 %v2854, %v2874
      %v2883 = vadd.f32 %v2855, %v2875
      %v2884 = vadd.f32 %v2856, %v2876
      %v2885 = vadd.f32 %v2857, %v2877
      %v2886 = vadd.f32 %v2858, %v2878
      %v2887 = vadd.f32 %v2859, %v2879
      %v2888 = vadd.f32 %v2860, %v2880
      %v2889 = vld [vmem:[%s1189 + $0x3] sm:$0xff]
      %v2890 = vld [vmem:[%s1189 + $0x13] sm:$0xff]
      %v2891 = vld [vmem:[%s1189 + $0x23] sm:$0xff]
      %v2892 = vld [vmem:[%s1189 + $0x33] sm:$0xff]
      %v2893 = vld [vmem:[%s1189 + $0x43] sm:$0xff]
      %v2894 = vld [vmem:[%s1189 + $0x53] sm:$0xff]
      %v2895 = vld [vmem:[%s1189 + $0x63] sm:$0xff]
      %v2896 = vld [vmem:[%s1189 + $0x73] sm:$0xff]
      %v2897 = vlaneseq
      %v2898 = vshrl.u32 %v2897, 7
      %v2899 = vsub.s32 5, %v2898
      %v2900 = vrot.slane %v1574, %v2899
      %v2901 = vmul.f32 %v2889, %v2900
      %v2902 = vmul.f32 %v2890, %v2900
      %v2903 = vmul.f32 %v2891, %v2900
      %v2904 = vmul.f32 %v2892, %v2900
      %v2905 = vmul.f32 %v2893, %v2900
      %v2906 = vmul.f32 %v2894, %v2900
      %v2907 = vmul.f32 %v2895, %v2900
      %v2908 = vmul.f32 %v2896, %v2900
      %v2909 = vadd.f32 %v2881, %v2901
      %v2910 = vadd.f32 %v2882, %v2902
      %v2911 = vadd.f32 %v2883, %v2903
      %v2912 = vadd.f32 %v2884, %v2904
      %v2913 = vadd.f32 %v2885, %v2905
      %v2914 = vadd.f32 %v2886, %v2906
      %v2915 = vadd.f32 %v2887, %v2907
      %v2916 = vadd.f32 %v2888, %v2908
      %s2917 = scalar_lea.vmem [#allocation2], 624
      %v2918 = vld [vmem:[%s2917] sm:$0xff]
      %v2919 = vld [vmem:[%s2917 + $0x10] sm:$0xff]
      %v2920 = vld [vmem:[%s2917 + $0x20] sm:$0xff]
      %v2921 = vld [vmem:[%s2917 + $0x30] sm:$0xff]
      %v2922 = vld [vmem:[%s2917 + $0x40] sm:$0xff]
      %v2923 = vld [vmem:[%s2917 + $0x50] sm:$0xff]
      %v2924 = vld [vmem:[%s2917 + $0x60] sm:$0xff]
      %v2925 = vld [vmem:[%s2917 + $0x70] sm:$0xff]
      %v2926 = vlaneseq
      %v2927 = vshrl.u32 %v2926, 7
      %v2928 = vsub.s32 6, %v2927
      %v2929 = vrot.slane %v1574, %v2928
      %v2930 = vmul.f32 %v2918, %v2929
      %v2931 = vmul.f32 %v2919, %v2929
      %v2932 = vmul.f32 %v2920, %v2929
      %v2933 = vmul.f32 %v2921, %v2929
      %v2934 = vmul.f32 %v2922, %v2929
      %v2935 = vmul.f32 %v2923, %v2929
      %v2936 = vmul.f32 %v2924, %v2929
      %v2937 = vmul.f32 %v2925, %v2929
      %v2938 = vadd.f32 %v2909, %v2930
      %v2939 = vadd.f32 %v2910, %v2931
      %v2940 = vadd.f32 %v2911, %v2932
      %v2941 = vadd.f32 %v2912, %v2933
      %v2942 = vadd.f32 %v2913, %v2934
      %v2943 = vadd.f32 %v2914, %v2935
      %v2944 = vadd.f32 %v2915, %v2936
      %v2945 = vadd.f32 %v2916, %v2937
      %s2946 = scalar_lea.vmem [#allocation2], 432
      %v2947 = vld [vmem:[%s2946 + $0x2] sm:$0xff]
      %v2948 = vld [vmem:[%s2946 + $0x12] sm:$0xff]
      %v2949 = vld [vmem:[%s2946 + $0x22] sm:$0xff]
      %v2950 = vld [vmem:[%s2946 + $0x32] sm:$0xff]
      %v2951 = vld [vmem:[%s2946 + $0x42] sm:$0xff]
      %v2952 = vld [vmem:[%s2946 + $0x52] sm:$0xff]
      %v2953 = vld [vmem:[%s2946 + $0x62] sm:$0xff]
      %v2954 = vld [vmem:[%s2946 + $0x72] sm:$0xff]
      %v2955 = vlaneseq
      %v2956 = vshrl.u32 %v2955, 7
      %v2957 = vsub.s32 7, %v2956
      %v2958 = vrot.slane %v1574, %v2957
      %v2959 = vmul.f32 %v2947, %v2958
      %v2960 = vmul.f32 %v2948, %v2958
      %v2961 = vmul.f32 %v2949, %v2958
      %v2962 = vmul.f32 %v2950, %v2958
      %v2963 = vmul.f32 %v2951, %v2958
      %v2964 = vmul.f32 %v2952, %v2958
      %v2965 = vmul.f32 %v2953, %v2958
      %v2966 = vmul.f32 %v2954, %v2958
      %v2967 = vadd.f32 %v2938, %v2959
      %v2968 = vadd.f32 %v2939, %v2960
      %v2969 = vadd.f32 %v2940, %v2961
      %v2970 = vadd.f32 %v2941, %v2962
      %v2971 = vadd.f32 %v2942, %v2963
      %v2972 = vadd.f32 %v2943, %v2964
      %v2973 = vadd.f32 %v2944, %v2965
      %v2974 = vadd.f32 %v2945, %v2966
      %v2975 = vld [vmem:[%s2917 + $0x3] sm:$0xff]
      %v2976 = vld [vmem:[%s2917 + $0x13] sm:$0xff]
      %v2977 = vld [vmem:[%s2917 + $0x23] sm:$0xff]
      %v2978 = vld [vmem:[%s2917 + $0x33] sm:$0xff]
      %v2979 = vld [vmem:[%s2917 + $0x43] sm:$0xff]
      %v2980 = vld [vmem:[%s2917 + $0x53] sm:$0xff]
      %v2981 = vld [vmem:[%s2917 + $0x63] sm:$0xff]
      %v2982 = vld [vmem:[%s2917 + $0x73] sm:$0xff]
      %v2983 = vlaneseq
      %v2984 = vshrl.u32 %v2983, 7
      %v2985 = vsub.s32 0, %v2984
      %v2986 = vrot.slane %v1575, %v2985
      %v2987 = vmul.f32 %v2975, %v2986
      %v2988 = vmul.f32 %v2976, %v2986
      %v2989 = vmul.f32 %v2977, %v2986
      %v2990 = vmul.f32 %v2978, %v2986
      %v2991 = vmul.f32 %v2979, %v2986
      %v2992 = vmul.f32 %v2980, %v2986
      %v2993 = vmul.f32 %v2981, %v2986
      %v2994 = vmul.f32 %v2982, %v2986
      %v2995 = vadd.f32 %v2967, %v2987
      %v2996 = vadd.f32 %v2968, %v2988
      %v2997 = vadd.f32 %v2969, %v2989
      %v2998 = vadd.f32 %v2970, %v2990
      %v2999 = vadd.f32 %v2971, %v2991
      %v3000 = vadd.f32 %v2972, %v2992
      %v3001 = vadd.f32 %v2973, %v2993
      %v3002 = vadd.f32 %v2974, %v2994
      %v3003 = vadd.f32 %v2995, %v2349
      %v3004 = vadd.f32 %v2996, %v2350
      %v3005 = vadd.f32 %v2997, %v2351
      %v3006 = vadd.f32 %v2998, %v2352
      %v3007 = vadd.f32 %v2999, %v2353
      %v3008 = vadd.f32 %v3000, %v2354
      %v3009 = vadd.f32 %v3001, %v2355
      %v3010 = vadd.f32 %v3002, %v2356
      %3011 = vrot.lane.b32.xlu0 %v1846, 112
      %v3012 = vpop.permute.xlu0 %3011
      %v3014 = vmul.f32 %v3003, %v3012
      %v3015 = vmul.f32 %v3004, %v3012
      %v3016 = vmul.f32 %v3005, %v3012
      %v3017 = vmul.f32 %v3006, %v3012
      %v3018 = vmul.f32 %v3007, %v3012
      %v3019 = vmul.f32 %v3008, %v3012
      %v3020 = vmul.f32 %v3009, %v3012
      %v3021 = vmul.f32 %v3010, %v3012
      %3022 = vrot.lane.b32.xlu0 %v1860, 112
      %v3023 = vpop.permute.xlu0 %3022
      %v3025 = vadd.f32 %v3014, %v3023
      %v3026 = vadd.f32 %v3015, %v3023
      %v3027 = vadd.f32 %v3016, %v3023
      %v3028 = vadd.f32 %v3017, %v3023
      %v3029 = vadd.f32 %v3018, %v3023
      %v3030 = vadd.f32 %v3019, %v3023
      %v3031 = vadd.f32 %v3020, %v3023
      %v3032 = vadd.f32 %v3021, %v3023
      %vm3033 = vcmp.ge.f32.partialorder %v3025, 0.0
      %vm3034 = vcmp.ge.f32.partialorder %v3026, 0.0
      %vm3035 = vcmp.ge.f32.partialorder %v3027, 0.0
      %vm3036 = vcmp.ge.f32.partialorder %v3028, 0.0
      %vm3037 = vcmp.ge.f32.partialorder %v3029, 0.0
      %vm3038 = vcmp.ge.f32.partialorder %v3030, 0.0
      %vm3039 = vcmp.ge.f32.partialorder %v3031, 0.0
      %vm3040 = vcmp.ge.f32.partialorder %v3032, 0.0
      %3049 = vrot.lane.b32.xlu0 %v3025, 16
      %v3050 = vpop.permute.xlu0 %3049
      %3051 = vrot.lane.b32.xlu0 %v3026, 16
      %v3052 = vpop.permute.xlu0 %3051
      %3053 = vrot.lane.b32.xlu0 %v3027, 16
      %v3054 = vpop.permute.xlu0 %3053
      %3055 = vrot.lane.b32.xlu0 %v3028, 16
      %v3056 = vpop.permute.xlu0 %3055
      %3057 = vrot.lane.b32.xlu0 %v3029, 16
      %v3058 = vpop.permute.xlu0 %3057
      %3059 = vrot.lane.b32.xlu0 %v3030, 16
      %v3060 = vpop.permute.xlu0 %3059
      %3061 = vrot.lane.b32.xlu0 %v3031, 16
      %v3062 = vpop.permute.xlu0 %3061
      %3063 = vrot.lane.b32.xlu0 %v3032, 16
      %v3064 = vpop.permute.xlu0 %3063
      %v3073 = vmul.f32 %v1882, %v3050
      %v3074 = vmul.f32 %v1882, %v3052
      %v3075 = vmul.f32 %v1882, %v3054
      %v3076 = vmul.f32 %v1882, %v3056
      %v3077 = vmul.f32 %v1882, %v3058
      %v3078 = vmul.f32 %v1882, %v3060
      %v3079 = vmul.f32 %v1882, %v3062
      %v3080 = vmul.f32 %v1882, %v3064
      %3089 = vrot.lane.b32.xlu0 %v3073, 112
      %v3090 = vpop.permute.xlu0 %3089
      %3091 = vrot.lane.b32.xlu0 %v3074, 112
      %v3092 = vpop.permute.xlu0 %3091
      %3093 = vrot.lane.b32.xlu0 %v3075, 112
      %v3094 = vpop.permute.xlu0 %3093
      %3095 = vrot.lane.b32.xlu0 %v3076, 112
      %v3096 = vpop.permute.xlu0 %3095
      %3097 = vrot.lane.b32.xlu0 %v3077, 112
      %v3098 = vpop.permute.xlu0 %3097
      %3099 = vrot.lane.b32.xlu0 %v3078, 112
      %v3100 = vpop.permute.xlu0 %3099
      %3101 = vrot.lane.b32.xlu0 %v3079, 112
      %v3102 = vpop.permute.xlu0 %3101
      %3103 = vrot.lane.b32.xlu0 %v3080, 112
      %v3104 = vpop.permute.xlu0 %3103
      %v3113 = vsel %vm3033, %v3025, %v3090
      %v3114 = vsel %vm3034, %v3026, %v3092
      %v3115 = vsel %vm3035, %v3027, %v3094
      %v3116 = vsel %vm3036, %v3028, %v3096
      %v3117 = vsel %vm3037, %v3029, %v3098
      %v3118 = vsel %vm3038, %v3030, %v3100
      %v3119 = vsel %vm3039, %v3031, %v3102
      %v3120 = vsel %vm3040, %v3032, %v3104
      %v3122 = vsel %vm705, %v3113, 0
      %v3125 = vsel %vm705, %v3114, 0
      %v3128 = vsel %vm705, %v3115, 0
      %v3131 = vsel %vm705, %v3116, 0
      %v3134 = vsel %vm705, %v3117, 0
      %v3137 = vsel %vm705, %v3118, 0
      %v3140 = vsel %vm705, %v3119, 0
      %v3143 = vsel %vm705, %v3120, 0
      %3145 = vmatprep.subr.mxu0 0.0
      %3146 = vmatpush1.msra.mxu0 0.0
      %3147 = vmatprep.subr.mxu0 0.0
      %3148 = vmatpush1.msra.mxu0 0.0
      %3149 = vmatprep.subr.mxu0 0.0
      %3150 = vmatpush1.msra.mxu0 0.0
      %3151 = vmatprep.subr.mxu0 0.0
      %3152 = vmatpush1.msra.mxu0 0.0
      %3153 = vmatprep.subr.mxu0 0.0
      %3154 = vmatpush1.msra.mxu0 0.0
      %3155 = vmatprep.subr.mxu0 0.0
      %3156 = vmatpush1.msra.mxu0 0.0
      %3157 = vmatprep.subr.mxu0 0.0
      %3158 = vmatpush1.msra.mxu0 0.0
      %3159 = vmatprep.subr.mxu0 0.0
      %3160 = vmatpush1.msra.mxu0 0.0
      %3161 = vmatprep.subr.mxu0 0.0
      %3162 = vmatpush1.msra.mxu0 0.0
      %3163 = vmatprep.subr.mxu0 0.0
      %3164 = vmatpush1.msra.mxu0 0.0
      %3165 = vmatprep.subr.mxu0 0.0
      %3166 = vmatpush1.msra.mxu0 0.0
      %3167 = vmatprep.subr.mxu0 0.0
      %3168 = vmatpush1.msra.mxu0 0.0
      %3169 = vmatprep.subr.mxu0 0.0
      %3170 = vmatpush1.msra.mxu0 0.0
      %3171 = vmatprep.subr.mxu0 0.0
      %3172 = vmatpush1.msra.mxu0 0.0
      %3173 = vmatprep.subr.mxu0 0.0
      %3174 = vmatpush1.msra.mxu0 0.0
      %3175 = vmatprep.subr.mxu0 0.0
      %3176 = vmatpush1.msra.mxu0 %v1580
      %3177 = vmatprep.subr.mxu0 0.0
      %3178 = vmatpush2.msra.mxu0 0.0
      %3179 = vmatprep.subr.mxu0 0.0
      %3180 = vmatpush2.msra.mxu0 0.0
      %3181 = vmatprep.subr.mxu0 0.0
      %3182 = vmatpush2.msra.mxu0 0.0
      %3183 = vmatprep.subr.mxu0 0.0
      %3184 = vmatpush2.msra.mxu0 0.0
      %3185 = vmatprep.subr.mxu0 0.0
      %3186 = vmatpush2.msra.mxu0 0.0
      %3187 = vmatprep.subr.mxu0 0.0
      %3188 = vmatpush2.msra.mxu0 0.0
      %3189 = vmatprep.subr.mxu0 0.0
      %3190 = vmatpush2.msra.mxu0 0.0
      %3191 = vmatprep.subr.mxu0 0.0
      %3192 = vmatpush2.msra.mxu0 0.0
      %3193 = vmatprep.subr.mxu0 0.0
      %3194 = vmatpush2.msra.mxu0 0.0
      %3195 = vmatprep.subr.mxu0 0.0
      %3196 = vmatpush2.msra.mxu0 0.0
      %3197 = vmatprep.subr.mxu0 0.0
      %3198 = vmatpush2.msra.mxu0 0.0
      %3199 = vmatprep.subr.mxu0 0.0
      %3200 = vmatpush2.msra.mxu0 0.0
      %3201 = vmatprep.subr.mxu0 0.0
      %3202 = vmatpush2.msra.mxu0 0.0
      %3203 = vmatprep.subr.mxu0 0.0
      %3204 = vmatpush2.msra.mxu0 0.0
      %3205 = vmatprep.subr.mxu0 0.0
      %3206 = vmatpush2.msra.mxu0 0.0
      %3207 = vmatprep.subr.mxu0 0.0
      %3208 = vmatpush2.msra.mxu0 0.0
      %3209 = vmatprep.mubr.f32.mxu0 0.0
      %3210 = vmatmul.mubr.f32.gmra.mxu0 %v3122
      %v3211 = vpop.f32.mrf.mxu0
      %v3212 = vadd.f32 0.0, %v3211
      %v3213 = vpop.f32.mrf.mxu0
      %3214 = vmatprep.mubr.f32.mxu0 0.0
      %3215 = vmatmul.mubr.f32.gmra.mxu0 %v3125
      %v3216 = vpop.f32.mrf.mxu0
      %v3217 = vadd.f32 0.0, %v3216
      %v3218 = vpop.f32.mrf.mxu0
      %3219 = vmatprep.mubr.f32.mxu0 0.0
      %3220 = vmatmul.mubr.f32.gmra.mxu0 %v3128
      %v3221 = vpop.f32.mrf.mxu0
      %v3222 = vadd.f32 0.0, %v3221
      %v3223 = vpop.f32.mrf.mxu0
      %3224 = vmatprep.mubr.f32.mxu0 0.0
      %3225 = vmatmul.mubr.f32.gmra.mxu0 %v3131
      %v3226 = vpop.f32.mrf.mxu0
      %v3227 = vadd.f32 0.0, %v3226
      %v3228 = vpop.f32.mrf.mxu0
      %3229 = vmatprep.mubr.f32.mxu0 0.0
      %3230 = vmatmul.mubr.f32.gmra.mxu0 %v3134
      %v3231 = vpop.f32.mrf.mxu0
      %v3232 = vadd.f32 0.0, %v3231
      %v3233 = vpop.f32.mrf.mxu0
      %3234 = vmatprep.mubr.f32.mxu0 0.0
      %3235 = vmatmul.mubr.f32.gmra.mxu0 %v3137
      %v3236 = vpop.f32.mrf.mxu0
      %v3237 = vadd.f32 0.0, %v3236
      %v3238 = vpop.f32.mrf.mxu0
      %3239 = vmatprep.mubr.f32.mxu0 0.0
      %3240 = vmatmul.mubr.f32.gmra.mxu0 %v3140
      %v3241 = vpop.f32.mrf.mxu0
      %v3242 = vadd.f32 0.0, %v3241
      %v3243 = vpop.f32.mrf.mxu0
      %3244 = vmatprep.mubr.f32.mxu0 0.0
      %3245 = vmatmul.mubr.f32.gmra.mxu0 %v3143
      %v3246 = vpop.f32.mrf.mxu0
      %v3247 = vadd.f32 0.0, %v3246
      %v3248 = vpop.f32.mrf.mxu0
      %3249 = vdwg.mxu0
      %3250 = vrot.lane.b32.xlu0 %v2033, 112
      %v3251 = vpop.permute.xlu0 %3250
      %v3253 = vmul.f32 %v3212, %v3251
      %v3254 = vmul.f32 %v3217, %v3251
      %v3255 = vmul.f32 %v3222, %v3251
      %v3256 = vmul.f32 %v3227, %v3251
      %v3257 = vmul.f32 %v3232, %v3251
      %v3258 = vmul.f32 %v3237, %v3251
      %v3259 = vmul.f32 %v3242, %v3251
      %v3260 = vmul.f32 %v3247, %v3251
      %3261 = vrot.lane.b32.xlu0 %v2047, 112
      %v3262 = vpop.permute.xlu0 %3261
      %v3264 = vadd.f32 %v3253, %v3262
      %v3265 = vadd.f32 %v3254, %v3262
      %v3266 = vadd.f32 %v3255, %v3262
      %v3267 = vadd.f32 %v3256, %v3262
      %v3268 = vadd.f32 %v3257, %v3262
      %v3269 = vadd.f32 %v3258, %v3262
      %v3270 = vadd.f32 %v3259, %v3262
      %v3271 = vadd.f32 %v3260, %v3262
      %vm3272 = vcmp.ge.f32.partialorder %v3264, 0.0
      %vm3273 = vcmp.ge.f32.partialorder %v3265, 0.0
      %vm3274 = vcmp.ge.f32.partialorder %v3266, 0.0
      %vm3275 = vcmp.ge.f32.partialorder %v3267, 0.0
      %vm3276 = vcmp.ge.f32.partialorder %v3268, 0.0
      %vm3277 = vcmp.ge.f32.partialorder %v3269, 0.0
      %vm3278 = vcmp.ge.f32.partialorder %v3270, 0.0
      %vm3279 = vcmp.ge.f32.partialorder %v3271, 0.0
      %3288 = vrot.lane.b32.xlu0 %v3264, 16
      %v3289 = vpop.permute.xlu0 %3288
      %3290 = vrot.lane.b32.xlu0 %v3265, 16
      %v3291 = vpop.permute.xlu0 %3290
      %3292 = vrot.lane.b32.xlu0 %v3266, 16
      %v3293 = vpop.permute.xlu0 %3292
      %3294 = vrot.lane.b32.xlu0 %v3267, 16
      %v3295 = vpop.permute.xlu0 %3294
      %3296 = vrot.lane.b32.xlu0 %v3268, 16
      %v3297 = vpop.permute.xlu0 %3296
      %3298 = vrot.lane.b32.xlu0 %v3269, 16
      %v3299 = vpop.permute.xlu0 %3298
      %3300 = vrot.lane.b32.xlu0 %v3270, 16
      %v3301 = vpop.permute.xlu0 %3300
      %3302 = vrot.lane.b32.xlu0 %v3271, 16
      %v3303 = vpop.permute.xlu0 %3302
      %v3312 = vmul.f32 %v2069, %v3289
      %v3313 = vmul.f32 %v2069, %v3291
      %v3314 = vmul.f32 %v2069, %v3293
      %v3315 = vmul.f32 %v2069, %v3295
      %v3316 = vmul.f32 %v2069, %v3297
      %v3317 = vmul.f32 %v2069, %v3299
      %v3318 = vmul.f32 %v2069, %v3301
      %v3319 = vmul.f32 %v2069, %v3303
      %3328 = vrot.lane.b32.xlu0 %v3312, 112
      %v3329 = vpop.permute.xlu0 %3328
      %3330 = vrot.lane.b32.xlu0 %v3313, 112
      %v3331 = vpop.permute.xlu0 %3330
      %3332 = vrot.lane.b32.xlu0 %v3314, 112
      %v3333 = vpop.permute.xlu0 %3332
      %3334 = vrot.lane.b32.xlu0 %v3315, 112
      %v3335 = vpop.permute.xlu0 %3334
      %3336 = vrot.lane.b32.xlu0 %v3316, 112
      %v3337 = vpop.permute.xlu0 %3336
      %3338 = vrot.lane.b32.xlu0 %v3317, 112
      %v3339 = vpop.permute.xlu0 %3338
      %3340 = vrot.lane.b32.xlu0 %v3318, 112
      %v3341 = vpop.permute.xlu0 %3340
      %3342 = vrot.lane.b32.xlu0 %v3319, 112
      %v3343 = vpop.permute.xlu0 %3342
      %v3352 = vsel %vm3272, %v3264, %v3329
      %v3353 = vsel %vm3273, %v3265, %v3331
      %v3354 = vsel %vm3274, %v3266, %v3333
      %v3355 = vsel %vm3275, %v3267, %v3335
      %v3356 = vsel %vm3276, %v3268, %v3337
      %v3357 = vsel %vm3277, %v3269, %v3339
      %v3358 = vsel %vm3278, %v3270, %v3341
      %v3359 = vsel %vm3279, %v3271, %v3343
      %3368 = vrot.lane.b32.xlu0 %v3352, 16
      %v3369 = vpop.permute.xlu0 %3368
      %3370 = vrot.lane.b32.xlu0 %v3353, 16
      %v3371 = vpop.permute.xlu0 %3370
      %3372 = vrot.lane.b32.xlu0 %v3354, 16
      %v3373 = vpop.permute.xlu0 %3372
      %3374 = vrot.lane.b32.xlu0 %v3355, 16
      %v3375 = vpop.permute.xlu0 %3374
      %3376 = vrot.lane.b32.xlu0 %v3356, 16
      %v3377 = vpop.permute.xlu0 %3376
      %3378 = vrot.lane.b32.xlu0 %v3357, 16
      %v3379 = vpop.permute.xlu0 %3378
      %3380 = vrot.lane.b32.xlu0 %v3358, 16
      %v3381 = vpop.permute.xlu0 %3380
      %3382 = vrot.lane.b32.xlu0 %v3359, 16
      %v3383 = vpop.permute.xlu0 %3382
      %vm3392 = vcmask 195712
      %3393 = vst.msk [vmem:[%s507] sm:$0xff] %vm3392, %v3369
      %3394 = vst.msk [vmem:[%s507 + $0x8] sm:$0xff] %vm3392, %v3371
      %3395 = vst.msk [vmem:[%s507 + $0x10] sm:$0xff] %vm3392, %v3373
      %3396 = vst.msk [vmem:[%s507 + $0x18] sm:$0xff] %vm3392, %v3375
      %3397 = vst.msk [vmem:[%s507 + $0x20] sm:$0xff] %vm3392, %v3377
      %3398 = vst.msk [vmem:[%s507 + $0x28] sm:$0xff] %vm3392, %v3379
      %3399 = vst.msk [vmem:[%s507 + $0x30] sm:$0xff] %vm3392, %v3381
      %3400 = vst.msk [vmem:[%s507 + $0x38] sm:$0xff] %vm3392, %v3383
      %v3401 = vld [vmem:[#allocation2] sm:$0xff]
      %v3402 = vld [vmem:[#allocation2 + $0x10] sm:$0xff]
      %v3403 = vld [vmem:[#allocation2 + $0x20] sm:$0xff]
      %v3404 = vld [vmem:[#allocation2 + $0x30] sm:$0xff]
      %v3405 = vld [vmem:[#allocation2 + $0x40] sm:$0xff]
      %v3406 = vld [vmem:[#allocation2 + $0x50] sm:$0xff]
      %v3407 = vld [vmem:[#allocation2 + $0x60] sm:$0xff]
      %v3408 = vld [vmem:[#allocation2 + $0x70] sm:$0xff]
      %v3409 = vlaneseq
      %v3410 = vshrl.u32 %v3409, 7
      %v3411 = vsub.s32 0, %v3410
      %v3412 = vrot.slane %v1576, %v3411
      %v3413 = vmul.f32 %v3401, %v3412
      %v3414 = vmul.f32 %v3402, %v3412
      %v3415 = vmul.f32 %v3403, %v3412
      %v3416 = vmul.f32 %v3404, %v3412
      %v3417 = vmul.f32 %v3405, %v3412
      %v3418 = vmul.f32 %v3406, %v3412
      %v3419 = vmul.f32 %v3407, %v3412
      %v3420 = vmul.f32 %v3408, %v3412
      %v3421 = vadd.f32 %v3413, 0.0
      %v3422 = vadd.f32 %v3414, 0.0
      %v3423 = vadd.f32 %v3415, 0.0
      %v3424 = vadd.f32 %v3416, 0.0
      %v3425 = vadd.f32 %v3417, 0.0
      %v3426 = vadd.f32 %v3418, 0.0
      %v3427 = vadd.f32 %v3419, 0.0
      %v3428 = vadd.f32 %v3420, 0.0
      %v3429 = vld [vmem:[#allocation2 + $0x2] sm:$0xff]
      %v3430 = vld [vmem:[#allocation2 + $0x12] sm:$0xff]
      %v3431 = vld [vmem:[#allocation2 + $0x22] sm:$0xff]
      %v3432 = vld [vmem:[#allocation2 + $0x32] sm:$0xff]
      %v3433 = vld [vmem:[#allocation2 + $0x42] sm:$0xff]
      %v3434 = vld [vmem:[#allocation2 + $0x52] sm:$0xff]
      %v3435 = vld [vmem:[#allocation2 + $0x62] sm:$0xff]
      %v3436 = vld [vmem:[#allocation2 + $0x72] sm:$0xff]
      %v3437 = vlaneseq
      %v3438 = vshrl.u32 %v3437, 7
      %v3439 = vsub.s32 1, %v3438
      %v3440 = vrot.slane %v1576, %v3439
      %v3441 = vmul.f32 %v3429, %v3440
      %v3442 = vmul.f32 %v3430, %v3440
      %v3443 = vmul.f32 %v3431, %v3440
      %v3444 = vmul.f32 %v3432, %v3440
      %v3445 = vmul.f32 %v3433, %v3440
      %v3446 = vmul.f32 %v3434, %v3440
      %v3447 = vmul.f32 %v3435, %v3440
      %v3448 = vmul.f32 %v3436, %v3440
      %v3449 = vadd.f32 %v3421, %v3441
      %v3450 = vadd.f32 %v3422, %v3442
      %v3451 = vadd.f32 %v3423, %v3443
      %v3452 = vadd.f32 %v3424, %v3444
      %v3453 = vadd.f32 %v3425, %v3445
      %v3454 = vadd.f32 %v3426, %v3446
      %v3455 = vadd.f32 %v3427, %v3447
      %v3456 = vadd.f32 %v3428, %v3448
      %v3457 = vld [vmem:[#allocation2 + $0x4] sm:$0xff]
      %v3458 = vld [vmem:[#allocation2 + $0x14] sm:$0xff]
      %v3459 = vld [vmem:[#allocation2 + $0x24] sm:$0xff]
      %v3460 = vld [vmem:[#allocation2 + $0x34] sm:$0xff]
      %v3461 = vld [vmem:[#allocation2 + $0x44] sm:$0xff]
      %v3462 = vld [vmem:[#allocation2 + $0x54] sm:$0xff]
      %v3463 = vld [vmem:[#allocation2 + $0x64] sm:$0xff]
      %v3464 = vld [vmem:[#allocation2 + $0x74] sm:$0xff]
      %v3465 = vlaneseq
      %v3466 = vshrl.u32 %v3465, 7
      %v3467 = vsub.s32 2, %v3466
      %v3468 = vrot.slane %v1576, %v3467
      %v3469 = vmul.f32 %v3457, %v3468
      %v3470 = vmul.f32 %v3458, %v3468
      %v3471 = vmul.f32 %v3459, %v3468
      %v3472 = vmul.f32 %v3460, %v3468
      %v3473 = vmul.f32 %v3461, %v3468
      %v3474 = vmul.f32 %v3462, %v3468
      %v3475 = vmul.f32 %v3463, %v3468
      %v3476 = vmul.f32 %v3464, %v3468
      %v3477 = vadd.f32 %v3449, %v3469
      %v3478 = vadd.f32 %v3450, %v3470
      %v3479 = vadd.f32 %v3451, %v3471
      %v3480 = vadd.f32 %v3452, %v3472
      %v3481 = vadd.f32 %v3453, %v3473
      %v3482 = vadd.f32 %v3454, %v3474
      %v3483 = vadd.f32 %v3455, %v3475
      %v3484 = vadd.f32 %v3456, %v3476
      %v3485 = vld [vmem:[%s1003] sm:$0xff]
      %v3486 = vld [vmem:[%s1003 + $0x10] sm:$0xff]
      %v3487 = vld [vmem:[%s1003 + $0x20] sm:$0xff]
      %v3488 = vld [vmem:[%s1003 + $0x30] sm:$0xff]
      %v3489 = vld [vmem:[%s1003 + $0x40] sm:$0xff]
      %v3490 = vld [vmem:[%s1003 + $0x50] sm:$0xff]
      %v3491 = vld [vmem:[%s1003 + $0x60] sm:$0xff]
      %v3492 = vld [vmem:[%s1003 + $0x70] sm:$0xff]
      %v3493 = vlaneseq
      %v3494 = vshrl.u32 %v3493, 7
      %v3495 = vsub.s32 3, %v3494
      %v3496 = vrot.slane %v1576, %v3495
      %v3497 = vmul.f32 %v3485, %v3496
      %v3498 = vmul.f32 %v3486, %v3496
      %v3499 = vmul.f32 %v3487, %v3496
      %v3500 = vmul.f32 %v3488, %v3496
      %v3501 = vmul.f32 %v3489, %v3496
      %v3502 = vmul.f32 %v3490, %v3496
      %v3503 = vmul.f32 %v3491, %v3496
      %v3504 = vmul.f32 %v3492, %v3496
      %v3505 = vadd.f32 %v3477, %v3497
      %v3506 = vadd.f32 %v3478, %v3498
      %v3507 = vadd.f32 %v3479, %v3499
      %v3508 = vadd.f32 %v3480, %v3500
      %v3509 = vadd.f32 %v3481, %v3501
      %v3510 = vadd.f32 %v3482, %v3502
      %v3511 = vadd.f32 %v3483, %v3503
      %v3512 = vadd.f32 %v3484, %v3504
      %v3513 = vld [vmem:[%s1003 + $0x2] sm:$0xff]
      %v3514 = vld [vmem:[%s1003 + $0x12] sm:$0xff]
      %v3515 = vld [vmem:[%s1003 + $0x22] sm:$0xff]
      %v3516 = vld [vmem:[%s1003 + $0x32] sm:$0xff]
      %v3517 = vld [vmem:[%s1003 + $0x42] sm:$0xff]
      %v3518 = vld [vmem:[%s1003 + $0x52] sm:$0xff]
      %v3519 = vld [vmem:[%s1003 + $0x62] sm:$0xff]
      %v3520 = vld [vmem:[%s1003 + $0x72] sm:$0xff]
      %v3521 = vlaneseq
      %v3522 = vshrl.u32 %v3521, 7
      %v3523 = vsub.s32 4, %v3522
      %v3524 = vrot.slane %v1576, %v3523
      %v3525 = vmul.f32 %v3513, %v3524
      %v3526 = vmul.f32 %v3514, %v3524
      %v3527 = vmul.f32 %v3515, %v3524
      %v3528 = vmul.f32 %v3516, %v3524
      %v3529 = vmul.f32 %v3517, %v3524
      %v3530 = vmul.f32 %v3518, %v3524
      %v3531 = vmul.f32 %v3519, %v3524
      %v3532 = vmul.f32 %v3520, %v3524
      %v3533 = vadd.f32 %v3505, %v3525
      %v3534 = vadd.f32 %v3506, %v3526
      %v3535 = vadd.f32 %v3507, %v3527
      %v3536 = vadd.f32 %v3508, %v3528
      %v3537 = vadd.f32 %v3509, %v3529
      %v3538 = vadd.f32 %v3510, %v3530
      %v3539 = vadd.f32 %v3511, %v3531
      %v3540 = vadd.f32 %v3512, %v3532
      %v3541 = vld [vmem:[%s1003 + $0x4] sm:$0xff]
      %v3542 = vld [vmem:[%s1003 + $0x14] sm:$0xff]
      %v3543 = vld [vmem:[%s1003 + $0x24] sm:$0xff]
      %v3544 = vld [vmem:[%s1003 + $0x34] sm:$0xff]
      %v3545 = vld [vmem:[%s1003 + $0x44] sm:$0xff]
      %v3546 = vld [vmem:[%s1003 + $0x54] sm:$0xff]
      %v3547 = vld [vmem:[%s1003 + $0x64] sm:$0xff]
      %v3548 = vld [vmem:[%s1003 + $0x74] sm:$0xff]
      %v3549 = vlaneseq
      %v3550 = vshrl.u32 %v3549, 7
      %v3551 = vsub.s32 5, %v3550
      %v3552 = vrot.slane %v1576, %v3551
      %v3553 = vmul.f32 %v3541, %v3552
      %v3554 = vmul.f32 %v3542, %v3552
      %v3555 = vmul.f32 %v3543, %v3552
      %v3556 = vmul.f32 %v3544, %v3552
      %v3557 = vmul.f32 %v3545, %v3552
      %v3558 = vmul.f32 %v3546, %v3552
      %v3559 = vmul.f32 %v3547, %v3552
      %v3560 = vmul.f32 %v3548, %v3552
      %v3561 = vadd.f32 %v3533, %v3553
      %v3562 = vadd.f32 %v3534, %v3554
      %v3563 = vadd.f32 %v3535, %v3555
      %v3564 = vadd.f32 %v3536, %v3556
      %v3565 = vadd.f32 %v3537, %v3557
      %v3566 = vadd.f32 %v3538, %v3558
      %v3567 = vadd.f32 %v3539, %v3559
      %v3568 = vadd.f32 %v3540, %v3560
      %s3569 = scalar_lea.vmem [#allocation2], 64
      %v3570 = vld [vmem:[%s3569] sm:$0xff]
      %v3571 = vld [vmem:[%s3569 + $0x10] sm:$0xff]
      %v3572 = vld [vmem:[%s3569 + $0x20] sm:$0xff]
      %v3573 = vld [vmem:[%s3569 + $0x30] sm:$0xff]
      %v3574 = vld [vmem:[%s3569 + $0x40] sm:$0xff]
      %v3575 = vld [vmem:[%s3569 + $0x50] sm:$0xff]
      %v3576 = vld [vmem:[%s3569 + $0x60] sm:$0xff]
      %v3577 = vld [vmem:[%s3569 + $0x70] sm:$0xff]
      %v3578 = vlaneseq
      %v3579 = vshrl.u32 %v3578, 7
      %v3580 = vsub.s32 6, %v3579
      %v3581 = vrot.slane %v1576, %v3580
      %v3582 = vmul.f32 %v3570, %v3581
      %v3583 = vmul.f32 %v3571, %v3581
      %v3584 = vmul.f32 %v3572, %v3581
      %v3585 = vmul.f32 %v3573, %v3581
      %v3586 = vmul.f32 %v3574, %v3581
      %v3587 = vmul.f32 %v3575, %v3581
      %v3588 = vmul.f32 %v3576, %v3581
      %v3589 = vmul.f32 %v3577, %v3581
      %v3590 = vadd.f32 %v3561, %v3582
      %v3591 = vadd.f32 %v3562, %v3583
      %v3592 = vadd.f32 %v3563, %v3584
      %v3593 = vadd.f32 %v3564, %v3585
      %v3594 = vadd.f32 %v3565, %v3586
      %v3595 = vadd.f32 %v3566, %v3587
      %v3596 = vadd.f32 %v3567, %v3588
      %v3597 = vadd.f32 %v3568, %v3589
      %v3598 = vld [vmem:[%s3569 + $0x2] sm:$0xff]
      %v3599 = vld [vmem:[%s3569 + $0x12] sm:$0xff]
      %v3600 = vld [vmem:[%s3569 + $0x22] sm:$0xff]
      %v3601 = vld [vmem:[%s3569 + $0x32] sm:$0xff]
      %v3602 = vld [vmem:[%s3569 + $0x42] sm:$0xff]
      %v3603 = vld [vmem:[%s3569 + $0x52] sm:$0xff]
      %v3604 = vld [vmem:[%s3569 + $0x62] sm:$0xff]
      %v3605 = vld [vmem:[%s3569 + $0x72] sm:$0xff]
      %v3606 = vlaneseq
      %v3607 = vshrl.u32 %v3606, 7
      %v3608 = vsub.s32 7, %v3607
      %v3609 = vrot.slane %v1576, %v3608
      %v3610 = vmul.f32 %v3598, %v3609
      %v3611 = vmul.f32 %v3599, %v3609
      %v3612 = vmul.f32 %v3600, %v3609
      %v3613 = vmul.f32 %v3601, %v3609
      %v3614 = vmul.f32 %v3602, %v3609
      %v3615 = vmul.f32 %v3603, %v3609
      %v3616 = vmul.f32 %v3604, %v3609
      %v3617 = vmul.f32 %v3605, %v3609
      %v3618 = vadd.f32 %v3590, %v3610
      %v3619 = vadd.f32 %v3591, %v3611
      %v3620 = vadd.f32 %v3592, %v3612
      %v3621 = vadd.f32 %v3593, %v3613
      %v3622 = vadd.f32 %v3594, %v3614
      %v3623 = vadd.f32 %v3595, %v3615
      %v3624 = vadd.f32 %v3596, %v3616
      %v3625 = vadd.f32 %v3597, %v3617
      %v3626 = vld [vmem:[%s3569 + $0x4] sm:$0xff]
      %v3627 = vld [vmem:[%s3569 + $0x14] sm:$0xff]
      %v3628 = vld [vmem:[%s3569 + $0x24] sm:$0xff]
      %v3629 = vld [vmem:[%s3569 + $0x34] sm:$0xff]
      %v3630 = vld [vmem:[%s3569 + $0x44] sm:$0xff]
      %v3631 = vld [vmem:[%s3569 + $0x54] sm:$0xff]
      %v3632 = vld [vmem:[%s3569 + $0x64] sm:$0xff]
      %v3633 = vld [vmem:[%s3569 + $0x74] sm:$0xff]
      %v3634 = vlaneseq
      %v3635 = vshrl.u32 %v3634, 7
      %v3636 = vsub.s32 0, %v3635
      %v3637 = vrot.slane %v1577, %v3636
      %v3638 = vmul.f32 %v3626, %v3637
      %v3639 = vmul.f32 %v3627, %v3637
      %v3640 = vmul.f32 %v3628, %v3637
      %v3641 = vmul.f32 %v3629, %v3637
      %v3642 = vmul.f32 %v3630, %v3637
      %v3643 = vmul.f32 %v3631, %v3637
      %v3644 = vmul.f32 %v3632, %v3637
      %v3645 = vmul.f32 %v3633, %v3637
      %v3646 = vadd.f32 %v3618, %v3638
      %v3647 = vadd.f32 %v3619, %v3639
      %v3648 = vadd.f32 %v3620, %v3640
      %v3649 = vadd.f32 %v3621, %v3641
      %v3650 = vadd.f32 %v3622, %v3642
      %v3651 = vadd.f32 %v3623, %v3643
      %v3652 = vadd.f32 %v3624, %v3644
      %v3653 = vadd.f32 %v3625, %v3645
      %v3654 = vadd.f32 %v3646, %v3003
      %v3655 = vadd.f32 %v3647, %v3004
      %v3656 = vadd.f32 %v3648, %v3005
      %v3657 = vadd.f32 %v3649, %v3006
      %v3658 = vadd.f32 %v3650, %v3007
      %v3659 = vadd.f32 %v3651, %v3008
      %v3660 = vadd.f32 %v3652, %v3009
      %v3661 = vadd.f32 %v3653, %v3010
      %3662 = vrot.lane.b32.xlu0 %v1846, 104
      %v3663 = vpop.permute.xlu0 %3662
      %v3665 = vmul.f32 %v3654, %v3663
      %v3666 = vmul.f32 %v3655, %v3663
      %v3667 = vmul.f32 %v3656, %v3663
      %v3668 = vmul.f32 %v3657, %v3663
      %v3669 = vmul.f32 %v3658, %v3663
      %v3670 = vmul.f32 %v3659, %v3663
      %v3671 = vmul.f32 %v3660, %v3663
      %v3672 = vmul.f32 %v3661, %v3663
      %3673 = vrot.lane.b32.xlu0 %v1860, 104
      %v3674 = vpop.permute.xlu0 %3673
      %v3676 = vadd.f32 %v3665, %v3674
      %v3677 = vadd.f32 %v3666, %v3674
      %v3678 = vadd.f32 %v3667, %v3674
      %v3679 = vadd.f32 %v3668, %v3674
      %v3680 = vadd.f32 %v3669, %v3674
      %v3681 = vadd.f32 %v3670, %v3674
      %v3682 = vadd.f32 %v3671, %v3674
      %v3683 = vadd.f32 %v3672, %v3674
      %vm3684 = vcmp.ge.f32.partialorder %v3676, 0.0
      %vm3685 = vcmp.ge.f32.partialorder %v3677, 0.0
      %vm3686 = vcmp.ge.f32.partialorder %v3678, 0.0
      %vm3687 = vcmp.ge.f32.partialorder %v3679, 0.0
      %vm3688 = vcmp.ge.f32.partialorder %v3680, 0.0
      %vm3689 = vcmp.ge.f32.partialorder %v3681, 0.0
      %vm3690 = vcmp.ge.f32.partialorder %v3682, 0.0
      %vm3691 = vcmp.ge.f32.partialorder %v3683, 0.0
      %3700 = vrot.lane.b32.xlu0 %v3676, 24
      %v3701 = vpop.permute.xlu0 %3700
      %3702 = vrot.lane.b32.xlu0 %v3677, 24
      %v3703 = vpop.permute.xlu0 %3702
      %3704 = vrot.lane.b32.xlu0 %v3678, 24
      %v3705 = vpop.permute.xlu0 %3704
      %3706 = vrot.lane.b32.xlu0 %v3679, 24
      %v3707 = vpop.permute.xlu0 %3706
      %3708 = vrot.lane.b32.xlu0 %v3680, 24
      %v3709 = vpop.permute.xlu0 %3708
      %3710 = vrot.lane.b32.xlu0 %v3681, 24
      %v3711 = vpop.permute.xlu0 %3710
      %3712 = vrot.lane.b32.xlu0 %v3682, 24
      %v3713 = vpop.permute.xlu0 %3712
      %3714 = vrot.lane.b32.xlu0 %v3683, 24
      %v3715 = vpop.permute.xlu0 %3714
      %v3724 = vmul.f32 %v1882, %v3701
      %v3725 = vmul.f32 %v1882, %v3703
      %v3726 = vmul.f32 %v1882, %v3705
      %v3727 = vmul.f32 %v1882, %v3707
      %v3728 = vmul.f32 %v1882, %v3709
      %v3729 = vmul.f32 %v1882, %v3711
      %v3730 = vmul.f32 %v1882, %v3713
      %v3731 = vmul.f32 %v1882, %v3715
      %3740 = vrot.lane.b32.xlu0 %v3724, 104
      %v3741 = vpop.permute.xlu0 %3740
      %3742 = vrot.lane.b32.xlu0 %v3725, 104
      %v3743 = vpop.permute.xlu0 %3742
      %3744 = vrot.lane.b32.xlu0 %v3726, 104
      %v3745 = vpop.permute.xlu0 %3744
      %3746 = vrot.lane.b32.xlu0 %v3727, 104
      %v3747 = vpop.permute.xlu0 %3746
      %3748 = vrot.lane.b32.xlu0 %v3728, 104
      %v3749 = vpop.permute.xlu0 %3748
      %3750 = vrot.lane.b32.xlu0 %v3729, 104
      %v3751 = vpop.permute.xlu0 %3750
      %3752 = vrot.lane.b32.xlu0 %v3730, 104
      %v3753 = vpop.permute.xlu0 %3752
      %3754 = vrot.lane.b32.xlu0 %v3731, 104
      %v3755 = vpop.permute.xlu0 %3754
      %v3764 = vsel %vm3684, %v3676, %v3741
      %v3765 = vsel %vm3685, %v3677, %v3743
      %v3766 = vsel %vm3686, %v3678, %v3745
      %v3767 = vsel %vm3687, %v3679, %v3747
      %v3768 = vsel %vm3688, %v3680, %v3749
      %v3769 = vsel %vm3689, %v3681, %v3751
      %v3770 = vsel %vm3690, %v3682, %v3753
      %v3771 = vsel %vm3691, %v3683, %v3755
      %v3773 = vsel %vm705, %v3764, 0
      %v3776 = vsel %vm705, %v3765, 0
      %v3779 = vsel %vm705, %v3766, 0
      %v3782 = vsel %vm705, %v3767, 0
      %v3785 = vsel %vm705, %v3768, 0
      %v3788 = vsel %vm705, %v3769, 0
      %v3791 = vsel %vm705, %v3770, 0
      %v3794 = vsel %vm705, %v3771, 0
      %3796 = vmatprep.subr.mxu0 0.0
      %3797 = vmatpush1.msra.mxu0 0.0
      %3798 = vmatprep.subr.mxu0 0.0
      %3799 = vmatpush1.msra.mxu0 0.0
      %3800 = vmatprep.subr.mxu0 0.0
      %3801 = vmatpush1.msra.mxu0 0.0
      %3802 = vmatprep.subr.mxu0 0.0
      %3803 = vmatpush1.msra.mxu0 0.0
      %3804 = vmatprep.subr.mxu0 0.0
      %3805 = vmatpush1.msra.mxu0 0.0
      %3806 = vmatprep.subr.mxu0 0.0
      %3807 = vmatpush1.msra.mxu0 0.0
      %3808 = vmatprep.subr.mxu0 0.0
      %3809 = vmatpush1.msra.mxu0 0.0
      %3810 = vmatprep.subr.mxu0 0.0
      %3811 = vmatpush1.msra.mxu0 0.0
      %3812 = vmatprep.subr.mxu0 0.0
      %3813 = vmatpush1.msra.mxu0 0.0
      %3814 = vmatprep.subr.mxu0 0.0
      %3815 = vmatpush1.msra.mxu0 0.0
      %3816 = vmatprep.subr.mxu0 0.0
      %3817 = vmatpush1.msra.mxu0 0.0
      %3818 = vmatprep.subr.mxu0 0.0
      %3819 = vmatpush1.msra.mxu0 0.0
      %3820 = vmatprep.subr.mxu0 0.0
      %3821 = vmatpush1.msra.mxu0 0.0
      %3822 = vmatprep.subr.mxu0 0.0
      %3823 = vmatpush1.msra.mxu0 0.0
      %3824 = vmatprep.subr.mxu0 0.0
      %3825 = vmatpush1.msra.mxu0 0.0
      %3826 = vmatprep.subr.mxu0 0.0
      %3827 = vmatpush1.msra.mxu0 %v1581
      %3828 = vmatprep.subr.mxu0 0.0
      %3829 = vmatpush2.msra.mxu0 0.0
      %3830 = vmatprep.subr.mxu0 0.0
      %3831 = vmatpush2.msra.mxu0 0.0
      %3832 = vmatprep.subr.mxu0 0.0
      %3833 = vmatpush2.msra.mxu0 0.0
      %3834 = vmatprep.subr.mxu0 0.0
      %3835 = vmatpush2.msra.mxu0 0.0
      %3836 = vmatprep.subr.mxu0 0.0
      %3837 = vmatpush2.msra.mxu0 0.0
      %3838 = vmatprep.subr.mxu0 0.0
      %3839 = vmatpush2.msra.mxu0 0.0
      %3840 = vmatprep.subr.mxu0 0.0
      %3841 = vmatpush2.msra.mxu0 0.0
      %3842 = vmatprep.subr.mxu0 0.0
      %3843 = vmatpush2.msra.mxu0 0.0
      %3844 = vmatprep.subr.mxu0 0.0
      %3845 = vmatpush2.msra.mxu0 0.0
      %3846 = vmatprep.subr.mxu0 0.0
      %3847 = vmatpush2.msra.mxu0 0.0
      %3848 = vmatprep.subr.mxu0 0.0
      %3849 = vmatpush2.msra.mxu0 0.0
      %3850 = vmatprep.subr.mxu0 0.0
      %3851 = vmatpush2.msra.mxu0 0.0
      %3852 = vmatprep.subr.mxu0 0.0
      %3853 = vmatpush2.msra.mxu0 0.0
      %3854 = vmatprep.subr.mxu0 0.0
      %3855 = vmatpush2.msra.mxu0 0.0
      %3856 = vmatprep.subr.mxu0 0.0
      %3857 = vmatpush2.msra.mxu0 0.0
      %3858 = vmatprep.subr.mxu0 0.0
      %3859 = vmatpush2.msra.mxu0 0.0
      %3860 = vmatprep.mubr.f32.mxu0 0.0
      %3861 = vmatmul.mubr.f32.gmra.mxu0 %v3773
      %v3862 = vpop.f32.mrf.mxu0
      %v3863 = vadd.f32 0.0, %v3862
      %v3864 = vpop.f32.mrf.mxu0
      %3865 = vmatprep.mubr.f32.mxu0 0.0
      %3866 = vmatmul.mubr.f32.gmra.mxu0 %v3776
      %v3867 = vpop.f32.mrf.mxu0
      %v3868 = vadd.f32 0.0, %v3867
      %v3869 = vpop.f32.mrf.mxu0
      %3870 = vmatprep.mubr.f32.mxu0 0.0
      %3871 = vmatmul.mubr.f32.gmra.mxu0 %v3779
      %v3872 = vpop.f32.mrf.mxu0
      %v3873 = vadd.f32 0.0, %v3872
      %v3874 = vpop.f32.mrf.mxu0
      %3875 = vmatprep.mubr.f32.mxu0 0.0
      %3876 = vmatmul.mubr.f32.gmra.mxu0 %v3782
      %v3877 = vpop.f32.mrf.mxu0
      %v3878 = vadd.f32 0.0, %v3877
      %v3879 = vpop.f32.mrf.mxu0
      %3880 = vmatprep.mubr.f32.mxu0 0.0
      %3881 = vmatmul.mubr.f32.gmra.mxu0 %v3785
      %v3882 = vpop.f32.mrf.mxu0
      %v3883 = vadd.f32 0.0, %v3882
      %v3884 = vpop.f32.mrf.mxu0
      %3885 = vmatprep.mubr.f32.mxu0 0.0
      %3886 = vmatmul.mubr.f32.gmra.mxu0 %v3788
      %v3887 = vpop.f32.mrf.mxu0
      %v3888 = vadd.f32 0.0, %v3887
      %v3889 = vpop.f32.mrf.mxu0
      %3890 = vmatprep.mubr.f32.mxu0 0.0
      %3891 = vmatmul.mubr.f32.gmra.mxu0 %v3791
      %v3892 = vpop.f32.mrf.mxu0
      %v3893 = vadd.f32 0.0, %v3892
      %v3894 = vpop.f32.mrf.mxu0
      %3895 = vmatprep.mubr.f32.mxu0 0.0
      %3896 = vmatmul.mubr.f32.gmra.mxu0 %v3794
      %v3897 = vpop.f32.mrf.mxu0
      %v3898 = vadd.f32 0.0, %v3897
      %v3899 = vpop.f32.mrf.mxu0
      %3900 = vdwg.mxu0
      %3901 = vrot.lane.b32.xlu0 %v2033, 104
      %v3902 = vpop.permute.xlu0 %3901
      %v3904 = vmul.f32 %v3863, %v3902
      %v3905 = vmul.f32 %v3868, %v3902
      %v3906 = vmul.f32 %v3873, %v3902
      %v3907 = vmul.f32 %v3878, %v3902
      %v3908 = vmul.f32 %v3883, %v3902
      %v3909 = vmul.f32 %v3888, %v3902
      %v3910 = vmul.f32 %v3893, %v3902
      %v3911 = vmul.f32 %v3898, %v3902
      %3912 = vrot.lane.b32.xlu0 %v2047, 104
      %v3913 = vpop.permute.xlu0 %3912
      %v3915 = vadd.f32 %v3904, %v3913
      %v3916 = vadd.f32 %v3905, %v3913
      %v3917 = vadd.f32 %v3906, %v3913
      %v3918 = vadd.f32 %v3907, %v3913
      %v3919 = vadd.f32 %v3908, %v3913
      %v3920 = vadd.f32 %v3909, %v3913
      %v3921 = vadd.f32 %v3910, %v3913
      %v3922 = vadd.f32 %v3911, %v3913
      %vm3923 = vcmp.ge.f32.partialorder %v3915, 0.0
      %vm3924 = vcmp.ge.f32.partialorder %v3916, 0.0
      %vm3925 = vcmp.ge.f32.partialorder %v3917, 0.0
      %vm3926 = vcmp.ge.f32.partialorder %v3918, 0.0
      %vm3927 = vcmp.ge.f32.partialorder %v3919, 0.0
      %vm3928 = vcmp.ge.f32.partialorder %v3920, 0.0
      %vm3929 = vcmp.ge.f32.partialorder %v3921, 0.0
      %vm3930 = vcmp.ge.f32.partialorder %v3922, 0.0
      %3939 = vrot.lane.b32.xlu0 %v3915, 24
      %v3940 = vpop.permute.xlu0 %3939
      %3941 = vrot.lane.b32.xlu0 %v3916, 24
      %v3942 = vpop.permute.xlu0 %3941
      %3943 = vrot.lane.b32.xlu0 %v3917, 24
      %v3944 = vpop.permute.xlu0 %3943
      %3945 = vrot.lane.b32.xlu0 %v3918, 24
      %v3946 = vpop.permute.xlu0 %3945
      %3947 = vrot.lane.b32.xlu0 %v3919, 24
      %v3948 = vpop.permute.xlu0 %3947
      %3949 = vrot.lane.b32.xlu0 %v3920, 24
      %v3950 = vpop.permute.xlu0 %3949
      %3951 = vrot.lane.b32.xlu0 %v3921, 24
      %v3952 = vpop.permute.xlu0 %3951
      %3953 = vrot.lane.b32.xlu0 %v3922, 24
      %v3954 = vpop.permute.xlu0 %3953
      %v3963 = vmul.f32 %v2069, %v3940
      %v3964 = vmul.f32 %v2069, %v3942
      %v3965 = vmul.f32 %v2069, %v3944
      %v3966 = vmul.f32 %v2069, %v3946
      %v3967 = vmul.f32 %v2069, %v3948
      %v3968 = vmul.f32 %v2069, %v3950
      %v3969 = vmul.f32 %v2069, %v3952
      %v3970 = vmul.f32 %v2069, %v3954
      %3979 = vrot.lane.b32.xlu0 %v3963, 104
      %v3980 = vpop.permute.xlu0 %3979
      %3981 = vrot.lane.b32.xlu0 %v3964, 104
      %v3982 = vpop.permute.xlu0 %3981
      %3983 = vrot.lane.b32.xlu0 %v3965, 104
      %v3984 = vpop.permute.xlu0 %3983
      %3985 = vrot.lane.b32.xlu0 %v3966, 104
      %v3986 = vpop.permute.xlu0 %3985
      %3987 = vrot.lane.b32.xlu0 %v3967, 104
      %v3988 = vpop.permute.xlu0 %3987
      %3989 = vrot.lane.b32.xlu0 %v3968, 104
      %v3990 = vpop.permute.xlu0 %3989
      %3991 = vrot.lane.b32.xlu0 %v3969, 104
      %v3992 = vpop.permute.xlu0 %3991
      %3993 = vrot.lane.b32.xlu0 %v3970, 104
      %v3994 = vpop.permute.xlu0 %3993
      %v4003 = vsel %vm3923, %v3915, %v3980
      %v4004 = vsel %vm3924, %v3916, %v3982
      %v4005 = vsel %vm3925, %v3917, %v3984
      %v4006 = vsel %vm3926, %v3918, %v3986
      %v4007 = vsel %vm3927, %v3919, %v3988
      %v4008 = vsel %vm3928, %v3920, %v3990
      %v4009 = vsel %vm3929, %v3921, %v3992
      %v4010 = vsel %vm3930, %v3922, %v3994
      %4019 = vrot.lane.b32.xlu0 %v4003, 24
      %v4020 = vpop.permute.xlu0 %4019
      %4021 = vrot.lane.b32.xlu0 %v4004, 24
      %v4022 = vpop.permute.xlu0 %4021
      %4023 = vrot.lane.b32.xlu0 %v4005, 24
      %v4024 = vpop.permute.xlu0 %4023
      %4025 = vrot.lane.b32.xlu0 %v4006, 24
      %v4026 = vpop.permute.xlu0 %4025
      %4027 = vrot.lane.b32.xlu0 %v4007, 24
      %v4028 = vpop.permute.xlu0 %4027
      %4029 = vrot.lane.b32.xlu0 %v4008, 24
      %v4030 = vpop.permute.xlu0 %4029
      %4031 = vrot.lane.b32.xlu0 %v4009, 24
      %v4032 = vpop.permute.xlu0 %4031
      %4033 = vrot.lane.b32.xlu0 %v4010, 24
      %v4034 = vpop.permute.xlu0 %4033
      %vm4043 = vcmask 261312
      %4044 = vst.msk [vmem:[%s507] sm:$0xff] %vm4043, %v4020
      %4045 = vst.msk [vmem:[%s507 + $0x8] sm:$0xff] %vm4043, %v4022
      %4046 = vst.msk [vmem:[%s507 + $0x10] sm:$0xff] %vm4043, %v4024
      %4047 = vst.msk [vmem:[%s507 + $0x18] sm:$0xff] %vm4043, %v4026
      %4048 = vst.msk [vmem:[%s507 + $0x20] sm:$0xff] %vm4043, %v4028
      %4049 = vst.msk [vmem:[%s507 + $0x28] sm:$0xff] %vm4043, %v4030
      %4050 = vst.msk [vmem:[%s507 + $0x30] sm:$0xff] %vm4043, %v4032
      %4051 = vst.msk [vmem:[%s507 + $0x38] sm:$0xff] %vm4043, %v4034
      %p4052 = scmp.lt.s32.totalorder %s27, 1
      %s4053 = scalar_select %p4052, %s27, 1
      %s4054 = smul.addr %s4053, 8
      %s4055 = smul.addr %s4054, 8
      %s4056 = scalar_lea.vmem %s14, %s4055
      %p4057 = scmp.lt.s32.totalorder %s27, 1
      %s4058 = scalar_select %p4057, %s27, 1
      %s4059 = smul.addr %s4058, 8
      %s4060 = smul.addr %s4059, 8
      %s4061 = scalar_lea.vmem %s15, %s4060
      // Predicated region
      $region77: #{downsampler_forward.1} parent=75 // pred_check
        %p4062 = pneg %p344
      $region78: #{downsampler_forward.1} parent=75 // pred_check_branch
        %4064 = sbr.rel (%p4062) target = $region80
      $region79: #{downsampler_forward.1} parent=75 // pred_region
        _
      $region80: #{downsampler_forward.1} parent=75 // pred_fallthru
        _
      // Predicated region
      $region81: #{downsampler_forward.1} parent=75 // pred_check
        %p4065 = pneg %p370
      $region82: #{downsampler_forward.1} parent=75 // pred_check_branch
        %4067 = sbr.rel (%p4065) target = $region84
      $region83: #{downsampler_forward.1} parent=75 // pred_region
        _
      $region84: #{downsampler_forward.1} parent=75 // pred_fallthru
        _
    $region76: #{downsampler_forward.1} parent=5 // pred_fallthru
      _
    %p4068 = scmp.le.s32.totalorder 2, %s22
    // Predicated region
    $region85: #{downsampler_forward.1} parent=5 // pred_check
      %p4069 = pneg %p4068
    $region86: #{downsampler_forward.1} parent=5 // pred_check_branch
      %4071 = sbr.rel (%p4069) target = $region88
    $region87: #{downsampler_forward.1} parent=5 // pred_region
      %s4072 = ssub.s32 %s22, 2
      // Predicated region
      $region89: #{downsampler_forward.1} parent=87 // pred_check
        %p4073 = pneg %p350
      $region90: #{downsampler_forward.1} parent=87 // pred_check_branch
        %4075 = sbr.rel (%p4073) target = $region92
      $region91: #{downsampler_forward.1} parent=87 // pred_region
        %p4076 = scmp.lt.s32.totalorder %s28, 1
        %s4077 = scalar_select %p4076, %s28, 1
        %s4078 = smul.addr %s4077, 8
        %s4079 = smul.addr %s4078, 8
        %s4080 = scalar_lea.vmem %s14, %s4079
      $region92: #{downsampler_forward.1} parent=87 // pred_fallthru
        _
      // Predicated region
      $region93: #{downsampler_forward.1} parent=87 // pred_check
        %p4081 = pneg %p376
      $region94: #{downsampler_forward.1} parent=87 // pred_check_branch
        %4083 = sbr.rel (%p4081) target = $region96
      $region95: #{downsampler_forward.1} parent=87 // pred_region
        %p4084 = scmp.lt.s32.totalorder %s28, 1
        %s4085 = scalar_select %p4084, %s28, 1
        %s4086 = smul.addr %s4085, 8
        %s4087 = smul.addr %s4086, 8
        %s4088 = scalar_lea.vmem %s15, %s4087
      $region96: #{downsampler_forward.1} parent=87 // pred_fallthru
        _
    $region88: #{downsampler_forward.1} parent=5 // pred_fallthru
      _
  $region6: #{downsampler_forward.1} parent=0 // loop_footer
    %s26 = sadd.s32 1, %s22
  $region7: #{downsampler_forward.1} parent=0 // loop_footer_branch
    %21 = sbr.rel target = $region3
  $region8: #{downsampler_forward.1} parent=0 // loop_exit
    _

</llo_original>
